<compile_context>
chip_gen: v6e
topology: v6e:2x2x1
jax: 0.10.0
libtpu: 0.0.40
codegen_flags: <defaults>
</compile_context>

<pallas_src>
import jax
import jax.numpy as jnp
from jax.experimental import pallas as pl
from jax.experimental.pallas import tpu as pltpu

K_PER = 32            # JointModel.K (synthetic backbone feature width)
NUM_LABELS = 2        # default num_labels of the PyTorch module
C_IN = 3              # each JointModel sees 3-channel input
C_PACK = 3 * C_IN     # 9 packed channels: [mask x3 | mask*img | img]
NF = max(128, ((3 * K_PER + 127) // 128) * 128)   # lane-padded feature width


def _round_up(x, m):
    return ((x + m - 1) // m) * m


# ---------------------------------------------------------------------------
# parameters
# ---------------------------------------------------------------------------
def init_params(key):
    ks = jax.random.split(key, 8)
    return {
        # conv weights stored as (kh, kw, cin, K); biases as (K,)
        'w1': jax.random.normal(ks[0], (3, 3, C_IN, K_PER), jnp.float32) * 0.05,
        'b1': jax.random.normal(ks[1], (K_PER,), jnp.float32) * 0.01,
        'w2': jax.random.normal(ks[2], (3, 3, C_IN, K_PER), jnp.float32) * 0.05,
        'b2': jax.random.normal(ks[3], (K_PER,), jnp.float32) * 0.01,
        'w3': jax.random.normal(ks[4], (3, 3, C_IN, K_PER), jnp.float32) * 0.05,
        'b3': jax.random.normal(ks[5], (K_PER,), jnp.float32) * 0.01,
        # fc weight stored pre-transposed: (3K, num_labels)
        'wf': jax.random.normal(ks[6], (3 * K_PER, NUM_LABELS), jnp.float32) * 0.05,
        'bf': jax.random.normal(ks[7], (NUM_LABELS,), jnp.float32) * 0.01,
    }


def _pack_conv_params(params, compute_dtype):
    """Block-diagonal (9 taps, 9 packed ch, NF) conv weight and (1, NF) bias."""
    w_blk = jnp.zeros((3, 3, C_PACK, NF), jnp.float32)
    for i, name in enumerate(('w1', 'w2', 'w3')):
        w_blk = w_blk.at[:, :, 3 * i:3 * i + 3,
                         K_PER * i:K_PER * (i + 1)].set(params[name])
    w_blk = w_blk.reshape(9, C_PACK, NF).astype(compute_dtype)
    b_all = jnp.concatenate([params['b1'], params['b2'], params['b3']])
    b_blk = jnp.zeros((1, NF), jnp.float32).at[0, :3 * K_PER].set(b_all)
    return w_blk, b_blk


# ---------------------------------------------------------------------------
# input packing / tiling glue (cheap, compact — no im2col in HBM)
# ---------------------------------------------------------------------------
def _pack_inputs(img, mask, compute_dtype):
    """NCHW img/mask -> (B, H, W, 9) packed backbone inputs in compute dtype."""
    B, _, H, W = img.shape
    img_nhwc = jnp.transpose(img, (0, 2, 3, 1))
    mask_nhwc = jnp.transpose(mask, (0, 2, 3, 1))
    mask3 = jnp.broadcast_to(mask_nhwc, (B, H, W, 3))
    packed = jnp.concatenate([mask3, mask3 * img_nhwc, img_nhwc], axis=-1)
    return packed.astype(compute_dtype)


def _tile_rows_with_halo(packed, tile_h):
    """(B, H, W, 9) -> (B, nH, R, 9) flattened, zero-padded, halo'd row tiles."""
    B, H, W, C = packed.shape
    xp = jnp.pad(packed, ((0, 0), (1, 1), (1, 1), (0, 0)))        # (B,H+2,W+2,C)
    n_tiles = H // tile_h
    rows = (jnp.arange(n_tiles)[:, None] * tile_h
            + jnp.arange(tile_h + 2)[None, :])                    # (nH, TH+2)
    xt = jnp.take(xp, rows, axis=1)                               # (B,nH,TH+2,W+2,C)
    xt = xt.reshape(B, n_tiles, (tile_h + 2) * (W + 2), C)
    rows_needed = (tile_h + 2) * (W + 2) + 2    # last phantom tap reads +2 rows
    r_full = _round_up(rows_needed, 8)
    xt = jnp.pad(xt, ((0, 0), (0, 0), (0, r_full - xt.shape[2]), (0, 0)))
    return xt


def _select_tile_h(H, W, budget_bytes=12 * 1024 * 1024):
    """Largest divisor of H whose per-step working set fits the VMEM budget."""
    wp = W + 2
    best = 1
    for t in range(1, H + 1):
        if H % t:
            continue
        m = t * wp
        r = _round_up((t + 2) * wp + 2, 8)
        est = (2 * r * C_PACK * 2        # double-buffered bf16 input tile
               + 2 * m * NF * 4          # f32 conv intermediate + headroom
               + 9 * C_PACK * NF * 2     # resident weights
               + m * 4)                  # resident pool row
        if est <= budget_bytes:
            best = t
    return best


# ---------------------------------------------------------------------------
# fused kernel
# ---------------------------------------------------------------------------
def _make_kernel(tile_h, width):
    wp = width + 2           # padded row stride inside the flattened tile
    m = tile_h * wp          # rows per tile (includes phantom padding-column px)

    def kernel(x_ref, w_ref, b_ref, pool_ref, out_ref, acc_ref):
        t = pl.program_id(1)

        @pl.when(t == 0)
        def _init():
            acc_ref[...] = jnp.zeros_like(acc_ref)

        x = x_ref[0, 0]                                    # (R, 9) compute dtype

        # 3x3 conv as 9 row-shifted matmuls against block-diagonal tap weights
        # (one lane-dense N=128 matmul per tap fuses the three backbones).
        h = jnp.zeros((m, NF), jnp.float32)
        for ki in range(3):
            for kj in range(3):
                off = ki * wp + kj
                xs = x[off:off + m, :]                     # (m, 9)
                h = h + jnp.dot(xs, w_ref[ki * 3 + kj],
                                preferred_element_type=jnp.float32)

        h = jnp.maximum(h + b_ref[...], 0.0)               # bias + ReLU (f32)

        # Global-average-pool partial sum on the MXU: resident masking row,
        # zero on phantom pixels, 1/(H*W) scale already folded in.
        acc_ref[...] += jnp.dot(pool_ref[...], h,
                                preferred_element_type=jnp.float32)

        @pl.when(t == pl.num_programs(1) - 1)
        def _finalize():
            out_ref[0] = acc_ref[...]                      # (1, NF) lane-dense

    return kernel


# ---------------------------------------------------------------------------
# public forward
# ---------------------------------------------------------------------------
def joint_pre_segment_forward(img, mask, params, *, tile_h=None,
                              compute_dtype=jnp.bfloat16):
    """img: (B,3,H,W) f32, mask: (B,1,H,W) f32  ->  logits (B, num_labels)."""
    B, _, H, W = img.shape
    if tile_h is None:
        tile_h = _select_tile_h(H, W)
    assert H % tile_h == 0
    n_tiles = H // tile_h
    # TODO(synk): very wide images would additionally need W tiling (W-halo);
    # here one row-tile spans the full padded width.

    x_tiles = _tile_rows_with_halo(_pack_inputs(img, mask, compute_dtype), tile_h)
    w_blk, b_blk = _pack_conv_params(params, compute_dtype)
    R = x_tiles.shape[2]

    wp = W + 2
    m = tile_h * wp
    col = jnp.arange(m, dtype=jnp.int32) % wp
    pool_row = jnp.where(col < W, 1.0 / float(H * W), 0.0)
    pool_row = pool_row.astype(jnp.float32).reshape(1, m)

    kernel = _make_kernel(tile_h, W)
    feats = pl.pallas_call(
        kernel,
        out_shape=jax.ShapeDtypeStruct((B, 1, NF), jnp.float32),
        grid=(B, n_tiles),
        in_specs=[
            # image row-tiles: pipelined / double-buffered over (batch, h-tile)
            pl.BlockSpec((1, 1, R, C_PACK), lambda b, t: (b, t, 0, 0)),
            # weights / bias / pool row: constant index_map -> VMEM-resident
            pl.BlockSpec((9, C_PACK, NF), lambda b, t: (0, 0, 0)),
            pl.BlockSpec((1, NF), lambda b, t: (0, 0)),
            pl.BlockSpec((1, m), lambda b, t: (0, 0)),
        ],
        out_specs=pl.BlockSpec((1, 1, NF), lambda b, t: (b, 0, 0)),
        scratch_shapes=[pltpu.VMEM((1, NF), jnp.float32)],
        compiler_params=pltpu.CompilerParams(
            dimension_semantics=("parallel", "arbitrary"),
            vmem_limit_bytes=32 * 1024 * 1024),
    )(x_tiles, w_blk, b_blk, pool_row)

    feats = feats[:, 0, :3 * K_PER]                        # (B, 3K)
    # tiny (3K -> num_labels) fc stays in the wrapper (kernel output lane-dense)
    logits = jnp.dot(feats, params['wf'],
                     precision=jax.lax.Precision.HIGHEST) + params['bf']
    return logits


# ---------------------------------------------------------------------------
# pure-JAX module-style reference (same rounding as the kernel path)
# ---------------------------------------------------------------------------
def _reference_forward(img, mask, params, compute_dtype=jnp.bfloat16):
    def rt(x):                    # round-trip through the kernel compute dtype
        return x.astype(compute_dtype).astype(jnp.float32)

    img_nhwc = jnp.transpose(img, (0, 2, 3, 1))
    mask3 = jnp.broadcast_to(jnp.transpose(mask, (0, 2, 3, 1)), img_nhwc.shape)

    def backbone(x, w, b):        # x (B,H,W,3), w (3,3,3,K), b (K,)
        B, H, W, _ = x.shape
        xp = jnp.pad(x, ((0, 0), (1, 1), (1, 1), (0, 0)))
        h = jnp.zeros((B, H, W, w.shape[-1]), jnp.float32)
        for ki in range(3):
            for kj in range(3):
                h = h + jnp.einsum('bhwc,ck->bhwk',
                                   xp[:, ki:ki + H, kj:kj + W, :], w[ki, kj],
                                   precision=jax.lax.Precision.HIGHEST)
        h = jnp.maximum(h + b, 0.0)
        return jnp.mean(h, axis=(1, 2))

    f1 = backbone(rt(mask3), rt(params['w1']), params['b1'])
    f2 = backbone(rt(mask3 * img_nhwc), rt(params['w2']), params['b2'])
    f3 = backbone(rt(img_nhwc), rt(params['w3']), params['b3'])
    feats = jnp.concatenate([f1, f2, f3], axis=-1)
    return jnp.dot(feats, params['wf'],
                   precision=jax.lax.Precision.HIGHEST) + params['bf']


if __name__ == "__main__":
    key = jax.random.PRNGKey(0)
    k_img, k_mask, k_par = jax.random.split(key, 3)

    B, H, W = 2, 16, 16
    img = jax.random.normal(k_img, (B, 3, H, W), jnp.float32)
    mask = (jax.random.uniform(k_mask, (B, 1, H, W)) > 0.5).astype(jnp.float32)
    params = init_params(k_par)

    logits = joint_pre_segment_forward(img, mask, params)
    logits = jax.block_until_ready(logits)

    ref = _reference_forward(img, mask, params)
    assert logits.shape == (B, NUM_LABELS)
    max_err = float(jnp.max(jnp.abs(logits - ref)))
    assert jnp.allclose(logits, ref, atol=1e-3, rtol=1e-3), \
        f"mismatch vs reference (max abs err {max_err})"

    print("KERNEL_OK")
</pallas_src>

<mosaic_0001>
module attributes {stable_mosaic.version = 11 : i64} {
  func.func @kernel(%arg0: i32, %arg1: i32, %arg2: memref<1x1x328x9xbf16, #tpu.memory_space<vmem>>, %arg3: memref<9x9x128xbf16, #tpu.memory_space<vmem>>, %arg4: memref<1x128xf32, #tpu.memory_space<vmem>>, %arg5: memref<1x288xf32, #tpu.memory_space<vmem>>, %arg6: memref<1x1x128xf32, #tpu.memory_space<vmem>>, %arg7: memref<1x128xf32, #tpu.memory_space<vmem>>) attributes {dimension_semantics = [#tpu.dimension_semantics<parallel>, #tpu.dimension_semantics<arbitrary>], iteration_bounds = array<i64: 2, 1>, scalar_prefetch = 0 : i64, scratch_operands = 1 : i64, tpu.core_type = #tpu.core_type<tc>, window_params = [{transform_indices = @transform_0, window_bounds = array<i64: 1, 1, 328, 9>}, {pipeline_mode = #tpu.pipeline_mode<synchronous>, transform_indices = @transform_1, window_bounds = array<i64: 9, 9, 128>}, {pipeline_mode = #tpu.pipeline_mode<synchronous>, transform_indices = @transform_2, window_bounds = array<i64: 1, 128>}, {pipeline_mode = #tpu.pipeline_mode<synchronous>, transform_indices = @transform_3, window_bounds = array<i64: 1, 288>}, {transform_indices = @transform_4, window_bounds = array<i64: 1, 1, 128>}]} {
    %c0_i32 = arith.constant 0 : i32
    %0 = arith.cmpi eq, %arg1, %c0_i32 : i32
    %1 = arith.extui %0 : i1 to i32
    %c0_i32_0 = arith.constant 0 : i32
    %2 = arith.cmpi ne, %1, %c0_i32_0 : i32
    scf.if %2 {
      %cst_44 = arith.constant 0.000000e+00 : f32
      %64 = vector.broadcast %cst_44 : f32 to vector<1x128xf32>
      %c0_45 = arith.constant 0 : index
      %c0_46 = arith.constant 0 : index
      %65 = vector.load %arg7[%c0_45, %c0_46] : memref<1x128xf32, #tpu.memory_space<vmem>>, vector<1x128xf32>
      tpu.vector_store %arg7[%c0_45, %c0_46], %64 {strides = array<i32>} : memref<1x128xf32, #tpu.memory_space<vmem>>, vector<1x128xf32>,
    } else {
    }
    %c0 = arith.constant 0 : index
    %c0_1 = arith.constant 0 : index
    %c0_2 = arith.constant 0 : index
    %c0_3 = arith.constant 0 : index
    %3 = vector.load %arg2[%c0, %c0_1, %c0_2, %c0_3] : memref<1x1x328x9xbf16, #tpu.memory_space<vmem>>, vector<1x1x328x9xbf16>
    %4 = vector.shape_cast %3 : vector<1x1x328x9xbf16> to vector<328x9xbf16>
    %cst = arith.constant 0.000000e+00 : f32
    %5 = vector.broadcast %cst : f32 to vector<288x128xf32>
    %6 = vector.extract_strided_slice %4 {offsets = [0, 0], sizes = [288, 9], strides = [1, 1]} : vector<328x9xbf16> to vector<288x9xbf16>
    %c0_4 = arith.constant 0 : index
    %c0_5 = arith.constant 0 : index
    %c0_6 = arith.constant 0 : index
    %7 = vector.load %arg3[%c0_4, %c0_5, %c0_6] : memref<9x9x128xbf16, #tpu.memory_space<vmem>>, vector<1x9x128xbf16>
    %8 = vector.shape_cast %7 : vector<1x9x128xbf16> to vector<9x128xbf16>
    %cst_7 = arith.constant dense<0.000000e+00> : vector<288x128xf32>
    %9 = tpu.matmul %6, %8, %cst_7 {dimension_numbers = #tpu.dot_dimension_numbers<[1], [0], [0], [1], [0, 0, 1, 1], [], []>} : vector<288x9xbf16>, vector<9x128xbf16>, vector<288x128xf32> -> vector<288x128xf32>
    %10 = arith.addf %5, %9 : vector<288x128xf32>
    %11 = vector.extract_strided_slice %4 {offsets = [1, 0], sizes = [288, 9], strides = [1, 1]} : vector<328x9xbf16> to vector<288x9xbf16>
    %c1 = arith.constant 1 : index
    %c0_8 = arith.constant 0 : index
    %c0_9 = arith.constant 0 : index
    %12 = vector.load %arg3[%c1, %c0_8, %c0_9] : memref<9x9x128xbf16, #tpu.memory_space<vmem>>, vector<1x9x128xbf16>
    %13 = vector.shape_cast %12 : vector<1x9x128xbf16> to vector<9x128xbf16>
    %cst_10 = arith.constant dense<0.000000e+00> : vector<288x128xf32>
    %14 = tpu.matmul %11, %13, %cst_10 {dimension_numbers = #tpu.dot_dimension_numbers<[1], [0], [0], [1], [0, 0, 1, 1], [], []>} : vector<288x9xbf16>, vector<9x128xbf16>, vector<288x128xf32> -> vector<288x128xf32>
    %15 = arith.addf %10, %14 : vector<288x128xf32>
    %16 = vector.extract_strided_slice %4 {offsets = [2, 0], sizes = [288, 9], strides = [1, 1]} : vector<328x9xbf16> to vector<288x9xbf16>
    %c2 = arith.constant 2 : index
    %c0_11 = arith.constant 0 : index
    %c0_12 = arith.constant 0 : index
    %17 = vector.load %arg3[%c2, %c0_11, %c0_12] : memref<9x9x128xbf16, #tpu.memory_space<vmem>>, vector<1x9x128xbf16>
    %18 = vector.shape_cast %17 : vector<1x9x128xbf16> to vector<9x128xbf16>
    %cst_13 = arith.constant dense<0.000000e+00> : vector<288x128xf32>
    %19 = tpu.matmul %16, %18, %cst_13 {dimension_numbers = #tpu.dot_dimension_numbers<[1], [0], [0], [1], [0, 0, 1, 1], [], []>} : vector<288x9xbf16>, vector<9x128xbf16>, vector<288x128xf32> -> vector<288x128xf32>
    %20 = arith.addf %15, %19 : vector<288x128xf32>
    %21 = vector.extract_strided_slice %4 {offsets = [18, 0], sizes = [288, 9], strides = [1, 1]} : vector<328x9xbf16> to vector<288x9xbf16>
    %c3 = arith.constant 3 : index
    %c0_14 = arith.constant 0 : index
    %c0_15 = arith.constant 0 : index
    %22 = vector.load %arg3[%c3, %c0_14, %c0_15] : memref<9x9x128xbf16, #tpu.memory_space<vmem>>, vector<1x9x128xbf16>
    %23 = vector.shape_cast %22 : vector<1x9x128xbf16> to vector<9x128xbf16>
    %cst_16 = arith.constant dense<0.000000e+00> : vector<288x128xf32>
    %24 = tpu.matmul %21, %23, %cst_16 {dimension_numbers = #tpu.dot_dimension_numbers<[1], [0], [0], [1], [0, 0, 1, 1], [], []>} : vector<288x9xbf16>, vector<9x128xbf16>, vector<288x128xf32> -> vector<288x128xf32>
    %25 = arith.addf %20, %24 : vector<288x128xf32>
    %26 = vector.extract_strided_slice %4 {offsets = [19, 0], sizes = [288, 9], strides = [1, 1]} : vector<328x9xbf16> to vector<288x9xbf16>
    %c4 = arith.constant 4 : index
    %c0_17 = arith.constant 0 : index
    %c0_18 = arith.constant 0 : index
    %27 = vector.load %arg3[%c4, %c0_17, %c0_18] : memref<9x9x128xbf16, #tpu.memory_space<vmem>>, vector<1x9x128xbf16>
    %28 = vector.shape_cast %27 : vector<1x9x128xbf16> to vector<9x128xbf16>
    %cst_19 = arith.constant dense<0.000000e+00> : vector<288x128xf32>
    %29 = tpu.matmul %26, %28, %cst_19 {dimension_numbers = #tpu.dot_dimension_numbers<[1], [0], [0], [1], [0, 0, 1, 1], [], []>} : vector<288x9xbf16>, vector<9x128xbf16>, vector<288x128xf32> -> vector<288x128xf32>
    %30 = arith.addf %25, %29 : vector<288x128xf32>
    %31 = vector.extract_strided_slice %4 {offsets = [20, 0], sizes = [288, 9], strides = [1, 1]} : vector<328x9xbf16> to vector<288x9xbf16>
    %c5 = arith.constant 5 : index
    %c0_20 = arith.constant 0 : index
    %c0_21 = arith.constant 0 : index
    %32 = vector.load %arg3[%c5, %c0_20, %c0_21] : memref<9x9x128xbf16, #tpu.memory_space<vmem>>, vector<1x9x128xbf16>
    %33 = vector.shape_cast %32 : vector<1x9x128xbf16> to vector<9x128xbf16>
    %cst_22 = arith.constant dense<0.000000e+00> : vector<288x128xf32>
    %34 = tpu.matmul %31, %33, %cst_22 {dimension_numbers = #tpu.dot_dimension_numbers<[1], [0], [0], [1], [0, 0, 1, 1], [], []>} : vector<288x9xbf16>, vector<9x128xbf16>, vector<288x128xf32> -> vector<288x128xf32>
    %35 = arith.addf %30, %34 : vector<288x128xf32>
    %36 = vector.extract_strided_slice %4 {offsets = [36, 0], sizes = [288, 9], strides = [1, 1]} : vector<328x9xbf16> to vector<288x9xbf16>
    %c6 = arith.constant 6 : index
    %c0_23 = arith.constant 0 : index
    %c0_24 = arith.constant 0 : index
    %37 = vector.load %arg3[%c6, %c0_23, %c0_24] : memref<9x9x128xbf16, #tpu.memory_space<vmem>>, vector<1x9x128xbf16>
    %38 = vector.shape_cast %37 : vector<1x9x128xbf16> to vector<9x128xbf16>
    %cst_25 = arith.constant dense<0.000000e+00> : vector<288x128xf32>
    %39 = tpu.matmul %36, %38, %cst_25 {dimension_numbers = #tpu.dot_dimension_numbers<[1], [0], [0], [1], [0, 0, 1, 1], [], []>} : vector<288x9xbf16>, vector<9x128xbf16>, vector<288x128xf32> -> vector<288x128xf32>
    %40 = arith.addf %35, %39 : vector<288x128xf32>
    %41 = vector.extract_strided_slice %4 {offsets = [37, 0], sizes = [288, 9], strides = [1, 1]} : vector<328x9xbf16> to vector<288x9xbf16>
    %c7 = arith.constant 7 : index
    %c0_26 = arith.constant 0 : index
    %c0_27 = arith.constant 0 : index
    %42 = vector.load %arg3[%c7, %c0_26, %c0_27] : memref<9x9x128xbf16, #tpu.memory_space<vmem>>, vector<1x9x128xbf16>
    %43 = vector.shape_cast %42 : vector<1x9x128xbf16> to vector<9x128xbf16>
    %cst_28 = arith.constant dense<0.000000e+00> : vector<288x128xf32>
    %44 = tpu.matmul %41, %43, %cst_28 {dimension_numbers = #tpu.dot_dimension_numbers<[1], [0], [0], [1], [0, 0, 1, 1], [], []>} : vector<288x9xbf16>, vector<9x128xbf16>, vector<288x128xf32> -> vector<288x128xf32>
    %45 = arith.addf %40, %44 : vector<288x128xf32>
    %46 = vector.extract_strided_slice %4 {offsets = [38, 0], sizes = [288, 9], strides = [1, 1]} : vector<328x9xbf16> to vector<288x9xbf16>
    %c8 = arith.constant 8 : index
    %c0_29 = arith.constant 0 : index
    %c0_30 = arith.constant 0 : index
    %47 = vector.load %arg3[%c8, %c0_29, %c0_30] : memref<9x9x128xbf16, #tpu.memory_space<vmem>>, vector<1x9x128xbf16>
    %48 = vector.shape_cast %47 : vector<1x9x128xbf16> to vector<9x128xbf16>
    %cst_31 = arith.constant dense<0.000000e+00> : vector<288x128xf32>
    %49 = tpu.matmul %46, %48, %cst_31 {dimension_numbers = #tpu.dot_dimension_numbers<[1], [0], [0], [1], [0, 0, 1, 1], [], []>} : vector<288x9xbf16>, vector<9x128xbf16>, vector<288x128xf32> -> vector<288x128xf32>
    %50 = arith.addf %45, %49 : vector<288x128xf32>
    %c0_32 = arith.constant 0 : index
    %c0_33 = arith.constant 0 : index
    %51 = vector.load %arg4[%c0_32, %c0_33] : memref<1x128xf32, #tpu.memory_space<vmem>>, vector<1x128xf32>
    %52 = vector.broadcast %51 : vector<1x128xf32> to vector<288x128xf32>
    %53 = arith.addf %50, %52 : vector<288x128xf32>
    %cst_34 = arith.constant 0.000000e+00 : f32
    %54 = vector.broadcast %cst_34 : f32 to vector<288x128xf32>
    %55 = arith.maximumf %53, %54 : vector<288x128xf32>
    %c0_35 = arith.constant 0 : index
    %c0_36 = arith.constant 0 : index
    %56 = vector.load %arg7[%c0_35, %c0_36] : memref<1x128xf32, #tpu.memory_space<vmem>>, vector<1x128xf32>
    %c0_37 = arith.constant 0 : index
    %c0_38 = arith.constant 0 : index
    %57 = vector.load %arg5[%c0_37, %c0_38] : memref<1x288xf32, #tpu.memory_space<vmem>>, vector<1x288xf32>
    %cst_39 = arith.constant dense<0.000000e+00> : vector<1x128xf32>
    %58 = tpu.matmul %57, %55, %cst_39 {dimension_numbers = #tpu.dot_dimension_numbers<[1], [0], [0], [1], [0, 0, 1, 1], [], []>} : vector<1x288xf32>, vector<288x128xf32>, vector<1x128xf32> -> vector<1x128xf32>
    %59 = arith.addf %56, %58 : vector<1x128xf32>
    %c0_40 = arith.constant 0 : index
    %c0_41 = arith.constant 0 : index
    %60 = vector.load %arg7[%c0_40, %c0_41] : memref<1x128xf32, #tpu.memory_space<vmem>>, vector<1x128xf32>
    tpu.vector_store %arg7[%c0_40, %c0_41], %59 {strides = array<i32>} : memref<1x128xf32, #tpu.memory_space<vmem>>, vector<1x128xf32>,
    %c0_i32_42 = arith.constant 0 : i32
    %61 = arith.cmpi eq, %arg1, %c0_i32_42 : i32
    %62 = arith.extui %61 : i1 to i32
    %c0_i32_43 = arith.constant 0 : i32
    %63 = arith.cmpi ne, %62, %c0_i32_43 : i32
    scf.if %63 {
      %c0_44 = arith.constant 0 : index
      %c0_45 = arith.constant 0 : index
      %64 = vector.load %arg7[%c0_44, %c0_45] : memref<1x128xf32, #tpu.memory_space<vmem>>, vector<1x128xf32>
      %c0_46 = arith.constant 0 : index
      %c0_47 = arith.constant 0 : index
      %c0_48 = arith.constant 0 : index
      %65 = vector.load %arg6[%c0_46, %c0_47, %c0_48] : memref<1x1x128xf32, #tpu.memory_space<vmem>>, vector<1x1x128xf32>
      %66 = vector.shape_cast %65 : vector<1x1x128xf32> to vector<1x128xf32>
      %67 = vector.shape_cast %64 : vector<1x128xf32> to vector<1x1x128xf32>
      tpu.vector_store %arg6[%c0_46, %c0_47, %c0_48], %67 {strides = array<i32>} : memref<1x1x128xf32, #tpu.memory_space<vmem>>, vector<1x1x128xf32>,
    } else {
    }
    return
  }
  func.func @transform_0(%arg0: i32, %arg1: i32) -> (i32, i32, i32, i32) {
    %c0_i32 = arith.constant 0 : i32
    %c0_i32_0 = arith.constant 0 : i32
    %c0_i32_1 = arith.constant 0 : i32
    return %arg0, %arg1, %c0_i32, %c0_i32_0 : i32, i32, i32, i32
  }
  func.func @transform_1(%arg0: i32, %arg1: i32) -> (i32, i32, i32) {
    %c0_i32 = arith.constant 0 : i32
    %c0_i32_0 = arith.constant 0 : i32
    %c0_i32_1 = arith.constant 0 : i32
    %c0_i32_2 = arith.constant 0 : i32
    return %c0_i32, %c0_i32_0, %c0_i32_1 : i32, i32, i32
  }
  func.func @transform_2(%arg0: i32, %arg1: i32) -> (i32, i32) {
    %c0_i32 = arith.constant 0 : i32
    %c0_i32_0 = arith.constant 0 : i32
    %c0_i32_1 = arith.constant 0 : i32
    return %c0_i32, %c0_i32_0 : i32, i32
  }
  func.func @transform_3(%arg0: i32, %arg1: i32) -> (i32, i32) {
    %c0_i32 = arith.constant 0 : i32
    %c0_i32_0 = arith.constant 0 : i32
    %c0_i32_1 = arith.constant 0 : i32
    return %c0_i32, %c0_i32_0 : i32, i32
  }
  func.func @transform_4(%arg0: i32, %arg1: i32) -> (i32, i32, i32) {
    %c0_i32 = arith.constant 0 : i32
    %c0_i32_0 = arith.constant 0 : i32
    %c0_i32_1 = arith.constant 0 : i32
    return %arg0, %c0_i32, %c0_i32_0 : i32, i32, i32
  }
}

</mosaic_0001>

<llo_original>
// kernel: tpu_custom_call.1
$region0: #{tpu_custom_call.1}
  #allocation0 [shape = 'u32[]', space=smem, size = 0x4, offset = 0x4, fixed_abs, tag = 'smem constant byte address 0x4 - core index']
  #allocation1 [shape = 'u32[144,128]{1,0:T(1,128)}', space=vmem, size = 0x12000, scoped, tag = 'internal scratch']
  #allocation2 [shape = 'f32[1,128]{1,0:T(1,128)}', space=vmem, size = 0x200, scoped, tag = 'scratch operand']
  %s0 = inlined_call_operand.vmem [shape: bf16[2,1,328,9], index: 0, kind: input, shape index: {}]
  %s1 = inlined_call_operand.vmem [shape: bf16[9,9,128], index: 1, kind: input, shape index: {}]
  %s2 = inlined_call_operand.vmem [shape: f32[1,128], index: 2, kind: input, shape index: {}]
  %s3 = inlined_call_operand.vmem [shape: f32[1,288], index: 3, kind: input, shape index: {}]
  %s4 = inlined_call_operand.hbm [shape: f32[2,1,128], index: 4, kind: output, shape index: {}]
  %s5 = sld [smem:[#allocation0]]
  $region57: #{tpu_custom_call.1} parent=0
    _
  %s7 = ssub.s32 1, %s5
  %s8 = scalar_select 0, %s7, %s5
  $region1: #{tpu_custom_call.1} parent=0
    #allocation3 [shape = 'u8[1024]{0}', space=vmem, size = 0x400, scoped, tag = 'output window, operand 0']
    #allocation4 [shape = 's32[2]{0}', space=sflag, size = 0x8, scoped, tag = 'scoped memory for tpu_custom_call.1']
    %9 = vsyncpa [#allocation4], 0
    %s10 = scalar_lea.sflag [#allocation4], 1
    %11 = vsyncpa %s10, 0
    loop: start=0, step=1, limit=4
    $region2: #{tpu_custom_call.1} parent=1 // loop_pre_header
      _
    $region3: #{tpu_custom_call.1} parent=1 // loop_header
      %s13 = sphi 0, %s17
      %p14 = scmp.ge.s32.totalorder %s13, 4
      %s20 = sphi 0, %s32
      %s21 = sphi 0, %s28
      %s22 = sphi 0, %s20
      %s23 = sphi 0, %s21
      %s24 = sphi 0, %s22
      %s25 = sphi 0, %s23
      %s37 = sphi 0, %s39
      %s40 = sphi 0, %s37
      %s41 = sphi 0, %s40
      %s57 = sphi 0, %s41
      %s61 = sphi 0, %s61
      %s63 = sphi 0, %s61
      %s64 = sphi 0, %s63
      %s78 = sphi 0, %s64
      %s82 = sphi 0, %s82
      %s84 = sphi 0, %s82
      %s85 = sphi 0, %s84
      %s99 = sphi 0, %s85
      %s103 = sphi 0, %s103
      %s105 = sphi 0, %s103
      %s106 = sphi 0, %s105
      %s120 = sphi 0, %s106
      %s126 = sphi 0, %s128
      %s129 = sphi 0, %s126
      %s130 = sphi 0, %s129
      %s146 = sphi 0, %s130
    $region4: #{tpu_custom_call.1} parent=1 // loop_header_branch
      %16 = sbr.rel (%p14) target = $region8
    $region5: #{tpu_custom_call.1} parent=1 // loop_body
      %s18 = ssub.s32 %s13, 1
      %s19 = ssub.s32 %s13, 2
      %s26 = sadd.s32 1, %s21
      %p27 = scmp.ge.s32.totalorder %s26, 1
      %s28 = scalar_select %p27, 0, %s26
      %s29 = sadd.s32 1, %s20
      %s30 = scalar_select %p27, %s29, %s20
      %p31 = scmp.ge.s32.totalorder %s30, 2
      %s32 = scalar_select %p31, 0, %s30
      %s33 = ssub.s32 %s20, %s32
      %s34 = ssub.s32 %s21, %s28
      %s35 = sor.u32 %s33, %s34
      %p36 = scmp.eq.s32.totalorder %s35, 0
      %s38 = sadd.s32 %s37, 1
      %s39 = scalar_select %p36, %s37, %s38
      %p42 = pneg %p36
      %p43 = scmp.eq.s32.totalorder %s13, 1
      %p44 = por %p42, %p43
      %p45 = scmp.ne.s32.totalorder %s37, %s40
      %p46 = scmp.eq.s32.totalorder %s13, 0
      %p47 = por %p45, %p46
      %p48 = scmp.ne.s32.totalorder %s37, %s40
      %p49 = scmp.eq.s32.totalorder %s18, 1
      %p50 = por %p48, %p49
      %p51 = scmp.ne.s32.totalorder %s40, %s41
      %p52 = scmp.eq.s32.totalorder %s18, 0
      %p53 = por %p51, %p52
      %p54 = scmp.ne.s32.totalorder %s40, %s41
      %p55 = scmp.eq.s32.totalorder %s19, 1
      %p56 = por %p54, %p55
      %p58 = scmp.ne.s32.totalorder %s41, %s57
      %p59 = scmp.eq.s32.totalorder %s19, 0
      %p60 = por %p58, %p59
      %s62 = sadd.s32 %s61, 1
      %p65 = scmp.eq.s32.totalorder %s13, 1
      %p66 = scmp.ne.s32.totalorder %s61, %s63
      %p67 = scmp.eq.s32.totalorder %s13, 0
      %p68 = por %p66, %p67
      %p69 = scmp.ne.s32.totalorder %s61, %s63
      %p70 = scmp.eq.s32.totalorder %s18, 1
      %p71 = por %p69, %p70
      %p72 = scmp.ne.s32.totalorder %s63, %s64
      %p73 = scmp.eq.s32.totalorder %s18, 0
      %p74 = por %p72, %p73
      %p75 = scmp.ne.s32.totalorder %s63, %s64
      %p76 = scmp.eq.s32.totalorder %s19, 1
      %p77 = por %p75, %p76
      %p79 = scmp.ne.s32.totalorder %s64, %s78
      %p80 = scmp.eq.s32.totalorder %s19, 0
      %p81 = por %p79, %p80
      %s83 = sadd.s32 %s82, 1
      %p86 = scmp.eq.s32.totalorder %s13, 1
      %p87 = scmp.ne.s32.totalorder %s82, %s84
      %p88 = scmp.eq.s32.totalorder %s13, 0
      %p89 = por %p87, %p88
      %p90 = scmp.ne.s32.totalorder %s82, %s84
      %p91 = scmp.eq.s32.totalorder %s18, 1
      %p92 = por %p90, %p91
      %p93 = scmp.ne.s32.totalorder %s84, %s85
      %p94 = scmp.eq.s32.totalorder %s18, 0
      %p95 = por %p93, %p94
      %p96 = scmp.ne.s32.totalorder %s84, %s85
      %p97 = scmp.eq.s32.totalorder %s19, 1
      %p98 = por %p96, %p97
      %p100 = scmp.ne.s32.totalorder %s85, %s99
      %p101 = scmp.eq.s32.totalorder %s19, 0
      %p102 = por %p100, %p101
      %s104 = sadd.s32 %s103, 1
      %p107 = scmp.eq.s32.totalorder %s13, 1
      %p108 = scmp.ne.s32.totalorder %s103, %s105
      %p109 = scmp.eq.s32.totalorder %s13, 0
      %p110 = por %p108, %p109
      %p111 = scmp.ne.s32.totalorder %s103, %s105
      %p112 = scmp.eq.s32.totalorder %s18, 1
      %p113 = por %p111, %p112
      %p114 = scmp.ne.s32.totalorder %s105, %s106
      %p115 = scmp.eq.s32.totalorder %s18, 0
      %p116 = por %p114, %p115
      %p117 = scmp.ne.s32.totalorder %s105, %s106
      %p118 = scmp.eq.s32.totalorder %s19, 1
      %p119 = por %p117, %p118
      %p121 = scmp.ne.s32.totalorder %s106, %s120
      %p122 = scmp.eq.s32.totalorder %s19, 0
      %p123 = por %p121, %p122
      %s124 = ssub.s32 %s20, %s32
      %p125 = scmp.eq.s32.totalorder %s124, 0
      %s127 = sadd.s32 %s126, 1
      %s128 = scalar_select %p125, %s126, %s127
      %p131 = pneg %p125
      %p132 = scmp.eq.s32.totalorder %s13, 1
      %p133 = por %p131, %p132
      %p134 = scmp.ne.s32.totalorder %s126, %s129
      %p135 = scmp.eq.s32.totalorder %s13, 0
      %p136 = por %p134, %p135
      %p137 = scmp.ne.s32.totalorder %s126, %s129
      %p138 = scmp.eq.s32.totalorder %s18, 1
      %p139 = por %p137, %p138
      %p140 = scmp.ne.s32.totalorder %s129, %s130
      %p141 = scmp.eq.s32.totalorder %s18, 0
      %p142 = por %p140, %p141
      %p143 = scmp.ne.s32.totalorder %s129, %s130
      %p144 = scmp.eq.s32.totalorder %s19, 1
      %p145 = por %p143, %p144
      %p147 = scmp.ne.s32.totalorder %s130, %s146
      %p148 = scmp.eq.s32.totalorder %s19, 0
      %p149 = por %p147, %p148
      %p150 = scmp.le.s32.totalorder 1, %s13
      %p151 = scmp.lt.s32.totalorder %s13, 3
      %p152 = pnand %p150, %p151
      %p153 = pneg %p152
      // Predicated region
      $region9: #{tpu_custom_call.1} parent=5 // pred_check
        _
      $region10: #{tpu_custom_call.1} parent=5 // pred_check_branch
        %155 = sbr.rel (%p152) target = $region12
      $region11: #{tpu_custom_call.1} parent=5 // pred_region
        %s156 = ssub.s32 %s13, 1
        // Predicated region
        $region13: #{tpu_custom_call.1} parent=11 // pred_check
          %p157 = pneg %p74
        $region14: #{tpu_custom_call.1} parent=11 // pred_check_branch
          %159 = sbr.rel (%p157) target = $region16
        $region15: #{tpu_custom_call.1} parent=11 // pred_region
          _
        $region16: #{tpu_custom_call.1} parent=11 // pred_fallthru
          _
        // Predicated region
        $region17: #{tpu_custom_call.1} parent=11 // pred_check
          %p160 = pneg %p95
        $region18: #{tpu_custom_call.1} parent=11 // pred_check_branch
          %162 = sbr.rel (%p160) target = $region20
        $region19: #{tpu_custom_call.1} parent=11 // pred_region
          _
        $region20: #{tpu_custom_call.1} parent=11 // pred_fallthru
          _
        // Predicated region
        $region21: #{tpu_custom_call.1} parent=11 // pred_check
          %p163 = pneg %p116
        $region22: #{tpu_custom_call.1} parent=11 // pred_check_branch
          %165 = sbr.rel (%p163) target = $region24
        $region23: #{tpu_custom_call.1} parent=11 // pred_region
          _
        $region24: #{tpu_custom_call.1} parent=11 // pred_fallthru
          _
      $region12: #{tpu_custom_call.1} parent=5 // pred_fallthru
        _
      %p166 = scmp.lt.s32.totalorder %s13, 2
      // Predicated region
      $region25: #{tpu_custom_call.1} parent=5 // pred_check
        %p167 = pneg %p166
      $region26: #{tpu_custom_call.1} parent=5 // pred_check_branch
        %169 = sbr.rel (%p167) target = $region28
      $region27: #{tpu_custom_call.1} parent=5 // pred_region
        // Predicated region
        $region29: #{tpu_custom_call.1} parent=27 // pred_check
          %p170 = pneg %p47
        $region30: #{tpu_custom_call.1} parent=27 // pred_check_branch
          %172 = sbr.rel (%p170) target = $region32
        $region31: #{tpu_custom_call.1} parent=27 // pred_region
          %p173 = scmp.lt.s32.totalorder %s20, 1
          %s174 = scalar_select %p173, %s20, 1
          %p175 = scmp.lt.s32.totalorder %s21, 0
          %s176 = scalar_select %p175, %s21, 0
          %s177 = smul.addr %s176, 41
          %s178 = smul.addr %s174, 41
          %s179 = sadd.s32 %s177, %s178
          %s180 = smul.addr %s179, 4
          %s181 = scalar_lea.vmem %s0, %s180
        $region32: #{tpu_custom_call.1} parent=27 // pred_fallthru
          _
      $region28: #{tpu_custom_call.1} parent=5 // pred_fallthru
        _
      %p182 = scmp.le.s32.totalorder 1, %s13
      %p183 = scmp.lt.s32.totalorder %s13, 3
      %p184 = pnand %p182, %p183
      %p185 = pneg %p184
      // Predicated region
      $region33: #{tpu_custom_call.1} parent=5 // pred_check
        _
      $region34: #{tpu_custom_call.1} parent=5 // pred_check_branch
        %187 = sbr.rel (%p184) target = $region36
      $region35: #{tpu_custom_call.1} parent=5 // pred_region
        %s188 = ssub.s32 %s13, 1
        %p189 = scmp.lt.s32.totalorder %s22, 1
        %s190 = scalar_select %p189, %s22, 1
        %p191 = scmp.lt.s32.totalorder %s23, 0
        %s192 = scalar_select %p191, %s23, 0
        %s193 = smul.addr %s192, 41
        %s194 = smul.addr %s190, 41
        %s195 = sadd.s32 %s193, %s194
        %s196 = smul.addr %s195, 4
        %s197 = scalar_lea.vmem %s0, %s196
        %p198 = pneg %p53
        %p199 = pneg %p50
        %p200 = pneg %p74
        %p201 = pneg %p71
        %p202 = pneg %p95
        %p203 = pneg %p92
        %p204 = pneg %p116
        %p205 = pneg %p113
        %p206 = pneg %p142
        %p207 = pneg %p139
        %s208 = sand.u32 %s129, 1
        %s209 = scalar_lea.sflag [#allocation4], %s208
        %s210 = sand.u32 %s129, 1
        %s211 = scalar_lea.vmem [#allocation3], %s210
        %p212 = scmp.lt.s32.totalorder %s22, 1
        %s213 = scalar_select %p212, %s22, 1
        %p214 = scmp.lt.s32.totalorder %s23, 0
        %s215 = scalar_select %p214, %s23, 0
        %s216 = smul.addr %s215, 41
        %s217 = smul.addr %s213, 41
        %s218 = sadd.s32 %s216, %s217
        %s219 = smul.addr %s218, 4
        %s220 = scalar_lea.vmem %s0, %s219
        %p222 = scmp.eq.s32.totalorder %s23, 0
        // Predicated region
        $region37: #{tpu_custom_call.1} parent=35 // pred_check
          %p223 = pneg %p222
        $region38: #{tpu_custom_call.1} parent=35 // pred_check_branch
          %225 = sbr.rel (%p223) target = $region40
        $region39: #{tpu_custom_call.1} parent=35 // pred_region
          %226 = vst [vmem:[#allocation2] sm:$0x1] 0.0
        $region40: #{tpu_custom_call.1} parent=35 // pred_fallthru
          _
        %v227 = vld [vmem:[%s220] sm:$0xf]
        %v228 = vld [vmem:[%s220 + $0x4] sm:$0xf]
        %v229 = vld [vmem:[%s220 + $0x8] sm:$0xf]
        %v230 = vld [vmem:[%s220 + $0xc] sm:$0xf]
        %v231 = vld [vmem:[%s220 + $0x10] sm:$0xf]
        %v232 = vld [vmem:[%s220 + $0x14] sm:$0xf]
        %v233 = vld [vmem:[%s220 + $0x18] sm:$0xf]
        %v234 = vld [vmem:[%s220 + $0x1c] sm:$0xf]
        %v235 = vld [vmem:[%s220 + $0x20] sm:$0xf]
        %v236 = vld [vmem:[%s220 + $0x24] sm:$0xf]
        %v237 = vld [vmem:[%s220 + $0x28] sm:$0xf]
        %v238 = vld [vmem:[%s220 + $0x2c] sm:$0xf]
        %v239 = vld [vmem:[%s220 + $0x30] sm:$0xf]
        %v240 = vld [vmem:[%s220 + $0x34] sm:$0xf]
        %v241 = vld [vmem:[%s220 + $0x38] sm:$0xf]
        %v242 = vld [vmem:[%s220 + $0x3c] sm:$0xf]
        %v243 = vld [vmem:[%s220 + $0x40] sm:$0xf]
        %v244 = vld [vmem:[%s220 + $0x44] sm:$0xf]
        %v245 = vld [vmem:[%s220 + $0x48] sm:$0xf]
        %v246 = vld [vmem:[%s220 + $0x4c] sm:$0xf]
        %v247 = vld [vmem:[%s220 + $0x50] sm:$0xf]
        %v248 = vld [vmem:[%s220 + $0x54] sm:$0xf]
        %v249 = vld [vmem:[%s220 + $0x58] sm:$0xf]
        %v250 = vld [vmem:[%s220 + $0x5c] sm:$0xf]
        %v251 = vld [vmem:[%s220 + $0x60] sm:$0xf]
        %v252 = vld [vmem:[%s220 + $0x64] sm:$0xf]
        %v253 = vld [vmem:[%s220 + $0x68] sm:$0xf]
        %v254 = vld [vmem:[%s220 + $0x6c] sm:$0xf]
        %v255 = vld [vmem:[%s220 + $0x70] sm:$0xf]
        %v256 = vld [vmem:[%s220 + $0x74] sm:$0xf]
        %v257 = vld [vmem:[%s220 + $0x78] sm:$0xf]
        %v258 = vld [vmem:[%s220 + $0x7c] sm:$0xf]
        %v259 = vld [vmem:[%s220 + $0x80] sm:$0xf]
        %v260 = vld [vmem:[%s220 + $0x84] sm:$0xf]
        %v261 = vld [vmem:[%s220 + $0x88] sm:$0xf]
        %v262 = vld [vmem:[%s220 + $0x8c] sm:$0xf]
        %v263 = vld [vmem:[%s220 + $0x90] sm:$0xf]
        %v264 = vld [vmem:[%s220 + $0x94] sm:$0xf]
        %v265 = vld [vmem:[%s220 + $0x98] sm:$0xf]
        %v266 = vld [vmem:[%s220 + $0x9c] sm:$0xf]
        %v267 = vld [vmem:[%s220 + $0xa0] sm:$0xf]
        %v268 = vld [vmem:[%s1] sm:$0xf]
        %v269 = vld [vmem:[%s1 + $0x4] sm:$0x1]
        %s270 = scalar_lea.vmem %s1, 8
        %v271 = vld [vmem:[%s270] sm:$0xf]
        %v272 = vld [vmem:[%s270 + $0x4] sm:$0x1]
        %v310 = vunpack.c.l.b16 %v227
        %v311 = vunpack.c.l.b16 %v228
        %v312 = vunpack.c.l.b16 %v229
        %v313 = vunpack.c.l.b16 %v230
        %v314 = vunpack.c.l.b16 %v231
        %v315 = vunpack.c.l.b16 %v232
        %v316 = vunpack.c.l.b16 %v233
        %v317 = vunpack.c.l.b16 %v234
        %v318 = vunpack.c.l.b16 %v235
        %v319 = vunpack.c.l.b16 %v236
        %v320 = vunpack.c.l.b16 %v237
        %v321 = vunpack.c.l.b16 %v238
        %v322 = vunpack.c.l.b16 %v239
        %v323 = vunpack.c.l.b16 %v240
        %v324 = vunpack.c.l.b16 %v241
        %v325 = vunpack.c.l.b16 %v242
        %v326 = vunpack.c.l.b16 %v243
        %v327 = vunpack.c.l.b16 %v244
        %v328 = vunpack.c.l.b16 %v245
        %v329 = vunpack.c.l.b16 %v246
        %v330 = vunpack.c.l.b16 %v247
        %v331 = vunpack.c.l.b16 %v248
        %v332 = vunpack.c.l.b16 %v249
        %v333 = vunpack.c.l.b16 %v250
        %v334 = vunpack.c.l.b16 %v251
        %v335 = vunpack.c.l.b16 %v252
        %v336 = vunpack.c.l.b16 %v253
        %v337 = vunpack.c.l.b16 %v254
        %v338 = vunpack.c.l.b16 %v255
        %v339 = vunpack.c.l.b16 %v256
        %v340 = vunpack.c.l.b16 %v257
        %v341 = vunpack.c.l.b16 %v258
        %v342 = vunpack.c.l.b16 %v259
        %v343 = vunpack.c.l.b16 %v260
        %v344 = vunpack.c.l.b16 %v261
        %v345 = vunpack.c.l.b16 %v262
        %v346 = vunpack.c.l.b16 %v263
        %v347 = vpack.c.b16 %v311, %v310
        %v348 = vpack.c.b16 %v313, %v312
        %v349 = vpack.c.b16 %v315, %v314
        %v350 = vpack.c.b16 %v317, %v316
        %v351 = vpack.c.b16 %v319, %v318
        %v352 = vpack.c.b16 %v321, %v320
        %v353 = vpack.c.b16 %v323, %v322
        %v354 = vpack.c.b16 %v325, %v324
        %v355 = vpack.c.b16 %v327, %v326
        %v356 = vpack.c.b16 %v329, %v328
        %v357 = vpack.c.b16 %v331, %v330
        %v358 = vpack.c.b16 %v333, %v332
        %v359 = vpack.c.b16 %v335, %v334
        %v360 = vpack.c.b16 %v337, %v336
        %v361 = vpack.c.b16 %v339, %v338
        %v362 = vpack.c.b16 %v341, %v340
        %v363 = vpack.c.b16 %v343, %v342
        %v364 = vpack.c.b16 %v345, %v344
        %v365 = vpack.c.b16 %v346, %v346
        %vm366 = vsmask.f32 7424
        %v368 = vshrl.u32 %v347, 16
        %v370 = vshll.u32 %v347, 16
        %v372 = vrot.slane %v370, 1
        %v373 = vor.u32 %v368, %v372
        %v375 = vshll.u32 %v348, 16
        %v377 = vrot.slane %v375, 1
        %v378 = vsel %vm366, %v373, %v377
        %v379 = vshrl.u32 %v348, 16
        %v381 = vor.u32 %v379, %v377
        %v383 = vshll.u32 %v349, 16
        %v385 = vrot.slane %v383, 1
        %v386 = vsel %vm366, %v381, %v385
        %v387 = vshrl.u32 %v349, 16
        %v389 = vor.u32 %v387, %v385
        %v391 = vshll.u32 %v350, 16
        %v393 = vrot.slane %v391, 1
        %v394 = vsel %vm366, %v389, %v393
        %v395 = vshrl.u32 %v350, 16
        %v397 = vor.u32 %v395, %v393
        %v399 = vshll.u32 %v351, 16
        %v401 = vrot.slane %v399, 1
        %v402 = vsel %vm366, %v397, %v401
        %v403 = vshrl.u32 %v351, 16
        %v405 = vor.u32 %v403, %v401
        %v407 = vshll.u32 %v352, 16
        %v409 = vrot.slane %v407, 1
        %v410 = vsel %vm366, %v405, %v409
        %v411 = vshrl.u32 %v352, 16
        %v413 = vor.u32 %v411, %v409
        %v415 = vshll.u32 %v353, 16
        %v417 = vrot.slane %v415, 1
        %v418 = vsel %vm366, %v413, %v417
        %v419 = vshrl.u32 %v353, 16
        %v421 = vor.u32 %v419, %v417
        %v423 = vshll.u32 %v354, 16
        %v425 = vrot.slane %v423, 1
        %v426 = vsel %vm366, %v421, %v425
        %v427 = vshrl.u32 %v354, 16
        %v429 = vor.u32 %v427, %v425
        %v431 = vshll.u32 %v355, 16
        %v433 = vrot.slane %v431, 1
        %v434 = vsel %vm366, %v429, %v433
        %v435 = vshrl.u32 %v355, 16
        %v437 = vor.u32 %v435, %v433
        %v439 = vshll.u32 %v356, 16
        %v441 = vrot.slane %v439, 1
        %v442 = vsel %vm366, %v437, %v441
        %v443 = vshrl.u32 %v356, 16
        %v445 = vor.u32 %v443, %v441
        %v447 = vshll.u32 %v357, 16
        %v449 = vrot.slane %v447, 1
        %v450 = vsel %vm366, %v445, %v449
        %v451 = vshrl.u32 %v357, 16
        %v453 = vor.u32 %v451, %v449
        %v455 = vshll.u32 %v358, 16
        %v457 = vrot.slane %v455, 1
        %v458 = vsel %vm366, %v453, %v457
        %v459 = vshrl.u32 %v358, 16
        %v461 = vor.u32 %v459, %v457
        %v463 = vshll.u32 %v359, 16
        %v465 = vrot.slane %v463, 1
        %v466 = vsel %vm366, %v461, %v465
        %v467 = vshrl.u32 %v359, 16
        %v469 = vor.u32 %v467, %v465
        %v471 = vshll.u32 %v360, 16
        %v473 = vrot.slane %v471, 1
        %v474 = vsel %vm366, %v469, %v473
        %v475 = vshrl.u32 %v360, 16
        %v477 = vor.u32 %v475, %v473
        %v479 = vshll.u32 %v361, 16
        %v481 = vrot.slane %v479, 1
        %v482 = vsel %vm366, %v477, %v481
        %v483 = vshrl.u32 %v361, 16
        %v485 = vor.u32 %v483, %v481
        %v487 = vshll.u32 %v362, 16
        %v489 = vrot.slane %v487, 1
        %v490 = vsel %vm366, %v485, %v489
        %v491 = vshrl.u32 %v362, 16
        %v493 = vor.u32 %v491, %v489
        %v495 = vshll.u32 %v363, 16
        %v497 = vrot.slane %v495, 1
        %v498 = vsel %vm366, %v493, %v497
        %v499 = vshrl.u32 %v363, 16
        %v501 = vor.u32 %v499, %v497
        %v503 = vshll.u32 %v364, 16
        %v505 = vrot.slane %v503, 1
        %v506 = vsel %vm366, %v501, %v505
        %v507 = vshrl.u32 %v364, 16
        %v509 = vor.u32 %v507, %v505
        %v511 = vshll.u32 %v365, 16
        %v513 = vrot.slane %v511, 1
        %v514 = vsel %vm366, %v509, %v513
        %v517 = vunpack.c.l.b16 %v271
        %v518 = vunpack.c.l.b16 %v272
        %v519 = vpack.c.b16 %v518, %v517
        %vm520 = vcmask 72704
        %v522 = vsel %vm520, %v378, 0
        %v525 = vsel %vm520, %v386, 0
        %v528 = vsel %vm520, %v394, 0
        %v531 = vsel %vm520, %v402, 0
        %v534 = vsel %vm520, %v410, 0
        %v537 = vsel %vm520, %v418, 0
        %v540 = vsel %vm520, %v426, 0
        %v543 = vsel %vm520, %v434, 0
        %v546 = vsel %vm520, %v442, 0
        %v549 = vsel %vm520, %v450, 0
        %v552 = vsel %vm520, %v458, 0
        %v555 = vsel %vm520, %v466, 0
        %v558 = vsel %vm520, %v474, 0
        %v561 = vsel %vm520, %v482, 0
        %v564 = vsel %vm520, %v490, 0
        %v567 = vsel %vm520, %v498, 0
        %v570 = vsel %vm520, %v506, 0
        %v573 = vsel %vm520, %v514, 0
        %vm575 = vcmask 1043456
        %vm576 = vcmask 1044480
        %v577 = vsel %vm575, 4294967295, 65535
        %v578 = vsel %vm576, %v577, 0
        %v580 = vand.u32 %v519, %v578
        %582 = vmatprep.subr.bf16.mxu0 0
        %583 = vmatpush1.bf16.msra.mxu0 0
        %584 = vmatprep.subr.bf16.mxu0 0
        %585 = vmatpush1.bf16.msra.mxu0 0
        %586 = vmatprep.subr.bf16.mxu0 0
        %587 = vmatpush1.bf16.msra.mxu0 0
        %588 = vmatprep.subr.bf16.mxu0 0
        %589 = vmatpush1.bf16.msra.mxu0 0
        %590 = vmatprep.subr.bf16.mxu0 0
        %591 = vmatpush1.bf16.msra.mxu0 0
        %592 = vmatprep.subr.bf16.mxu0 0
        %593 = vmatpush1.bf16.msra.mxu0 0
        %594 = vmatprep.subr.bf16.mxu0 0
        %595 = vmatpush1.bf16.msra.mxu0 0
        %596 = vmatprep.subr.bf16.mxu0 0
        %597 = vmatpush1.bf16.msra.mxu0 %v580
        %598 = vmatprep.subr.bf16.mxu0 0
        %599 = vmatpush2.bf16.msra.mxu0 0
        %600 = vmatprep.subr.bf16.mxu0 0
        %601 = vmatpush2.bf16.msra.mxu0 0
        %602 = vmatprep.subr.bf16.mxu0 0
        %603 = vmatpush2.bf16.msra.mxu0 0
        %604 = vmatprep.subr.bf16.mxu0 0
        %605 = vmatpush2.bf16.msra.mxu0 0
        %606 = vmatprep.subr.bf16.mxu0 0
        %607 = vmatpush2.bf16.msra.mxu0 0
        %608 = vmatprep.subr.bf16.mxu0 0
        %609 = vmatpush2.bf16.msra.mxu0 0
        %610 = vmatprep.subr.bf16.mxu0 0
        %611 = vmatpush2.bf16.msra.mxu0 0
        %612 = vmatprep.subr.bf16.mxu0 0
        %613 = vmatpush2.bf16.msra.mxu0 0
        %614 = vmatprep.mubr.bf16.mxu0 0
        %615 = vmatmul.mubr.bf16.gmra.mxu0 %v522
        %v616 = vpop.f32.mrf.mxu0
        %v617 = vadd.f32 0.0, %v616
        %v618 = vpop.f32.mrf.mxu0
        %v619 = vpop.f32.mrf.mxu0
        %v620 = vadd.f32 0.0, %v619
        %v621 = vpop.f32.mrf.mxu0
        %622 = vmatprep.mubr.bf16.mxu0 0
        %623 = vmatmul.mubr.bf16.gmra.mxu0 %v525
        %v624 = vpop.f32.mrf.mxu0
        %v625 = vadd.f32 0.0, %v624
        %v626 = vpop.f32.mrf.mxu0
        %v627 = vpop.f32.mrf.mxu0
        %v628 = vadd.f32 0.0, %v627
        %v629 = vpop.f32.mrf.mxu0
        %630 = vmatprep.mubr.bf16.mxu0 0
        %631 = vmatmul.mubr.bf16.gmra.mxu0 %v528
        %v632 = vpop.f32.mrf.mxu0
        %v633 = vadd.f32 0.0, %v632
        %v634 = vpop.f32.mrf.mxu0
        %v635 = vpop.f32.mrf.mxu0
        %v636 = vadd.f32 0.0, %v635
        %v637 = vpop.f32.mrf.mxu0
        %638 = vmatprep.mubr.bf16.mxu0 0
        %639 = vmatmul.mubr.bf16.gmra.mxu0 %v531
        %v640 = vpop.f32.mrf.mxu0
        %v641 = vadd.f32 0.0, %v640
        %v642 = vpop.f32.mrf.mxu0
        %v643 = vpop.f32.mrf.mxu0
        %v644 = vadd.f32 0.0, %v643
        %v645 = vpop.f32.mrf.mxu0
        %646 = vmatprep.mubr.bf16.mxu0 0
        %647 = vmatmul.mubr.bf16.gmra.mxu0 %v534
        %v648 = vpop.f32.mrf.mxu0
        %v649 = vadd.f32 0.0, %v648
        %v650 = vpop.f32.mrf.mxu0
        %v651 = vpop.f32.mrf.mxu0
        %v652 = vadd.f32 0.0, %v651
        %v653 = vpop.f32.mrf.mxu0
        %654 = vmatprep.mubr.bf16.mxu0 0
        %655 = vmatmul.mubr.bf16.gmra.mxu0 %v537
        %v656 = vpop.f32.mrf.mxu0
        %v657 = vadd.f32 0.0, %v656
        %v658 = vpop.f32.mrf.mxu0
        %v659 = vpop.f32.mrf.mxu0
        %v660 = vadd.f32 0.0, %v659
        %v661 = vpop.f32.mrf.mxu0
        %662 = vmatprep.mubr.bf16.mxu0 0
        %663 = vmatmul.mubr.bf16.gmra.mxu0 %v540
        %v664 = vpop.f32.mrf.mxu0
        %v665 = vadd.f32 0.0, %v664
        %v666 = vpop.f32.mrf.mxu0
        %v667 = vpop.f32.mrf.mxu0
        %v668 = vadd.f32 0.0, %v667
        %v669 = vpop.f32.mrf.mxu0
        %670 = vmatprep.mubr.bf16.mxu0 0
        %671 = vmatmul.mubr.bf16.gmra.mxu0 %v543
        %v672 = vpop.f32.mrf.mxu0
        %v673 = vadd.f32 0.0, %v672
        %v674 = vpop.f32.mrf.mxu0
        %v675 = vpop.f32.mrf.mxu0
        %v676 = vadd.f32 0.0, %v675
        %v677 = vpop.f32.mrf.mxu0
        %678 = vmatprep.mubr.bf16.mxu0 0
        %679 = vmatmul.mubr.bf16.gmra.mxu0 %v546
        %v680 = vpop.f32.mrf.mxu0
        %v681 = vadd.f32 0.0, %v680
        %v682 = vpop.f32.mrf.mxu0
        %v683 = vpop.f32.mrf.mxu0
        %v684 = vadd.f32 0.0, %v683
        %v685 = vpop.f32.mrf.mxu0
        %686 = vmatprep.mubr.bf16.mxu0 0
        %687 = vmatmul.mubr.bf16.gmra.mxu0 %v549
        %v688 = vpop.f32.mrf.mxu0
        %v689 = vadd.f32 0.0, %v688
        %v690 = vpop.f32.mrf.mxu0
        %v691 = vpop.f32.mrf.mxu0
        %v692 = vadd.f32 0.0, %v691
        %v693 = vpop.f32.mrf.mxu0
        %694 = vmatprep.mubr.bf16.mxu0 0
        %695 = vmatmul.mubr.bf16.gmra.mxu0 %v552
        %v696 = vpop.f32.mrf.mxu0
        %v697 = vadd.f32 0.0, %v696
        %v698 = vpop.f32.mrf.mxu0
        %v699 = vpop.f32.mrf.mxu0
        %v700 = vadd.f32 0.0, %v699
        %v701 = vpop.f32.mrf.mxu0
        %702 = vmatprep.mubr.bf16.mxu0 0
        %703 = vmatmul.mubr.bf16.gmra.mxu0 %v555
        %v704 = vpop.f32.mrf.mxu0
        %v705 = vadd.f32 0.0, %v704
        %v706 = vpop.f32.mrf.mxu0
        %v707 = vpop.f32.mrf.mxu0
        %v708 = vadd.f32 0.0, %v707
        %v709 = vpop.f32.mrf.mxu0
        %710 = vmatprep.mubr.bf16.mxu0 0
        %711 = vmatmul.mubr.bf16.gmra.mxu0 %v558
        %v712 = vpop.f32.mrf.mxu0
        %v713 = vadd.f32 0.0, %v712
        %v714 = vpop.f32.mrf.mxu0
        %v715 = vpop.f32.mrf.mxu0
        %v716 = vadd.f32 0.0, %v715
        %v717 = vpop.f32.mrf.mxu0
        %718 = vmatprep.mubr.bf16.mxu0 0
        %719 = vmatmul.mubr.bf16.gmra.mxu0 %v561
        %v720 = vpop.f32.mrf.mxu0
        %v721 = vadd.f32 0.0, %v720
        %v722 = vpop.f32.mrf.mxu0
        %v723 = vpop.f32.mrf.mxu0
        %v724 = vadd.f32 0.0, %v723
        %v725 = vpop.f32.mrf.mxu0
        %726 = vmatprep.mubr.bf16.mxu0 0
        %727 = vmatmul.mubr.bf16.gmra.mxu0 %v564
        %v728 = vpop.f32.mrf.mxu0
        %v729 = vadd.f32 0.0, %v728
        %v730 = vpop.f32.mrf.mxu0
        %v731 = vpop.f32.mrf.mxu0
        %v732 = vadd.f32 0.0, %v731
        %v733 = vpop.f32.mrf.mxu0
        %734 = vmatprep.mubr.bf16.mxu0 0
        %735 = vmatmul.mubr.bf16.gmra.mxu0 %v567
        %v736 = vpop.f32.mrf.mxu0
        %v737 = vadd.f32 0.0, %v736
        %v738 = vpop.f32.mrf.mxu0
        %v739 = vpop.f32.mrf.mxu0
        %v740 = vadd.f32 0.0, %v739
        %v741 = vpop.f32.mrf.mxu0
        %742 = vmatprep.mubr.bf16.mxu0 0
        %743 = vmatmul.mubr.bf16.gmra.mxu0 %v570
        %v744 = vpop.f32.mrf.mxu0
        %v745 = vadd.f32 0.0, %v744
        %v746 = vpop.f32.mrf.mxu0
        %v747 = vpop.f32.mrf.mxu0
        %v748 = vadd.f32 0.0, %v747
        %v749 = vpop.f32.mrf.mxu0
        %750 = vmatprep.mubr.bf16.mxu0 0
        %751 = vmatmul.mubr.bf16.gmra.mxu0 %v573
        %v752 = vpop.f32.mrf.mxu0
        %v753 = vadd.f32 0.0, %v752
        %v754 = vpop.f32.mrf.mxu0
        %v755 = vpop.f32.mrf.mxu0
        %v756 = vadd.f32 0.0, %v755
        %v757 = vpop.f32.mrf.mxu0
        %758 = vdwg.mxu0
        %v761 = vunpack.c.l.b16 %v268
        %v762 = vunpack.c.l.b16 %v269
        %v763 = vpack.c.b16 %v762, %v761
        %v764 = vsel %vm520, %v347, 0
        %v766 = vsel %vm520, %v348, 0
        %v768 = vsel %vm520, %v349, 0
        %v770 = vsel %vm520, %v350, 0
        %v772 = vsel %vm520, %v351, 0
        %v774 = vsel %vm520, %v352, 0
        %v776 = vsel %vm520, %v353, 0
        %v778 = vsel %vm520, %v354, 0
        %v780 = vsel %vm520, %v355, 0
        %v782 = vsel %vm520, %v356, 0
        %v784 = vsel %vm520, %v357, 0
        %v786 = vsel %vm520, %v358, 0
        %v788 = vsel %vm520, %v359, 0
        %v790 = vsel %vm520, %v360, 0
        %v792 = vsel %vm520, %v361, 0
        %v794 = vsel %vm520, %v362, 0
        %v796 = vsel %vm520, %v363, 0
        %v798 = vsel %vm520, %v364, 0
        %v801 = vand.u32 %v763, %v578
        %803 = vmatprep.subr.bf16.mxu0 0
        %804 = vmatpush1.bf16.msra.mxu0 0
        %805 = vmatprep.subr.bf16.mxu0 0
        %806 = vmatpush1.bf16.msra.mxu0 0
        %807 = vmatprep.subr.bf16.mxu0 0
        %808 = vmatpush1.bf16.msra.mxu0 0
        %809 = vmatprep.subr.bf16.mxu0 0
        %810 = vmatpush1.bf16.msra.mxu0 0
        %811 = vmatprep.subr.bf16.mxu0 0
        %812 = vmatpush1.bf16.msra.mxu0 0
        %813 = vmatprep.subr.bf16.mxu0 0
        %814 = vmatpush1.bf16.msra.mxu0 0
        %815 = vmatprep.subr.bf16.mxu0 0
        %816 = vmatpush1.bf16.msra.mxu0 0
        %817 = vmatprep.subr.bf16.mxu0 0
        %818 = vmatpush1.bf16.msra.mxu0 %v801
        %819 = vmatprep.subr.bf16.mxu0 0
        %820 = vmatpush2.bf16.msra.mxu0 0
        %821 = vmatprep.subr.bf16.mxu0 0
        %822 = vmatpush2.bf16.msra.mxu0 0
        %823 = vmatprep.subr.bf16.mxu0 0
        %824 = vmatpush2.bf16.msra.mxu0 0
        %825 = vmatprep.subr.bf16.mxu0 0
        %826 = vmatpush2.bf16.msra.mxu0 0
        %827 = vmatprep.subr.bf16.mxu0 0
        %828 = vmatpush2.bf16.msra.mxu0 0
        %829 = vmatprep.subr.bf16.mxu0 0
        %830 = vmatpush2.bf16.msra.mxu0 0
        %831 = vmatprep.subr.bf16.mxu0 0
        %832 = vmatpush2.bf16.msra.mxu0 0
        %833 = vmatprep.subr.bf16.mxu0 0
        %834 = vmatpush2.bf16.msra.mxu0 0
        %835 = vmatprep.mubr.bf16.mxu0 0
        %836 = vmatmul.mubr.bf16.gmra.mxu0 %v764
        %v837 = vpop.f32.mrf.mxu0
        %v838 = vadd.f32 %v617, %v837
        %v839 = vpop.f32.mrf.mxu0
        %v840 = vpop.f32.mrf.mxu0
        %v841 = vadd.f32 %v620, %v840
        %v842 = vpop.f32.mrf.mxu0
        %843 = vmatprep.mubr.bf16.mxu0 0
        %844 = vmatmul.mubr.bf16.gmra.mxu0 %v766
        %v845 = vpop.f32.mrf.mxu0
        %v846 = vadd.f32 %v625, %v845
        %v847 = vpop.f32.mrf.mxu0
        %v848 = vpop.f32.mrf.mxu0
        %v849 = vadd.f32 %v628, %v848
        %v850 = vpop.f32.mrf.mxu0
        %851 = vmatprep.mubr.bf16.mxu0 0
        %852 = vmatmul.mubr.bf16.gmra.mxu0 %v768
        %v853 = vpop.f32.mrf.mxu0
        %v854 = vadd.f32 %v633, %v853
        %v855 = vpop.f32.mrf.mxu0
        %v856 = vpop.f32.mrf.mxu0
        %v857 = vadd.f32 %v636, %v856
        %v858 = vpop.f32.mrf.mxu0
        %859 = vmatprep.mubr.bf16.mxu0 0
        %860 = vmatmul.mubr.bf16.gmra.mxu0 %v770
        %v861 = vpop.f32.mrf.mxu0
        %v862 = vadd.f32 %v641, %v861
        %v863 = vpop.f32.mrf.mxu0
        %v864 = vpop.f32.mrf.mxu0
        %v865 = vadd.f32 %v644, %v864
        %v866 = vpop.f32.mrf.mxu0
        %867 = vmatprep.mubr.bf16.mxu0 0
        %868 = vmatmul.mubr.bf16.gmra.mxu0 %v772
        %v869 = vpop.f32.mrf.mxu0
        %v870 = vadd.f32 %v649, %v869
        %v871 = vpop.f32.mrf.mxu0
        %v872 = vpop.f32.mrf.mxu0
        %v873 = vadd.f32 %v652, %v872
        %v874 = vpop.f32.mrf.mxu0
        %875 = vmatprep.mubr.bf16.mxu0 0
        %876 = vmatmul.mubr.bf16.gmra.mxu0 %v774
        %v877 = vpop.f32.mrf.mxu0
        %v878 = vadd.f32 %v657, %v877
        %v879 = vpop.f32.mrf.mxu0
        %v880 = vpop.f32.mrf.mxu0
        %v881 = vadd.f32 %v660, %v880
        %v882 = vpop.f32.mrf.mxu0
        %883 = vmatprep.mubr.bf16.mxu0 0
        %884 = vmatmul.mubr.bf16.gmra.mxu0 %v776
        %v885 = vpop.f32.mrf.mxu0
        %v886 = vadd.f32 %v665, %v885
        %v887 = vpop.f32.mrf.mxu0
        %v888 = vpop.f32.mrf.mxu0
        %v889 = vadd.f32 %v668, %v888
        %v890 = vpop.f32.mrf.mxu0
        %891 = vmatprep.mubr.bf16.mxu0 0
        %892 = vmatmul.mubr.bf16.gmra.mxu0 %v778
        %v893 = vpop.f32.mrf.mxu0
        %v894 = vadd.f32 %v673, %v893
        %v895 = vpop.f32.mrf.mxu0
        %v896 = vpop.f32.mrf.mxu0
        %v897 = vadd.f32 %v676, %v896
        %v898 = vpop.f32.mrf.mxu0
        %899 = vmatprep.mubr.bf16.mxu0 0
        %900 = vmatmul.mubr.bf16.gmra.mxu0 %v780
        %v901 = vpop.f32.mrf.mxu0
        %v902 = vadd.f32 %v681, %v901
        %v903 = vpop.f32.mrf.mxu0
        %v904 = vpop.f32.mrf.mxu0
        %v905 = vadd.f32 %v684, %v904
        %v906 = vpop.f32.mrf.mxu0
        %907 = vmatprep.mubr.bf16.mxu0 0
        %908 = vmatmul.mubr.bf16.gmra.mxu0 %v782
        %v909 = vpop.f32.mrf.mxu0
        %v910 = vadd.f32 %v689, %v909
        %v911 = vpop.f32.mrf.mxu0
        %v912 = vpop.f32.mrf.mxu0
        %v913 = vadd.f32 %v692, %v912
        %v914 = vpop.f32.mrf.mxu0
        %915 = vmatprep.mubr.bf16.mxu0 0
        %916 = vmatmul.mubr.bf16.gmra.mxu0 %v784
        %v917 = vpop.f32.mrf.mxu0
        %v918 = vadd.f32 %v697, %v917
        %v919 = vpop.f32.mrf.mxu0
        %v920 = vpop.f32.mrf.mxu0
        %v921 = vadd.f32 %v700, %v920
        %v922 = vpop.f32.mrf.mxu0
        %923 = vmatprep.mubr.bf16.mxu0 0
        %924 = vmatmul.mubr.bf16.gmra.mxu0 %v786
        %v925 = vpop.f32.mrf.mxu0
        %v926 = vadd.f32 %v705, %v925
        %v927 = vpop.f32.mrf.mxu0
        %v928 = vpop.f32.mrf.mxu0
        %v929 = vadd.f32 %v708, %v928
        %v930 = vpop.f32.mrf.mxu0
        %931 = vmatprep.mubr.bf16.mxu0 0
        %932 = vmatmul.mubr.bf16.gmra.mxu0 %v788
        %v933 = vpop.f32.mrf.mxu0
        %v934 = vadd.f32 %v713, %v933
        %v935 = vpop.f32.mrf.mxu0
        %v936 = vpop.f32.mrf.mxu0
        %v937 = vadd.f32 %v716, %v936
        %v938 = vpop.f32.mrf.mxu0
        %939 = vmatprep.mubr.bf16.mxu0 0
        %940 = vmatmul.mubr.bf16.gmra.mxu0 %v790
        %v941 = vpop.f32.mrf.mxu0
        %v942 = vadd.f32 %v721, %v941
        %v943 = vpop.f32.mrf.mxu0
        %v944 = vpop.f32.mrf.mxu0
        %v945 = vadd.f32 %v724, %v944
        %v946 = vpop.f32.mrf.mxu0
        %947 = vmatprep.mubr.bf16.mxu0 0
        %948 = vmatmul.mubr.bf16.gmra.mxu0 %v792
        %v949 = vpop.f32.mrf.mxu0
        %v950 = vadd.f32 %v729, %v949
        %v951 = vpop.f32.mrf.mxu0
        %v952 = vpop.f32.mrf.mxu0
        %v953 = vadd.f32 %v732, %v952
        %v954 = vpop.f32.mrf.mxu0
        %955 = vmatprep.mubr.bf16.mxu0 0
        %956 = vmatmul.mubr.bf16.gmra.mxu0 %v794
        %v957 = vpop.f32.mrf.mxu0
        %v958 = vadd.f32 %v737, %v957
        %v959 = vpop.f32.mrf.mxu0
        %v960 = vpop.f32.mrf.mxu0
        %v961 = vadd.f32 %v740, %v960
        %v962 = vpop.f32.mrf.mxu0
        %963 = vmatprep.mubr.bf16.mxu0 0
        %964 = vmatmul.mubr.bf16.gmra.mxu0 %v796
        %v965 = vpop.f32.mrf.mxu0
        %v966 = vadd.f32 %v745, %v965
        %v967 = vpop.f32.mrf.mxu0
        %v968 = vpop.f32.mrf.mxu0
        %v969 = vadd.f32 %v748, %v968
        %v970 = vpop.f32.mrf.mxu0
        %971 = vmatprep.mubr.bf16.mxu0 0
        %972 = vmatmul.mubr.bf16.gmra.mxu0 %v798
        %v973 = vpop.f32.mrf.mxu0
        %v974 = vadd.f32 %v753, %v973
        %v975 = vpop.f32.mrf.mxu0
        %v976 = vpop.f32.mrf.mxu0
        %v977 = vadd.f32 %v756, %v976
        %v978 = vpop.f32.mrf.mxu0
        %979 = vdwg.mxu0
        %s980 = scalar_lea.vmem %s1, 16
        %v981 = vld [vmem:[%s980] sm:$0xf]
        %v982 = vld [vmem:[%s980 + $0x4] sm:$0x1]
        %vm983 = vcmask 1046528
        %v984 = vrot.slane %v347, 1
        %v985 = vrot.slane %v348, 1
        %v986 = vsel %vm983, %v984, %v985
        %v987 = vrot.slane %v349, 1
        %v988 = vsel %vm983, %v985, %v987
        %v989 = vrot.slane %v350, 1
        %v990 = vsel %vm983, %v987, %v989
        %v991 = vrot.slane %v351, 1
        %v992 = vsel %vm983, %v989, %v991
        %v993 = vrot.slane %v352, 1
        %v994 = vsel %vm983, %v991, %v993
        %v995 = vrot.slane %v353, 1
        %v996 = vsel %vm983, %v993, %v995
        %v997 = vrot.slane %v354, 1
        %v998 = vsel %vm983, %v995, %v997
        %v999 = vrot.slane %v355, 1
        %v1000 = vsel %vm983, %v997, %v999
        %v1001 = vrot.slane %v356, 1
        %v1002 = vsel %vm983, %v999, %v1001
        %v1003 = vrot.slane %v357, 1
        %v1004 = vsel %vm983, %v1001, %v1003
        %v1005 = vrot.slane %v358, 1
        %v1006 = vsel %vm983, %v1003, %v1005
        %v1007 = vrot.slane %v359, 1
        %v1008 = vsel %vm983, %v1005, %v1007
        %v1009 = vrot.slane %v360, 1
        %v1010 = vsel %vm983, %v1007, %v1009
        %v1011 = vrot.slane %v361, 1
        %v1012 = vsel %vm983, %v1009, %v1011
        %v1013 = vrot.slane %v362, 1
        %v1014 = vsel %vm983, %v1011, %v1013
        %v1015 = vrot.slane %v363, 1
        %v1016 = vsel %vm983, %v1013, %v1015
        %v1017 = vrot.slane %v364, 1
        %v1018 = vsel %vm983, %v1015, %v1017
        %v1019 = vrot.slane %v365, 1
        %v1020 = vsel %vm983, %v1017, %v1019
        %v1023 = vunpack.c.l.b16 %v981
        %v1024 = vunpack.c.l.b16 %v982
        %v1025 = vpack.c.b16 %v1024, %v1023
        %v1027 = vsel %vm520, %v986, 0
        %v1030 = vsel %vm520, %v988, 0
        %v1033 = vsel %vm520, %v990, 0
        %v1036 = vsel %vm520, %v992, 0
        %v1039 = vsel %vm520, %v994, 0
        %v1042 = vsel %vm520, %v996, 0
        %v1045 = vsel %vm520, %v998, 0
        %v1048 = vsel %vm520, %v1000, 0
        %v1051 = vsel %vm520, %v1002, 0
        %v1054 = vsel %vm520, %v1004, 0
        %v1057 = vsel %vm520, %v1006, 0
        %v1060 = vsel %vm520, %v1008, 0
        %v1063 = vsel %vm520, %v1010, 0
        %v1066 = vsel %vm520, %v1012, 0
        %v1069 = vsel %vm520, %v1014, 0
        %v1072 = vsel %vm520, %v1016, 0
        %v1075 = vsel %vm520, %v1018, 0
        %v1078 = vsel %vm520, %v1020, 0
        %v1081 = vand.u32 %v1025, %v578
        %1083 = vmatprep.subr.bf16.mxu0 0
        %1084 = vmatpush1.bf16.msra.mxu0 0
        %1085 = vmatprep.subr.bf16.mxu0 0
        %1086 = vmatpush1.bf16.msra.mxu0 0
        %1087 = vmatprep.subr.bf16.mxu0 0
        %1088 = vmatpush1.bf16.msra.mxu0 0
        %1089 = vmatprep.subr.bf16.mxu0 0
        %1090 = vmatpush1.bf16.msra.mxu0 0
        %1091 = vmatprep.subr.bf16.mxu0 0
        %1092 = vmatpush1.bf16.msra.mxu0 0
        %1093 = vmatprep.subr.bf16.mxu0 0
        %1094 = vmatpush1.bf16.msra.mxu0 0
        %1095 = vmatprep.subr.bf16.mxu0 0
        %1096 = vmatpush1.bf16.msra.mxu0 0
        %1097 = vmatprep.subr.bf16.mxu0 0
        %1098 = vmatpush1.bf16.msra.mxu0 %v1081
        %1099 = vmatprep.subr.bf16.mxu0 0
        %1100 = vmatpush2.bf16.msra.mxu0 0
        %1101 = vmatprep.subr.bf16.mxu0 0
        %1102 = vmatpush2.bf16.msra.mxu0 0
        %1103 = vmatprep.subr.bf16.mxu0 0
        %1104 = vmatpush2.bf16.msra.mxu0 0
        %1105 = vmatprep.subr.bf16.mxu0 0
        %1106 = vmatpush2.bf16.msra.mxu0 0
        %1107 = vmatprep.subr.bf16.mxu0 0
        %1108 = vmatpush2.bf16.msra.mxu0 0
        %1109 = vmatprep.subr.bf16.mxu0 0
        %1110 = vmatpush2.bf16.msra.mxu0 0
        %1111 = vmatprep.subr.bf16.mxu0 0
        %1112 = vmatpush2.bf16.msra.mxu0 0
        %1113 = vmatprep.subr.bf16.mxu0 0
        %1114 = vmatpush2.bf16.msra.mxu0 0
        %1115 = vmatprep.mubr.bf16.mxu0 0
        %1116 = vmatmul.mubr.bf16.gmra.mxu0 %v1027
        %v1117 = vpop.f32.mrf.mxu0
        %v1118 = vadd.f32 0.0, %v1117
        %v1119 = vpop.f32.mrf.mxu0
        %v1120 = vpop.f32.mrf.mxu0
        %v1121 = vadd.f32 0.0, %v1120
        %v1122 = vpop.f32.mrf.mxu0
        %1123 = vmatprep.mubr.bf16.mxu0 0
        %1124 = vmatmul.mubr.bf16.gmra.mxu0 %v1030
        %v1125 = vpop.f32.mrf.mxu0
        %v1126 = vadd.f32 0.0, %v1125
        %v1127 = vpop.f32.mrf.mxu0
        %v1128 = vpop.f32.mrf.mxu0
        %v1129 = vadd.f32 0.0, %v1128
        %v1130 = vpop.f32.mrf.mxu0
        %1131 = vmatprep.mubr.bf16.mxu0 0
        %1132 = vmatmul.mubr.bf16.gmra.mxu0 %v1033
        %v1133 = vpop.f32.mrf.mxu0
        %v1134 = vadd.f32 0.0, %v1133
        %v1135 = vpop.f32.mrf.mxu0
        %v1136 = vpop.f32.mrf.mxu0
        %v1137 = vadd.f32 0.0, %v1136
        %v1138 = vpop.f32.mrf.mxu0
        %1139 = vmatprep.mubr.bf16.mxu0 0
        %1140 = vmatmul.mubr.bf16.gmra.mxu0 %v1036
        %v1141 = vpop.f32.mrf.mxu0
        %v1142 = vadd.f32 0.0, %v1141
        %v1143 = vpop.f32.mrf.mxu0
        %v1144 = vpop.f32.mrf.mxu0
        %v1145 = vadd.f32 0.0, %v1144
        %v1146 = vpop.f32.mrf.mxu0
        %1147 = vmatprep.mubr.bf16.mxu0 0
        %1148 = vmatmul.mubr.bf16.gmra.mxu0 %v1039
        %v1149 = vpop.f32.mrf.mxu0
        %v1150 = vadd.f32 0.0, %v1149
        %v1151 = vpop.f32.mrf.mxu0
        %v1152 = vpop.f32.mrf.mxu0
        %v1153 = vadd.f32 0.0, %v1152
        %v1154 = vpop.f32.mrf.mxu0
        %1155 = vmatprep.mubr.bf16.mxu0 0
        %1156 = vmatmul.mubr.bf16.gmra.mxu0 %v1042
        %v1157 = vpop.f32.mrf.mxu0
        %v1158 = vadd.f32 0.0, %v1157
        %v1159 = vpop.f32.mrf.mxu0
        %v1160 = vpop.f32.mrf.mxu0
        %v1161 = vadd.f32 0.0, %v1160
        %v1162 = vpop.f32.mrf.mxu0
        %1163 = vmatprep.mubr.bf16.mxu0 0
        %1164 = vmatmul.mubr.bf16.gmra.mxu0 %v1045
        %v1165 = vpop.f32.mrf.mxu0
        %v1166 = vadd.f32 0.0, %v1165
        %v1167 = vpop.f32.mrf.mxu0
        %v1168 = vpop.f32.mrf.mxu0
        %v1169 = vadd.f32 0.0, %v1168
        %v1170 = vpop.f32.mrf.mxu0
        %1171 = vmatprep.mubr.bf16.mxu0 0
        %1172 = vmatmul.mubr.bf16.gmra.mxu0 %v1048
        %v1173 = vpop.f32.mrf.mxu0
        %v1174 = vadd.f32 0.0, %v1173
        %v1175 = vpop.f32.mrf.mxu0
        %v1176 = vpop.f32.mrf.mxu0
        %v1177 = vadd.f32 0.0, %v1176
        %v1178 = vpop.f32.mrf.mxu0
        %1179 = vmatprep.mubr.bf16.mxu0 0
        %1180 = vmatmul.mubr.bf16.gmra.mxu0 %v1051
        %v1181 = vpop.f32.mrf.mxu0
        %v1182 = vadd.f32 0.0, %v1181
        %v1183 = vpop.f32.mrf.mxu0
        %v1184 = vpop.f32.mrf.mxu0
        %v1185 = vadd.f32 0.0, %v1184
        %v1186 = vpop.f32.mrf.mxu0
        %1187 = vmatprep.mubr.bf16.mxu0 0
        %1188 = vmatmul.mubr.bf16.gmra.mxu0 %v1054
        %v1189 = vpop.f32.mrf.mxu0
        %v1190 = vadd.f32 0.0, %v1189
        %v1191 = vpop.f32.mrf.mxu0
        %v1192 = vpop.f32.mrf.mxu0
        %v1193 = vadd.f32 0.0, %v1192
        %v1194 = vpop.f32.mrf.mxu0
        %1195 = vmatprep.mubr.bf16.mxu0 0
        %1196 = vmatmul.mubr.bf16.gmra.mxu0 %v1057
        %v1197 = vpop.f32.mrf.mxu0
        %v1198 = vadd.f32 0.0, %v1197
        %v1199 = vpop.f32.mrf.mxu0
        %v1200 = vpop.f32.mrf.mxu0
        %v1201 = vadd.f32 0.0, %v1200
        %v1202 = vpop.f32.mrf.mxu0
        %1203 = vmatprep.mubr.bf16.mxu0 0
        %1204 = vmatmul.mubr.bf16.gmra.mxu0 %v1060
        %v1205 = vpop.f32.mrf.mxu0
        %v1206 = vadd.f32 0.0, %v1205
        %v1207 = vpop.f32.mrf.mxu0
        %v1208 = vpop.f32.mrf.mxu0
        %v1209 = vadd.f32 0.0, %v1208
        %v1210 = vpop.f32.mrf.mxu0
        %1211 = vmatprep.mubr.bf16.mxu0 0
        %1212 = vmatmul.mubr.bf16.gmra.mxu0 %v1063
        %v1213 = vpop.f32.mrf.mxu0
        %v1214 = vadd.f32 0.0, %v1213
        %v1215 = vpop.f32.mrf.mxu0
        %v1216 = vpop.f32.mrf.mxu0
        %v1217 = vadd.f32 0.0, %v1216
        %v1218 = vpop.f32.mrf.mxu0
        %1219 = vmatprep.mubr.bf16.mxu0 0
        %1220 = vmatmul.mubr.bf16.gmra.mxu0 %v1066
        %v1221 = vpop.f32.mrf.mxu0
        %v1222 = vadd.f32 0.0, %v1221
        %v1223 = vpop.f32.mrf.mxu0
        %v1224 = vpop.f32.mrf.mxu0
        %v1225 = vadd.f32 0.0, %v1224
        %v1226 = vpop.f32.mrf.mxu0
        %1227 = vmatprep.mubr.bf16.mxu0 0
        %1228 = vmatmul.mubr.bf16.gmra.mxu0 %v1069
        %v1229 = vpop.f32.mrf.mxu0
        %v1230 = vadd.f32 0.0, %v1229
        %v1231 = vpop.f32.mrf.mxu0
        %v1232 = vpop.f32.mrf.mxu0
        %v1233 = vadd.f32 0.0, %v1232
        %v1234 = vpop.f32.mrf.mxu0
        %1235 = vmatprep.mubr.bf16.mxu0 0
        %1236 = vmatmul.mubr.bf16.gmra.mxu0 %v1072
        %v1237 = vpop.f32.mrf.mxu0
        %v1238 = vadd.f32 0.0, %v1237
        %v1239 = vpop.f32.mrf.mxu0
        %v1240 = vpop.f32.mrf.mxu0
        %v1241 = vadd.f32 0.0, %v1240
        %v1242 = vpop.f32.mrf.mxu0
        %1243 = vmatprep.mubr.bf16.mxu0 0
        %1244 = vmatmul.mubr.bf16.gmra.mxu0 %v1075
        %v1245 = vpop.f32.mrf.mxu0
        %v1246 = vadd.f32 0.0, %v1245
        %v1247 = vpop.f32.mrf.mxu0
        %v1248 = vpop.f32.mrf.mxu0
        %v1249 = vadd.f32 0.0, %v1248
        %v1250 = vpop.f32.mrf.mxu0
        %1251 = vmatprep.mubr.bf16.mxu0 0
        %1252 = vmatmul.mubr.bf16.gmra.mxu0 %v1078
        %v1253 = vpop.f32.mrf.mxu0
        %v1254 = vadd.f32 0.0, %v1253
        %v1255 = vpop.f32.mrf.mxu0
        %v1256 = vpop.f32.mrf.mxu0
        %v1257 = vadd.f32 0.0, %v1256
        %v1258 = vpop.f32.mrf.mxu0
        %1259 = vdwg.mxu0
        %v1260 = vadd.f32 %v838, %v1118
        %v1261 = vadd.f32 %v841, %v1121
        %v1262 = vadd.f32 %v846, %v1126
        %v1263 = vadd.f32 %v849, %v1129
        %v1264 = vadd.f32 %v854, %v1134
        %v1265 = vadd.f32 %v857, %v1137
        %v1266 = vadd.f32 %v862, %v1142
        %v1267 = vadd.f32 %v865, %v1145
        %v1268 = vadd.f32 %v870, %v1150
        %v1269 = vadd.f32 %v873, %v1153
        %v1270 = vadd.f32 %v878, %v1158
        %v1271 = vadd.f32 %v881, %v1161
        %v1272 = vadd.f32 %v886, %v1166
        %v1273 = vadd.f32 %v889, %v1169
        %v1274 = vadd.f32 %v894, %v1174
        %v1275 = vadd.f32 %v897, %v1177
        %v1276 = vadd.f32 %v902, %v1182
        %v1277 = vadd.f32 %v905, %v1185
        %v1278 = vadd.f32 %v910, %v1190
        %v1279 = vadd.f32 %v913, %v1193
        %v1280 = vadd.f32 %v918, %v1198
        %v1281 = vadd.f32 %v921, %v1201
        %v1282 = vadd.f32 %v926, %v1206
        %v1283 = vadd.f32 %v929, %v1209
        %v1284 = vadd.f32 %v934, %v1214
        %v1285 = vadd.f32 %v937, %v1217
        %v1286 = vadd.f32 %v942, %v1222
        %v1287 = vadd.f32 %v945, %v1225
        %v1288 = vadd.f32 %v950, %v1230
        %v1289 = vadd.f32 %v953, %v1233
        %v1290 = vadd.f32 %v958, %v1238
        %v1291 = vadd.f32 %v961, %v1241
        %v1292 = vadd.f32 %v966, %v1246
        %v1293 = vadd.f32 %v969, %v1249
        %v1294 = vadd.f32 %v974, %v1254
        %v1295 = vadd.f32 %v977, %v1257
        %s1296 = scalar_lea.vmem %s1, 24
        %v1297 = vld [vmem:[%s1296] sm:$0xf]
        %v1298 = vld [vmem:[%s1296 + $0x4] sm:$0x1]
        %v1301 = vunpack.c.l.b16 %v264
        %v1302 = vunpack.c.l.b16 %v265
        %v1303 = vpack.c.b16 %v1301, %v346
        %v1304 = vpack.c.b16 %v1302, %v1302
        %v1305 = vrot.slane %v1303, 1
        %v1306 = vsel %vm983, %v1017, %v1305
        %v1307 = vrot.slane %v1304, 1
        %v1308 = vsel %vm983, %v1305, %v1307
        %v1311 = vunpack.c.l.b16 %v1297
        %v1312 = vunpack.c.l.b16 %v1298
        %v1313 = vpack.c.b16 %v1312, %v1311
        %v1315 = vsel %vm520, %v1306, 0
        %v1318 = vsel %vm520, %v1308, 0
        %v1321 = vand.u32 %v1313, %v578
        %1323 = vmatprep.subr.bf16.mxu0 0
        %1324 = vmatpush1.bf16.msra.mxu0 0
        %1325 = vmatprep.subr.bf16.mxu0 0
        %1326 = vmatpush1.bf16.msra.mxu0 0
        %1327 = vmatprep.subr.bf16.mxu0 0
        %1328 = vmatpush1.bf16.msra.mxu0 0
        %1329 = vmatprep.subr.bf16.mxu0 0
        %1330 = vmatpush1.bf16.msra.mxu0 0
        %1331 = vmatprep.subr.bf16.mxu0 0
        %1332 = vmatpush1.bf16.msra.mxu0 0
        %1333 = vmatprep.subr.bf16.mxu0 0
        %1334 = vmatpush1.bf16.msra.mxu0 0
        %1335 = vmatprep.subr.bf16.mxu0 0
        %1336 = vmatpush1.bf16.msra.mxu0 0
        %1337 = vmatprep.subr.bf16.mxu0 0
        %1338 = vmatpush1.bf16.msra.mxu0 %v1321
        %1339 = vmatprep.subr.bf16.mxu0 0
        %1340 = vmatpush2.bf16.msra.mxu0 0
        %1341 = vmatprep.subr.bf16.mxu0 0
        %1342 = vmatpush2.bf16.msra.mxu0 0
        %1343 = vmatprep.subr.bf16.mxu0 0
        %1344 = vmatpush2.bf16.msra.mxu0 0
        %1345 = vmatprep.subr.bf16.mxu0 0
        %1346 = vmatpush2.bf16.msra.mxu0 0
        %1347 = vmatprep.subr.bf16.mxu0 0
        %1348 = vmatpush2.bf16.msra.mxu0 0
        %1349 = vmatprep.subr.bf16.mxu0 0
        %1350 = vmatpush2.bf16.msra.mxu0 0
        %1351 = vmatprep.subr.bf16.mxu0 0
        %1352 = vmatpush2.bf16.msra.mxu0 0
        %1353 = vmatprep.subr.bf16.mxu0 0
        %1354 = vmatpush2.bf16.msra.mxu0 0
        %1355 = vmatprep.mubr.bf16.mxu0 0
        %1356 = vmatmul.mubr.bf16.gmra.mxu0 %v1030
        %v1357 = vpop.f32.mrf.mxu0
        %v1358 = vadd.f32 0.0, %v1357
        %v1359 = vpop.f32.mrf.mxu0
        %v1360 = vpop.f32.mrf.mxu0
        %v1361 = vadd.f32 0.0, %v1360
        %v1362 = vpop.f32.mrf.mxu0
        %1363 = vmatprep.mubr.bf16.mxu0 0
        %1364 = vmatmul.mubr.bf16.gmra.mxu0 %v1033
        %v1365 = vpop.f32.mrf.mxu0
        %v1366 = vadd.f32 0.0, %v1365
        %v1367 = vpop.f32.mrf.mxu0
        %v1368 = vpop.f32.mrf.mxu0
        %v1369 = vadd.f32 0.0, %v1368
        %v1370 = vpop.f32.mrf.mxu0
        %1371 = vmatprep.mubr.bf16.mxu0 0
        %1372 = vmatmul.mubr.bf16.gmra.mxu0 %v1036
        %v1373 = vpop.f32.mrf.mxu0
        %v1374 = vadd.f32 0.0, %v1373
        %v1375 = vpop.f32.mrf.mxu0
        %v1376 = vpop.f32.mrf.mxu0
        %v1377 = vadd.f32 0.0, %v1376
        %v1378 = vpop.f32.mrf.mxu0
        %1379 = vmatprep.mubr.bf16.mxu0 0
        %1380 = vmatmul.mubr.bf16.gmra.mxu0 %v1039
        %v1381 = vpop.f32.mrf.mxu0
        %v1382 = vadd.f32 0.0, %v1381
        %v1383 = vpop.f32.mrf.mxu0
        %v1384 = vpop.f32.mrf.mxu0
        %v1385 = vadd.f32 0.0, %v1384
        %v1386 = vpop.f32.mrf.mxu0
        %1387 = vmatprep.mubr.bf16.mxu0 0
        %1388 = vmatmul.mubr.bf16.gmra.mxu0 %v1042
        %v1389 = vpop.f32.mrf.mxu0
        %v1390 = vadd.f32 0.0, %v1389
        %v1391 = vpop.f32.mrf.mxu0
        %v1392 = vpop.f32.mrf.mxu0
        %v1393 = vadd.f32 0.0, %v1392
        %v1394 = vpop.f32.mrf.mxu0
        %1395 = vmatprep.mubr.bf16.mxu0 0
        %1396 = vmatmul.mubr.bf16.gmra.mxu0 %v1045
        %v1397 = vpop.f32.mrf.mxu0
        %v1398 = vadd.f32 0.0, %v1397
        %v1399 = vpop.f32.mrf.mxu0
        %v1400 = vpop.f32.mrf.mxu0
        %v1401 = vadd.f32 0.0, %v1400
        %v1402 = vpop.f32.mrf.mxu0
        %1403 = vmatprep.mubr.bf16.mxu0 0
        %1404 = vmatmul.mubr.bf16.gmra.mxu0 %v1048
        %v1405 = vpop.f32.mrf.mxu0
        %v1406 = vadd.f32 0.0, %v1405
        %v1407 = vpop.f32.mrf.mxu0
        %v1408 = vpop.f32.mrf.mxu0
        %v1409 = vadd.f32 0.0, %v1408
        %v1410 = vpop.f32.mrf.mxu0
        %1411 = vmatprep.mubr.bf16.mxu0 0
        %1412 = vmatmul.mubr.bf16.gmra.mxu0 %v1051
        %v1413 = vpop.f32.mrf.mxu0
        %v1414 = vadd.f32 0.0, %v1413
        %v1415 = vpop.f32.mrf.mxu0
        %v1416 = vpop.f32.mrf.mxu0
        %v1417 = vadd.f32 0.0, %v1416
        %v1418 = vpop.f32.mrf.mxu0
        %1419 = vmatprep.mubr.bf16.mxu0 0
        %1420 = vmatmul.mubr.bf16.gmra.mxu0 %v1054
        %v1421 = vpop.f32.mrf.mxu0
        %v1422 = vadd.f32 0.0, %v1421
        %v1423 = vpop.f32.mrf.mxu0
        %v1424 = vpop.f32.mrf.mxu0
        %v1425 = vadd.f32 0.0, %v1424
        %v1426 = vpop.f32.mrf.mxu0
        %1427 = vmatprep.mubr.bf16.mxu0 0
        %1428 = vmatmul.mubr.bf16.gmra.mxu0 %v1057
        %v1429 = vpop.f32.mrf.mxu0
        %v1430 = vadd.f32 0.0, %v1429
        %v1431 = vpop.f32.mrf.mxu0
        %v1432 = vpop.f32.mrf.mxu0
        %v1433 = vadd.f32 0.0, %v1432
        %v1434 = vpop.f32.mrf.mxu0
        %1435 = vmatprep.mubr.bf16.mxu0 0
        %1436 = vmatmul.mubr.bf16.gmra.mxu0 %v1060
        %v1437 = vpop.f32.mrf.mxu0
        %v1438 = vadd.f32 0.0, %v1437
        %v1439 = vpop.f32.mrf.mxu0
        %v1440 = vpop.f32.mrf.mxu0
        %v1441 = vadd.f32 0.0, %v1440
        %v1442 = vpop.f32.mrf.mxu0
        %1443 = vmatprep.mubr.bf16.mxu0 0
        %1444 = vmatmul.mubr.bf16.gmra.mxu0 %v1063
        %v1445 = vpop.f32.mrf.mxu0
        %v1446 = vadd.f32 0.0, %v1445
        %v1447 = vpop.f32.mrf.mxu0
        %v1448 = vpop.f32.mrf.mxu0
        %v1449 = vadd.f32 0.0, %v1448
        %v1450 = vpop.f32.mrf.mxu0
        %1451 = vmatprep.mubr.bf16.mxu0 0
        %1452 = vmatmul.mubr.bf16.gmra.mxu0 %v1066
        %v1453 = vpop.f32.mrf.mxu0
        %v1454 = vadd.f32 0.0, %v1453
        %v1455 = vpop.f32.mrf.mxu0
        %v1456 = vpop.f32.mrf.mxu0
        %v1457 = vadd.f32 0.0, %v1456
        %v1458 = vpop.f32.mrf.mxu0
        %1459 = vmatprep.mubr.bf16.mxu0 0
        %1460 = vmatmul.mubr.bf16.gmra.mxu0 %v1069
        %v1461 = vpop.f32.mrf.mxu0
        %v1462 = vadd.f32 0.0, %v1461
        %v1463 = vpop.f32.mrf.mxu0
        %v1464 = vpop.f32.mrf.mxu0
        %v1465 = vadd.f32 0.0, %v1464
        %v1466 = vpop.f32.mrf.mxu0
        %1467 = vmatprep.mubr.bf16.mxu0 0
        %1468 = vmatmul.mubr.bf16.gmra.mxu0 %v1072
        %v1469 = vpop.f32.mrf.mxu0
        %v1470 = vadd.f32 0.0, %v1469
        %v1471 = vpop.f32.mrf.mxu0
        %v1472 = vpop.f32.mrf.mxu0
        %v1473 = vadd.f32 0.0, %v1472
        %v1474 = vpop.f32.mrf.mxu0
        %1475 = vmatprep.mubr.bf16.mxu0 0
        %1476 = vmatmul.mubr.bf16.gmra.mxu0 %v1075
        %v1477 = vpop.f32.mrf.mxu0
        %v1478 = vadd.f32 0.0, %v1477
        %v1479 = vpop.f32.mrf.mxu0
        %v1480 = vpop.f32.mrf.mxu0
        %v1481 = vadd.f32 0.0, %v1480
        %v1482 = vpop.f32.mrf.mxu0
        %1483 = vmatprep.mubr.bf16.mxu0 0
        %1484 = vmatmul.mubr.bf16.gmra.mxu0 %v1315
        %v1485 = vpop.f32.mrf.mxu0
        %v1486 = vadd.f32 0.0, %v1485
        %v1487 = vpop.f32.mrf.mxu0
        %v1488 = vpop.f32.mrf.mxu0
        %v1489 = vadd.f32 0.0, %v1488
        %v1490 = vpop.f32.mrf.mxu0
        %1491 = vmatprep.mubr.bf16.mxu0 0
        %1492 = vmatmul.mubr.bf16.gmra.mxu0 %v1318
        %v1493 = vpop.f32.mrf.mxu0
        %v1494 = vadd.f32 0.0, %v1493
        %v1495 = vpop.f32.mrf.mxu0
        %v1496 = vpop.f32.mrf.mxu0
        %v1497 = vadd.f32 0.0, %v1496
        %v1498 = vpop.f32.mrf.mxu0
        %1499 = vdwg.mxu0
        %v1500 = vadd.f32 %v1260, %v1358
        %v1501 = vadd.f32 %v1261, %v1361
        %v1502 = vadd.f32 %v1262, %v1366
        %v1503 = vadd.f32 %v1263, %v1369
        %v1504 = vadd.f32 %v1264, %v1374
        %v1505 = vadd.f32 %v1265, %v1377
        %v1506 = vadd.f32 %v1266, %v1382
        %v1507 = vadd.f32 %v1267, %v1385
        %v1508 = vadd.f32 %v1268, %v1390
        %v1509 = vadd.f32 %v1269, %v1393
        %v1510 = vadd.f32 %v1270, %v1398
        %v1511 = vadd.f32 %v1271, %v1401
        %v1512 = vadd.f32 %v1272, %v1406
        %v1513 = vadd.f32 %v1273, %v1409
        %v1514 = vadd.f32 %v1274, %v1414
        %v1515 = vadd.f32 %v1275, %v1417
        %v1516 = vadd.f32 %v1276, %v1422
        %v1517 = vadd.f32 %v1277, %v1425
        %v1518 = vadd.f32 %v1278, %v1430
        %v1519 = vadd.f32 %v1279, %v1433
        %v1520 = vadd.f32 %v1280, %v1438
        %v1521 = vadd.f32 %v1281, %v1441
        %v1522 = vadd.f32 %v1282, %v1446
        %v1523 = vadd.f32 %v1283, %v1449
        %v1524 = vadd.f32 %v1284, %v1454
        %v1525 = vadd.f32 %v1285, %v1457
        %v1526 = vadd.f32 %v1286, %v1462
        %v1527 = vadd.f32 %v1287, %v1465
        %v1528 = vadd.f32 %v1288, %v1470
        %v1529 = vadd.f32 %v1289, %v1473
        %v1530 = vadd.f32 %v1290, %v1478
        %v1531 = vadd.f32 %v1291, %v1481
        %v1532 = vadd.f32 %v1292, %v1486
        %v1533 = vadd.f32 %v1293, %v1489
        %v1534 = vadd.f32 %v1294, %v1494
        %v1535 = vadd.f32 %v1295, %v1497
        %s1536 = scalar_lea.vmem %s1, 32
        %v1537 = vld [vmem:[%s1536] sm:$0xf]
        %v1538 = vld [vmem:[%s1536 + $0x4] sm:$0x1]
        %vm1539 = vsmask.f32 6400
        %v1540 = vrot.slane %v379, 1
        %v1541 = vrot.slane %v375, 2
        %v1542 = vor.u32 %v1540, %v1541
        %v1543 = vrot.slane %v387, 1
        %v1544 = vrot.slane %v383, 2
        %v1545 = vor.u32 %v1543, %v1544
        %v1546 = vsel %vm1539, %v1542, %v1545
        %v1547 = vrot.slane %v395, 1
        %v1548 = vrot.slane %v391, 2
        %v1549 = vor.u32 %v1547, %v1548
        %v1550 = vsel %vm1539, %v1545, %v1549
        %v1551 = vrot.slane %v403, 1
        %v1552 = vrot.slane %v399, 2
        %v1553 = vor.u32 %v1551, %v1552
        %v1554 = vsel %vm1539, %v1549, %v1553
        %v1555 = vrot.slane %v411, 1
        %v1556 = vrot.slane %v407, 2
        %v1557 = vor.u32 %v1555, %v1556
        %v1558 = vsel %vm1539, %v1553, %v1557
        %v1559 = vrot.slane %v419, 1
        %v1560 = vrot.slane %v415, 2
        %v1561 = vor.u32 %v1559, %v1560
        %v1562 = vsel %vm1539, %v1557, %v1561
        %v1563 = vrot.slane %v427, 1
        %v1564 = vrot.slane %v423, 2
        %v1565 = vor.u32 %v1563, %v1564
        %v1566 = vsel %vm1539, %v1561, %v1565
        %v1567 = vrot.slane %v435, 1
        %v1568 = vrot.slane %v431, 2
        %v1569 = vor.u32 %v1567, %v1568
        %v1570 = vsel %vm1539, %v1565, %v1569
        %v1571 = vrot.slane %v443, 1
        %v1572 = vrot.slane %v439, 2
        %v1573 = vor.u32 %v1571, %v1572
        %v1574 = vsel %vm1539, %v1569, %v1573
        %v1575 = vrot.slane %v451, 1
        %v1576 = vrot.slane %v447, 2
        %v1577 = vor.u32 %v1575, %v1576
        %v1578 = vsel %vm1539, %v1573, %v1577
        %v1579 = vrot.slane %v459, 1
        %v1580 = vrot.slane %v455, 2
        %v1581 = vor.u32 %v1579, %v1580
        %v1582 = vsel %vm1539, %v1577, %v1581
        %v1583 = vrot.slane %v467, 1
        %v1584 = vrot.slane %v463, 2
        %v1585 = vor.u32 %v1583, %v1584
        %v1586 = vsel %vm1539, %v1581, %v1585
        %v1587 = vrot.slane %v475, 1
        %v1588 = vrot.slane %v471, 2
        %v1589 = vor.u32 %v1587, %v1588
        %v1590 = vsel %vm1539, %v1585, %v1589
        %v1591 = vrot.slane %v483, 1
        %v1592 = vrot.slane %v479, 2
        %v1593 = vor.u32 %v1591, %v1592
        %v1594 = vsel %vm1539, %v1589, %v1593
        %v1595 = vrot.slane %v491, 1
        %v1596 = vrot.slane %v487, 2
        %v1597 = vor.u32 %v1595, %v1596
        %v1598 = vsel %vm1539, %v1593, %v1597
        %v1599 = vrot.slane %v499, 1
        %v1600 = vrot.slane %v495, 2
        %v1601 = vor.u32 %v1599, %v1600
        %v1602 = vsel %vm1539, %v1597, %v1601
        %v1603 = vrot.slane %v507, 1
        %v1604 = vrot.slane %v503, 2
        %v1605 = vor.u32 %v1603, %v1604
        %v1606 = vsel %vm1539, %v1601, %v1605
        %v1608 = vshrl.u32 %v1303, 16
        %v1610 = vrot.slane %v1608, 1
        %v1611 = vshll.u32 %v1303, 16
        %v1613 = vrot.slane %v1611, 2
        %v1614 = vor.u32 %v1610, %v1613
        %v1615 = vsel %vm1539, %v1605, %v1614
        %v1617 = vshrl.u32 %v1304, 16
        %v1619 = vrot.slane %v1617, 1
        %v1620 = vshll.u32 %v1304, 16
        %v1622 = vrot.slane %v1620, 2
        %v1623 = vor.u32 %v1619, %v1622
        %v1624 = vsel %vm1539, %v1614, %v1623
        %v1627 = vunpack.c.l.b16 %v1537
        %v1628 = vunpack.c.l.b16 %v1538
        %v1629 = vpack.c.b16 %v1628, %v1627
        %v1631 = vsel %vm520, %v1546, 0
        %v1634 = vsel %vm520, %v1550, 0
        %v1637 = vsel %vm520, %v1554, 0
        %v1640 = vsel %vm520, %v1558, 0
        %v1643 = vsel %vm520, %v1562, 0
        %v1646 = vsel %vm520, %v1566, 0
        %v1649 = vsel %vm520, %v1570, 0
        %v1652 = vsel %vm520, %v1574, 0
        %v1655 = vsel %vm520, %v1578, 0
        %v1658 = vsel %vm520, %v1582, 0
        %v1661 = vsel %vm520, %v1586, 0
        %v1664 = vsel %vm520, %v1590, 0
        %v1667 = vsel %vm520, %v1594, 0
        %v1670 = vsel %vm520, %v1598, 0
        %v1673 = vsel %vm520, %v1602, 0
        %v1676 = vsel %vm520, %v1606, 0
        %v1679 = vsel %vm520, %v1615, 0
        %v1682 = vsel %vm520, %v1624, 0
        %v1685 = vand.u32 %v1629, %v578
        %1687 = vmatprep.subr.bf16.mxu0 0
        %1688 = vmatpush1.bf16.msra.mxu0 0
        %1689 = vmatprep.subr.bf16.mxu0 0
        %1690 = vmatpush1.bf16.msra.mxu0 0
        %1691 = vmatprep.subr.bf16.mxu0 0
        %1692 = vmatpush1.bf16.msra.mxu0 0
        %1693 = vmatprep.subr.bf16.mxu0 0
        %1694 = vmatpush1.bf16.msra.mxu0 0
        %1695 = vmatprep.subr.bf16.mxu0 0
        %1696 = vmatpush1.bf16.msra.mxu0 0
        %1697 = vmatprep.subr.bf16.mxu0 0
        %1698 = vmatpush1.bf16.msra.mxu0 0
        %1699 = vmatprep.subr.bf16.mxu0 0
        %1700 = vmatpush1.bf16.msra.mxu0 0
        %1701 = vmatprep.subr.bf16.mxu0 0
        %1702 = vmatpush1.bf16.msra.mxu0 %v1685
        %1703 = vmatprep.subr.bf16.mxu0 0
        %1704 = vmatpush2.bf16.msra.mxu0 0
        %1705 = vmatprep.subr.bf16.mxu0 0
        %1706 = vmatpush2.bf16.msra.mxu0 0
        %1707 = vmatprep.subr.bf16.mxu0 0
        %1708 = vmatpush2.bf16.msra.mxu0 0
        %1709 = vmatprep.subr.bf16.mxu0 0
        %1710 = vmatpush2.bf16.msra.mxu0 0
        %1711 = vmatprep.subr.bf16.mxu0 0
        %1712 = vmatpush2.bf16.msra.mxu0 0
        %1713 = vmatprep.subr.bf16.mxu0 0
        %1714 = vmatpush2.bf16.msra.mxu0 0
        %1715 = vmatprep.subr.bf16.mxu0 0
        %1716 = vmatpush2.bf16.msra.mxu0 0
        %1717 = vmatprep.subr.bf16.mxu0 0
        %1718 = vmatpush2.bf16.msra.mxu0 0
        %1719 = vmatprep.mubr.bf16.mxu0 0
        %1720 = vmatmul.mubr.bf16.gmra.mxu0 %v1631
        %v1721 = vpop.f32.mrf.mxu0
        %v1722 = vadd.f32 0.0, %v1721
        %v1723 = vpop.f32.mrf.mxu0
        %v1724 = vpop.f32.mrf.mxu0
        %v1725 = vadd.f32 0.0, %v1724
        %v1726 = vpop.f32.mrf.mxu0
        %1727 = vmatprep.mubr.bf16.mxu0 0
        %1728 = vmatmul.mubr.bf16.gmra.mxu0 %v1634
        %v1729 = vpop.f32.mrf.mxu0
        %v1730 = vadd.f32 0.0, %v1729
        %v1731 = vpop.f32.mrf.mxu0
        %v1732 = vpop.f32.mrf.mxu0
        %v1733 = vadd.f32 0.0, %v1732
        %v1734 = vpop.f32.mrf.mxu0
        %1735 = vmatprep.mubr.bf16.mxu0 0
        %1736 = vmatmul.mubr.bf16.gmra.mxu0 %v1637
        %v1737 = vpop.f32.mrf.mxu0
        %v1738 = vadd.f32 0.0, %v1737
        %v1739 = vpop.f32.mrf.mxu0
        %v1740 = vpop.f32.mrf.mxu0
        %v1741 = vadd.f32 0.0, %v1740
        %v1742 = vpop.f32.mrf.mxu0
        %1743 = vmatprep.mubr.bf16.mxu0 0
        %1744 = vmatmul.mubr.bf16.gmra.mxu0 %v1640
        %v1745 = vpop.f32.mrf.mxu0
        %v1746 = vadd.f32 0.0, %v1745
        %v1747 = vpop.f32.mrf.mxu0
        %v1748 = vpop.f32.mrf.mxu0
        %v1749 = vadd.f32 0.0, %v1748
        %v1750 = vpop.f32.mrf.mxu0
        %1751 = vmatprep.mubr.bf16.mxu0 0
        %1752 = vmatmul.mubr.bf16.gmra.mxu0 %v1643
        %v1753 = vpop.f32.mrf.mxu0
        %v1754 = vadd.f32 0.0, %v1753
        %v1755 = vpop.f32.mrf.mxu0
        %v1756 = vpop.f32.mrf.mxu0
        %v1757 = vadd.f32 0.0, %v1756
        %v1758 = vpop.f32.mrf.mxu0
        %1759 = vmatprep.mubr.bf16.mxu0 0
        %1760 = vmatmul.mubr.bf16.gmra.mxu0 %v1646
        %v1761 = vpop.f32.mrf.mxu0
        %v1762 = vadd.f32 0.0, %v1761
        %v1763 = vpop.f32.mrf.mxu0
        %v1764 = vpop.f32.mrf.mxu0
        %v1765 = vadd.f32 0.0, %v1764
        %v1766 = vpop.f32.mrf.mxu0
        %1767 = vmatprep.mubr.bf16.mxu0 0
        %1768 = vmatmul.mubr.bf16.gmra.mxu0 %v1649
        %v1769 = vpop.f32.mrf.mxu0
        %v1770 = vadd.f32 0.0, %v1769
        %v1771 = vpop.f32.mrf.mxu0
        %v1772 = vpop.f32.mrf.mxu0
        %v1773 = vadd.f32 0.0, %v1772
        %v1774 = vpop.f32.mrf.mxu0
        %1775 = vmatprep.mubr.bf16.mxu0 0
        %1776 = vmatmul.mubr.bf16.gmra.mxu0 %v1652
        %v1777 = vpop.f32.mrf.mxu0
        %v1778 = vadd.f32 0.0, %v1777
        %v1779 = vpop.f32.mrf.mxu0
        %v1780 = vpop.f32.mrf.mxu0
        %v1781 = vadd.f32 0.0, %v1780
        %v1782 = vpop.f32.mrf.mxu0
        %1783 = vmatprep.mubr.bf16.mxu0 0
        %1784 = vmatmul.mubr.bf16.gmra.mxu0 %v1655
        %v1785 = vpop.f32.mrf.mxu0
        %v1786 = vadd.f32 0.0, %v1785
        %v1787 = vpop.f32.mrf.mxu0
        %v1788 = vpop.f32.mrf.mxu0
        %v1789 = vadd.f32 0.0, %v1788
        %v1790 = vpop.f32.mrf.mxu0
        %1791 = vmatprep.mubr.bf16.mxu0 0
        %1792 = vmatmul.mubr.bf16.gmra.mxu0 %v1658
        %v1793 = vpop.f32.mrf.mxu0
        %v1794 = vadd.f32 0.0, %v1793
        %v1795 = vpop.f32.mrf.mxu0
        %v1796 = vpop.f32.mrf.mxu0
        %v1797 = vadd.f32 0.0, %v1796
        %v1798 = vpop.f32.mrf.mxu0
        %1799 = vmatprep.mubr.bf16.mxu0 0
        %1800 = vmatmul.mubr.bf16.gmra.mxu0 %v1661
        %v1801 = vpop.f32.mrf.mxu0
        %v1802 = vadd.f32 0.0, %v1801
        %v1803 = vpop.f32.mrf.mxu0
        %v1804 = vpop.f32.mrf.mxu0
        %v1805 = vadd.f32 0.0, %v1804
        %v1806 = vpop.f32.mrf.mxu0
        %1807 = vmatprep.mubr.bf16.mxu0 0
        %1808 = vmatmul.mubr.bf16.gmra.mxu0 %v1664
        %v1809 = vpop.f32.mrf.mxu0
        %v1810 = vadd.f32 0.0, %v1809
        %v1811 = vpop.f32.mrf.mxu0
        %v1812 = vpop.f32.mrf.mxu0
        %v1813 = vadd.f32 0.0, %v1812
        %v1814 = vpop.f32.mrf.mxu0
        %1815 = vmatprep.mubr.bf16.mxu0 0
        %1816 = vmatmul.mubr.bf16.gmra.mxu0 %v1667
        %v1817 = vpop.f32.mrf.mxu0
        %v1818 = vadd.f32 0.0, %v1817
        %v1819 = vpop.f32.mrf.mxu0
        %v1820 = vpop.f32.mrf.mxu0
        %v1821 = vadd.f32 0.0, %v1820
        %v1822 = vpop.f32.mrf.mxu0
        %1823 = vmatprep.mubr.bf16.mxu0 0
        %1824 = vmatmul.mubr.bf16.gmra.mxu0 %v1670
        %v1825 = vpop.f32.mrf.mxu0
        %v1826 = vadd.f32 0.0, %v1825
        %v1827 = vpop.f32.mrf.mxu0
        %v1828 = vpop.f32.mrf.mxu0
        %v1829 = vadd.f32 0.0, %v1828
        %v1830 = vpop.f32.mrf.mxu0
        %1831 = vmatprep.mubr.bf16.mxu0 0
        %1832 = vmatmul.mubr.bf16.gmra.mxu0 %v1673
        %v1833 = vpop.f32.mrf.mxu0
        %v1834 = vadd.f32 0.0, %v1833
        %v1835 = vpop.f32.mrf.mxu0
        %v1836 = vpop.f32.mrf.mxu0
        %v1837 = vadd.f32 0.0, %v1836
        %v1838 = vpop.f32.mrf.mxu0
        %1839 = vmatprep.mubr.bf16.mxu0 0
        %1840 = vmatmul.mubr.bf16.gmra.mxu0 %v1676
        %v1841 = vpop.f32.mrf.mxu0
        %v1842 = vadd.f32 0.0, %v1841
        %v1843 = vpop.f32.mrf.mxu0
        %v1844 = vpop.f32.mrf.mxu0
        %v1845 = vadd.f32 0.0, %v1844
        %v1846 = vpop.f32.mrf.mxu0
        %1847 = vmatprep.mubr.bf16.mxu0 0
        %1848 = vmatmul.mubr.bf16.gmra.mxu0 %v1679
        %v1849 = vpop.f32.mrf.mxu0
        %v1850 = vadd.f32 0.0, %v1849
        %v1851 = vpop.f32.mrf.mxu0
        %v1852 = vpop.f32.mrf.mxu0
        %v1853 = vadd.f32 0.0, %v1852
        %v1854 = vpop.f32.mrf.mxu0
        %1855 = vmatprep.mubr.bf16.mxu0 0
        %1856 = vmatmul.mubr.bf16.gmra.mxu0 %v1682
        %v1857 = vpop.f32.mrf.mxu0
        %v1858 = vadd.f32 0.0, %v1857
        %v1859 = vpop.f32.mrf.mxu0
        %v1860 = vpop.f32.mrf.mxu0
        %v1861 = vadd.f32 0.0, %v1860
        %v1862 = vpop.f32.mrf.mxu0
        %1863 = vdwg.mxu0
        %v1864 = vadd.f32 %v1500, %v1722
        %v1865 = vadd.f32 %v1501, %v1725
        %v1866 = vadd.f32 %v1502, %v1730
        %v1867 = vadd.f32 %v1503, %v1733
        %v1868 = vadd.f32 %v1504, %v1738
        %v1869 = vadd.f32 %v1505, %v1741
        %v1870 = vadd.f32 %v1506, %v1746
        %v1871 = vadd.f32 %v1507, %v1749
        %v1872 = vadd.f32 %v1508, %v1754
        %v1873 = vadd.f32 %v1509, %v1757
        %v1874 = vadd.f32 %v1510, %v1762
        %v1875 = vadd.f32 %v1511, %v1765
        %v1876 = vadd.f32 %v1512, %v1770
        %v1877 = vadd.f32 %v1513, %v1773
        %v1878 = vadd.f32 %v1514, %v1778
        %v1879 = vadd.f32 %v1515, %v1781
        %v1880 = vadd.f32 %v1516, %v1786
        %v1881 = vadd.f32 %v1517, %v1789
        %v1882 = vadd.f32 %v1518, %v1794
        %v1883 = vadd.f32 %v1519, %v1797
        %v1884 = vadd.f32 %v1520, %v1802
        %v1885 = vadd.f32 %v1521, %v1805
        %v1886 = vadd.f32 %v1522, %v1810
        %v1887 = vadd.f32 %v1523, %v1813
        %v1888 = vadd.f32 %v1524, %v1818
        %v1889 = vadd.f32 %v1525, %v1821
        %v1890 = vadd.f32 %v1526, %v1826
        %v1891 = vadd.f32 %v1527, %v1829
        %v1892 = vadd.f32 %v1528, %v1834
        %v1893 = vadd.f32 %v1529, %v1837
        %v1894 = vadd.f32 %v1530, %v1842
        %v1895 = vadd.f32 %v1531, %v1845
        %v1896 = vadd.f32 %v1532, %v1850
        %v1897 = vadd.f32 %v1533, %v1853
        %v1898 = vadd.f32 %v1534, %v1858
        %v1899 = vadd.f32 %v1535, %v1861
        %s1900 = scalar_lea.vmem %s1, 40
        %v1901 = vld [vmem:[%s1900] sm:$0xf]
        %v1902 = vld [vmem:[%s1900 + $0x4] sm:$0x1]
        %vm1903 = vcmask 1045504
        %v1904 = vrot.slane %v348, 2
        %v1905 = vrot.slane %v349, 2
        %v1906 = vsel %vm1903, %v1904, %v1905
        %v1907 = vrot.slane %v350, 2
        %v1908 = vsel %vm1903, %v1905, %v1907
        %v1909 = vrot.slane %v351, 2
        %v1910 = vsel %vm1903, %v1907, %v1909
        %v1911 = vrot.slane %v352, 2
        %v1912 = vsel %vm1903, %v1909, %v1911
        %v1913 = vrot.slane %v353, 2
        %v1914 = vsel %vm1903, %v1911, %v1913
        %v1915 = vrot.slane %v354, 2
        %v1916 = vsel %vm1903, %v1913, %v1915
        %v1917 = vrot.slane %v355, 2
        %v1918 = vsel %vm1903, %v1915, %v1917
        %v1919 = vrot.slane %v356, 2
        %v1920 = vsel %vm1903, %v1917, %v1919
        %v1921 = vrot.slane %v357, 2
        %v1922 = vsel %vm1903, %v1919, %v1921
        %v1923 = vrot.slane %v358, 2
        %v1924 = vsel %vm1903, %v1921, %v1923
        %v1925 = vrot.slane %v359, 2
        %v1926 = vsel %vm1903, %v1923, %v1925
        %v1927 = vrot.slane %v360, 2
        %v1928 = vsel %vm1903, %v1925, %v1927
        %v1929 = vrot.slane %v361, 2
        %v1930 = vsel %vm1903, %v1927, %v1929
        %v1931 = vrot.slane %v362, 2
        %v1932 = vsel %vm1903, %v1929, %v1931
        %v1933 = vrot.slane %v363, 2
        %v1934 = vsel %vm1903, %v1931, %v1933
        %v1935 = vrot.slane %v364, 2
        %v1936 = vsel %vm1903, %v1933, %v1935
        %v1937 = vrot.slane %v1303, 2
        %v1938 = vsel %vm1903, %v1935, %v1937
        %v1939 = vrot.slane %v1304, 2
        %v1940 = vsel %vm1903, %v1937, %v1939
        %v1943 = vunpack.c.l.b16 %v1901
        %v1944 = vunpack.c.l.b16 %v1902
        %v1945 = vpack.c.b16 %v1944, %v1943
        %v1947 = vsel %vm520, %v1906, 0
        %v1950 = vsel %vm520, %v1908, 0
        %v1953 = vsel %vm520, %v1910, 0
        %v1956 = vsel %vm520, %v1912, 0
        %v1959 = vsel %vm520, %v1914, 0
        %v1962 = vsel %vm520, %v1916, 0
        %v1965 = vsel %vm520, %v1918, 0
        %v1968 = vsel %vm520, %v1920, 0
        %v1971 = vsel %vm520, %v1922, 0
        %v1974 = vsel %vm520, %v1924, 0
        %v1977 = vsel %vm520, %v1926, 0
        %v1980 = vsel %vm520, %v1928, 0
        %v1983 = vsel %vm520, %v1930, 0
        %v1986 = vsel %vm520, %v1932, 0
        %v1989 = vsel %vm520, %v1934, 0
        %v1992 = vsel %vm520, %v1936, 0
        %v1995 = vsel %vm520, %v1938, 0
        %v1998 = vsel %vm520, %v1940, 0
        %v2001 = vand.u32 %v1945, %v578
        %2003 = vmatprep.subr.bf16.mxu0 0
        %2004 = vmatpush1.bf16.msra.mxu0 0
        %2005 = vmatprep.subr.bf16.mxu0 0
        %2006 = vmatpush1.bf16.msra.mxu0 0
        %2007 = vmatprep.subr.bf16.mxu0 0
        %2008 = vmatpush1.bf16.msra.mxu0 0
        %2009 = vmatprep.subr.bf16.mxu0 0
        %2010 = vmatpush1.bf16.msra.mxu0 0
        %2011 = vmatprep.subr.bf16.mxu0 0
        %2012 = vmatpush1.bf16.msra.mxu0 0
        %2013 = vmatprep.subr.bf16.mxu0 0
        %2014 = vmatpush1.bf16.msra.mxu0 0
        %2015 = vmatprep.subr.bf16.mxu0 0
        %2016 = vmatpush1.bf16.msra.mxu0 0
        %2017 = vmatprep.subr.bf16.mxu0 0
        %2018 = vmatpush1.bf16.msra.mxu0 %v2001
        %2019 = vmatprep.subr.bf16.mxu0 0
        %2020 = vmatpush2.bf16.msra.mxu0 0
        %2021 = vmatprep.subr.bf16.mxu0 0
        %2022 = vmatpush2.bf16.msra.mxu0 0
        %2023 = vmatprep.subr.bf16.mxu0 0
        %2024 = vmatpush2.bf16.msra.mxu0 0
        %2025 = vmatprep.subr.bf16.mxu0 0
        %2026 = vmatpush2.bf16.msra.mxu0 0
        %2027 = vmatprep.subr.bf16.mxu0 0
        %2028 = vmatpush2.bf16.msra.mxu0 0
        %2029 = vmatprep.subr.bf16.mxu0 0
        %2030 = vmatpush2.bf16.msra.mxu0 0
        %2031 = vmatprep.subr.bf16.mxu0 0
        %2032 = vmatpush2.bf16.msra.mxu0 0
        %2033 = vmatprep.subr.bf16.mxu0 0
        %2034 = vmatpush2.bf16.msra.mxu0 0
        %2035 = vmatprep.mubr.bf16.mxu0 0
        %2036 = vmatmul.mubr.bf16.gmra.mxu0 %v1947
        %v2037 = vpop.f32.mrf.mxu0
        %v2038 = vadd.f32 0.0, %v2037
        %v2039 = vpop.f32.mrf.mxu0
        %v2040 = vpop.f32.mrf.mxu0
        %v2041 = vadd.f32 0.0, %v2040
        %v2042 = vpop.f32.mrf.mxu0
        %2043 = vmatprep.mubr.bf16.mxu0 0
        %2044 = vmatmul.mubr.bf16.gmra.mxu0 %v1950
        %v2045 = vpop.f32.mrf.mxu0
        %v2046 = vadd.f32 0.0, %v2045
        %v2047 = vpop.f32.mrf.mxu0
        %v2048 = vpop.f32.mrf.mxu0
        %v2049 = vadd.f32 0.0, %v2048
        %v2050 = vpop.f32.mrf.mxu0
        %2051 = vmatprep.mubr.bf16.mxu0 0
        %2052 = vmatmul.mubr.bf16.gmra.mxu0 %v1953
        %v2053 = vpop.f32.mrf.mxu0
        %v2054 = vadd.f32 0.0, %v2053
        %v2055 = vpop.f32.mrf.mxu0
        %v2056 = vpop.f32.mrf.mxu0
        %v2057 = vadd.f32 0.0, %v2056
        %v2058 = vpop.f32.mrf.mxu0
        %2059 = vmatprep.mubr.bf16.mxu0 0
        %2060 = vmatmul.mubr.bf16.gmra.mxu0 %v1956
        %v2061 = vpop.f32.mrf.mxu0
        %v2062 = vadd.f32 0.0, %v2061
        %v2063 = vpop.f32.mrf.mxu0
        %v2064 = vpop.f32.mrf.mxu0
        %v2065 = vadd.f32 0.0, %v2064
        %v2066 = vpop.f32.mrf.mxu0
        %2067 = vmatprep.mubr.bf16.mxu0 0
        %2068 = vmatmul.mubr.bf16.gmra.mxu0 %v1959
        %v2069 = vpop.f32.mrf.mxu0
        %v2070 = vadd.f32 0.0, %v2069
        %v2071 = vpop.f32.mrf.mxu0
        %v2072 = vpop.f32.mrf.mxu0
        %v2073 = vadd.f32 0.0, %v2072
        %v2074 = vpop.f32.mrf.mxu0
        %2075 = vmatprep.mubr.bf16.mxu0 0
        %2076 = vmatmul.mubr.bf16.gmra.mxu0 %v1962
        %v2077 = vpop.f32.mrf.mxu0
        %v2078 = vadd.f32 0.0, %v2077
        %v2079 = vpop.f32.mrf.mxu0
        %v2080 = vpop.f32.mrf.mxu0
        %v2081 = vadd.f32 0.0, %v2080
        %v2082 = vpop.f32.mrf.mxu0
        %2083 = vmatprep.mubr.bf16.mxu0 0
        %2084 = vmatmul.mubr.bf16.gmra.mxu0 %v1965
        %v2085 = vpop.f32.mrf.mxu0
        %v2086 = vadd.f32 0.0, %v2085
        %v2087 = vpop.f32.mrf.mxu0
        %v2088 = vpop.f32.mrf.mxu0
        %v2089 = vadd.f32 0.0, %v2088
        %v2090 = vpop.f32.mrf.mxu0
        %2091 = vmatprep.mubr.bf16.mxu0 0
        %2092 = vmatmul.mubr.bf16.gmra.mxu0 %v1968
        %v2093 = vpop.f32.mrf.mxu0
        %v2094 = vadd.f32 0.0, %v2093
        %v2095 = vpop.f32.mrf.mxu0
        %v2096 = vpop.f32.mrf.mxu0
        %v2097 = vadd.f32 0.0, %v2096
        %v2098 = vpop.f32.mrf.mxu0
        %2099 = vmatprep.mubr.bf16.mxu0 0
        %2100 = vmatmul.mubr.bf16.gmra.mxu0 %v1971
        %v2101 = vpop.f32.mrf.mxu0
        %v2102 = vadd.f32 0.0, %v2101
        %v2103 = vpop.f32.mrf.mxu0
        %v2104 = vpop.f32.mrf.mxu0
        %v2105 = vadd.f32 0.0, %v2104
        %v2106 = vpop.f32.mrf.mxu0
        %2107 = vmatprep.mubr.bf16.mxu0 0
        %2108 = vmatmul.mubr.bf16.gmra.mxu0 %v1974
        %v2109 = vpop.f32.mrf.mxu0
        %v2110 = vadd.f32 0.0, %v2109
        %v2111 = vpop.f32.mrf.mxu0
        %v2112 = vpop.f32.mrf.mxu0
        %v2113 = vadd.f32 0.0, %v2112
        %v2114 = vpop.f32.mrf.mxu0
        %2115 = vmatprep.mubr.bf16.mxu0 0
        %2116 = vmatmul.mubr.bf16.gmra.mxu0 %v1977
        %v2117 = vpop.f32.mrf.mxu0
        %v2118 = vadd.f32 0.0, %v2117
        %v2119 = vpop.f32.mrf.mxu0
        %v2120 = vpop.f32.mrf.mxu0
        %v2121 = vadd.f32 0.0, %v2120
        %v2122 = vpop.f32.mrf.mxu0
        %2123 = vmatprep.mubr.bf16.mxu0 0
        %2124 = vmatmul.mubr.bf16.gmra.mxu0 %v1980
        %v2125 = vpop.f32.mrf.mxu0
        %v2126 = vadd.f32 0.0, %v2125
        %v2127 = vpop.f32.mrf.mxu0
        %v2128 = vpop.f32.mrf.mxu0
        %v2129 = vadd.f32 0.0, %v2128
        %v2130 = vpop.f32.mrf.mxu0
        %2131 = vmatprep.mubr.bf16.mxu0 0
        %2132 = vmatmul.mubr.bf16.gmra.mxu0 %v1983
        %v2133 = vpop.f32.mrf.mxu0
        %v2134 = vadd.f32 0.0, %v2133
        %v2135 = vpop.f32.mrf.mxu0
        %v2136 = vpop.f32.mrf.mxu0
        %v2137 = vadd.f32 0.0, %v2136
        %v2138 = vpop.f32.mrf.mxu0
        %2139 = vmatprep.mubr.bf16.mxu0 0
        %2140 = vmatmul.mubr.bf16.gmra.mxu0 %v1986
        %v2141 = vpop.f32.mrf.mxu0
        %v2142 = vadd.f32 0.0, %v2141
        %v2143 = vpop.f32.mrf.mxu0
        %v2144 = vpop.f32.mrf.mxu0
        %v2145 = vadd.f32 0.0, %v2144
        %v2146 = vpop.f32.mrf.mxu0
        %2147 = vmatprep.mubr.bf16.mxu0 0
        %2148 = vmatmul.mubr.bf16.gmra.mxu0 %v1989
        %v2149 = vpop.f32.mrf.mxu0
        %v2150 = vadd.f32 0.0, %v2149
        %v2151 = vpop.f32.mrf.mxu0
        %v2152 = vpop.f32.mrf.mxu0
        %v2153 = vadd.f32 0.0, %v2152
        %v2154 = vpop.f32.mrf.mxu0
        %2155 = vmatprep.mubr.bf16.mxu0 0
        %2156 = vmatmul.mubr.bf16.gmra.mxu0 %v1992
        %v2157 = vpop.f32.mrf.mxu0
        %v2158 = vadd.f32 0.0, %v2157
        %v2159 = vpop.f32.mrf.mxu0
        %v2160 = vpop.f32.mrf.mxu0
        %v2161 = vadd.f32 0.0, %v2160
        %v2162 = vpop.f32.mrf.mxu0
        %2163 = vmatprep.mubr.bf16.mxu0 0
        %2164 = vmatmul.mubr.bf16.gmra.mxu0 %v1995
        %v2165 = vpop.f32.mrf.mxu0
        %v2166 = vadd.f32 0.0, %v2165
        %v2167 = vpop.f32.mrf.mxu0
        %v2168 = vpop.f32.mrf.mxu0
        %v2169 = vadd.f32 0.0, %v2168
        %v2170 = vpop.f32.mrf.mxu0
        %2171 = vmatprep.mubr.bf16.mxu0 0
        %2172 = vmatmul.mubr.bf16.gmra.mxu0 %v1998
        %v2173 = vpop.f32.mrf.mxu0
        %v2174 = vadd.f32 0.0, %v2173
        %v2175 = vpop.f32.mrf.mxu0
        %v2176 = vpop.f32.mrf.mxu0
        %v2177 = vadd.f32 0.0, %v2176
        %v2178 = vpop.f32.mrf.mxu0
        %2179 = vdwg.mxu0
        %v2180 = vadd.f32 %v1864, %v2038
        %v2181 = vadd.f32 %v1865, %v2041
        %v2182 = vadd.f32 %v1866, %v2046
        %v2183 = vadd.f32 %v1867, %v2049
        %v2184 = vadd.f32 %v1868, %v2054
        %v2185 = vadd.f32 %v1869, %v2057
        %v2186 = vadd.f32 %v1870, %v2062
        %v2187 = vadd.f32 %v1871, %v2065
        %v2188 = vadd.f32 %v1872, %v2070
        %v2189 = vadd.f32 %v1873, %v2073
        %v2190 = vadd.f32 %v1874, %v2078
        %v2191 = vadd.f32 %v1875, %v2081
        %v2192 = vadd.f32 %v1876, %v2086
        %v2193 = vadd.f32 %v1877, %v2089
        %v2194 = vadd.f32 %v1878, %v2094
        %v2195 = vadd.f32 %v1879, %v2097
        %v2196 = vadd.f32 %v1880, %v2102
        %v2197 = vadd.f32 %v1881, %v2105
        %v2198 = vadd.f32 %v1882, %v2110
        %v2199 = vadd.f32 %v1883, %v2113
        %v2200 = vadd.f32 %v1884, %v2118
        %v2201 = vadd.f32 %v1885, %v2121
        %v2202 = vadd.f32 %v1886, %v2126
        %v2203 = vadd.f32 %v1887, %v2129
        %v2204 = vadd.f32 %v1888, %v2134
        %v2205 = vadd.f32 %v1889, %v2137
        %v2206 = vadd.f32 %v1890, %v2142
        %v2207 = vadd.f32 %v1891, %v2145
        %v2208 = vadd.f32 %v1892, %v2150
        %v2209 = vadd.f32 %v1893, %v2153
        %v2210 = vadd.f32 %v1894, %v2158
        %v2211 = vadd.f32 %v1895, %v2161
        %v2212 = vadd.f32 %v1896, %v2166
        %v2213 = vadd.f32 %v1897, %v2169
        %v2214 = vadd.f32 %v1898, %v2174
        %v2215 = vadd.f32 %v1899, %v2177
        %s2216 = scalar_lea.vmem %s1, 48
        %v2217 = vld [vmem:[%s2216] sm:$0xf]
        %v2218 = vld [vmem:[%s2216 + $0x4] sm:$0x1]
        %v2221 = vunpack.c.l.b16 %v266
        %v2222 = vunpack.c.l.b16 %v267
        %v2223 = vpack.c.b16 %v2221, %v1302
        %v2224 = vpack.c.b16 %v2222, %v2222
        %v2225 = vrot.slane %v2223, 2
        %v2226 = vsel %vm1903, %v1937, %v2225
        %v2227 = vrot.slane %v2224, 2
        %v2228 = vsel %vm1903, %v2225, %v2227
        %v2231 = vunpack.c.l.b16 %v2217
        %v2232 = vunpack.c.l.b16 %v2218
        %v2233 = vpack.c.b16 %v2232, %v2231
        %v2235 = vsel %vm520, %v2226, 0
        %v2238 = vsel %vm520, %v2228, 0
        %v2241 = vand.u32 %v2233, %v578
        %2243 = vmatprep.subr.bf16.mxu0 0
        %2244 = vmatpush1.bf16.msra.mxu0 0
        %2245 = vmatprep.subr.bf16.mxu0 0
        %2246 = vmatpush1.bf16.msra.mxu0 0
        %2247 = vmatprep.subr.bf16.mxu0 0
        %2248 = vmatpush1.bf16.msra.mxu0 0
        %2249 = vmatprep.subr.bf16.mxu0 0
        %2250 = vmatpush1.bf16.msra.mxu0 0
        %2251 = vmatprep.subr.bf16.mxu0 0
        %2252 = vmatpush1.bf16.msra.mxu0 0
        %2253 = vmatprep.subr.bf16.mxu0 0
        %2254 = vmatpush1.bf16.msra.mxu0 0
        %2255 = vmatprep.subr.bf16.mxu0 0
        %2256 = vmatpush1.bf16.msra.mxu0 0
        %2257 = vmatprep.subr.bf16.mxu0 0
        %2258 = vmatpush1.bf16.msra.mxu0 %v2241
        %2259 = vmatprep.subr.bf16.mxu0 0
        %2260 = vmatpush2.bf16.msra.mxu0 0
        %2261 = vmatprep.subr.bf16.mxu0 0
        %2262 = vmatpush2.bf16.msra.mxu0 0
        %2263 = vmatprep.subr.bf16.mxu0 0
        %2264 = vmatpush2.bf16.msra.mxu0 0
        %2265 = vmatprep.subr.bf16.mxu0 0
        %2266 = vmatpush2.bf16.msra.mxu0 0
        %2267 = vmatprep.subr.bf16.mxu0 0
        %2268 = vmatpush2.bf16.msra.mxu0 0
        %2269 = vmatprep.subr.bf16.mxu0 0
        %2270 = vmatpush2.bf16.msra.mxu0 0
        %2271 = vmatprep.subr.bf16.mxu0 0
        %2272 = vmatpush2.bf16.msra.mxu0 0
        %2273 = vmatprep.subr.bf16.mxu0 0
        %2274 = vmatpush2.bf16.msra.mxu0 0
        %2275 = vmatprep.mubr.bf16.mxu0 0
        %2276 = vmatmul.mubr.bf16.gmra.mxu0 %v1950
        %v2277 = vpop.f32.mrf.mxu0
        %v2278 = vadd.f32 0.0, %v2277
        %v2279 = vpop.f32.mrf.mxu0
        %v2280 = vpop.f32.mrf.mxu0
        %v2281 = vadd.f32 0.0, %v2280
        %v2282 = vpop.f32.mrf.mxu0
        %2283 = vmatprep.mubr.bf16.mxu0 0
        %2284 = vmatmul.mubr.bf16.gmra.mxu0 %v1953
        %v2285 = vpop.f32.mrf.mxu0
        %v2286 = vadd.f32 0.0, %v2285
        %v2287 = vpop.f32.mrf.mxu0
        %v2288 = vpop.f32.mrf.mxu0
        %v2289 = vadd.f32 0.0, %v2288
        %v2290 = vpop.f32.mrf.mxu0
        %2291 = vmatprep.mubr.bf16.mxu0 0
        %2292 = vmatmul.mubr.bf16.gmra.mxu0 %v1956
        %v2293 = vpop.f32.mrf.mxu0
        %v2294 = vadd.f32 0.0, %v2293
        %v2295 = vpop.f32.mrf.mxu0
        %v2296 = vpop.f32.mrf.mxu0
        %v2297 = vadd.f32 0.0, %v2296
        %v2298 = vpop.f32.mrf.mxu0
        %2299 = vmatprep.mubr.bf16.mxu0 0
        %2300 = vmatmul.mubr.bf16.gmra.mxu0 %v1959
        %v2301 = vpop.f32.mrf.mxu0
        %v2302 = vadd.f32 0.0, %v2301
        %v2303 = vpop.f32.mrf.mxu0
        %v2304 = vpop.f32.mrf.mxu0
        %v2305 = vadd.f32 0.0, %v2304
        %v2306 = vpop.f32.mrf.mxu0
        %2307 = vmatprep.mubr.bf16.mxu0 0
        %2308 = vmatmul.mubr.bf16.gmra.mxu0 %v1962
        %v2309 = vpop.f32.mrf.mxu0
        %v2310 = vadd.f32 0.0, %v2309
        %v2311 = vpop.f32.mrf.mxu0
        %v2312 = vpop.f32.mrf.mxu0
        %v2313 = vadd.f32 0.0, %v2312
        %v2314 = vpop.f32.mrf.mxu0
        %2315 = vmatprep.mubr.bf16.mxu0 0
        %2316 = vmatmul.mubr.bf16.gmra.mxu0 %v1965
        %v2317 = vpop.f32.mrf.mxu0
        %v2318 = vadd.f32 0.0, %v2317
        %v2319 = vpop.f32.mrf.mxu0
        %v2320 = vpop.f32.mrf.mxu0
        %v2321 = vadd.f32 0.0, %v2320
        %v2322 = vpop.f32.mrf.mxu0
        %2323 = vmatprep.mubr.bf16.mxu0 0
        %2324 = vmatmul.mubr.bf16.gmra.mxu0 %v1968
        %v2325 = vpop.f32.mrf.mxu0
        %v2326 = vadd.f32 0.0, %v2325
        %v2327 = vpop.f32.mrf.mxu0
        %v2328 = vpop.f32.mrf.mxu0
        %v2329 = vadd.f32 0.0, %v2328
        %v2330 = vpop.f32.mrf.mxu0
        %2331 = vmatprep.mubr.bf16.mxu0 0
        %2332 = vmatmul.mubr.bf16.gmra.mxu0 %v1971
        %v2333 = vpop.f32.mrf.mxu0
        %v2334 = vadd.f32 0.0, %v2333
        %v2335 = vpop.f32.mrf.mxu0
        %v2336 = vpop.f32.mrf.mxu0
        %v2337 = vadd.f32 0.0, %v2336
        %v2338 = vpop.f32.mrf.mxu0
        %2339 = vmatprep.mubr.bf16.mxu0 0
        %2340 = vmatmul.mubr.bf16.gmra.mxu0 %v1974
        %v2341 = vpop.f32.mrf.mxu0
        %v2342 = vadd.f32 0.0, %v2341
        %v2343 = vpop.f32.mrf.mxu0
        %v2344 = vpop.f32.mrf.mxu0
        %v2345 = vadd.f32 0.0, %v2344
        %v2346 = vpop.f32.mrf.mxu0
        %2347 = vmatprep.mubr.bf16.mxu0 0
        %2348 = vmatmul.mubr.bf16.gmra.mxu0 %v1977
        %v2349 = vpop.f32.mrf.mxu0
        %v2350 = vadd.f32 0.0, %v2349
        %v2351 = vpop.f32.mrf.mxu0
        %v2352 = vpop.f32.mrf.mxu0
        %v2353 = vadd.f32 0.0, %v2352
        %v2354 = vpop.f32.mrf.mxu0
        %2355 = vmatprep.mubr.bf16.mxu0 0
        %2356 = vmatmul.mubr.bf16.gmra.mxu0 %v1980
        %v2357 = vpop.f32.mrf.mxu0
        %v2358 = vadd.f32 0.0, %v2357
        %v2359 = vpop.f32.mrf.mxu0
        %v2360 = vpop.f32.mrf.mxu0
        %v2361 = vadd.f32 0.0, %v2360
        %v2362 = vpop.f32.mrf.mxu0
        %2363 = vmatprep.mubr.bf16.mxu0 0
        %2364 = vmatmul.mubr.bf16.gmra.mxu0 %v1983
        %v2365 = vpop.f32.mrf.mxu0
        %v2366 = vadd.f32 0.0, %v2365
        %v2367 = vpop.f32.mrf.mxu0
        %v2368 = vpop.f32.mrf.mxu0
        %v2369 = vadd.f32 0.0, %v2368
        %v2370 = vpop.f32.mrf.mxu0
        %2371 = vmatprep.mubr.bf16.mxu0 0
        %2372 = vmatmul.mubr.bf16.gmra.mxu0 %v1986
        %v2373 = vpop.f32.mrf.mxu0
        %v2374 = vadd.f32 0.0, %v2373
        %v2375 = vpop.f32.mrf.mxu0
        %v2376 = vpop.f32.mrf.mxu0
        %v2377 = vadd.f32 0.0, %v2376
        %v2378 = vpop.f32.mrf.mxu0
        %2379 = vmatprep.mubr.bf16.mxu0 0
        %2380 = vmatmul.mubr.bf16.gmra.mxu0 %v1989
        %v2381 = vpop.f32.mrf.mxu0
        %v2382 = vadd.f32 0.0, %v2381
        %v2383 = vpop.f32.mrf.mxu0
        %v2384 = vpop.f32.mrf.mxu0
        %v2385 = vadd.f32 0.0, %v2384
        %v2386 = vpop.f32.mrf.mxu0
        %2387 = vmatprep.mubr.bf16.mxu0 0
        %2388 = vmatmul.mubr.bf16.gmra.mxu0 %v1992
        %v2389 = vpop.f32.mrf.mxu0
        %v2390 = vadd.f32 0.0, %v2389
        %v2391 = vpop.f32.mrf.mxu0
        %v2392 = vpop.f32.mrf.mxu0
        %v2393 = vadd.f32 0.0, %v2392
        %v2394 = vpop.f32.mrf.mxu0
        %2395 = vmatprep.mubr.bf16.mxu0 0
        %2396 = vmatmul.mubr.bf16.gmra.mxu0 %v1995
        %v2397 = vpop.f32.mrf.mxu0
        %v2398 = vadd.f32 0.0, %v2397
        %v2399 = vpop.f32.mrf.mxu0
        %v2400 = vpop.f32.mrf.mxu0
        %v2401 = vadd.f32 0.0, %v2400
        %v2402 = vpop.f32.mrf.mxu0
        %2403 = vmatprep.mubr.bf16.mxu0 0
        %2404 = vmatmul.mubr.bf16.gmra.mxu0 %v2235
        %v2405 = vpop.f32.mrf.mxu0
        %v2406 = vadd.f32 0.0, %v2405
        %v2407 = vpop.f32.mrf.mxu0
        %v2408 = vpop.f32.mrf.mxu0
        %v2409 = vadd.f32 0.0, %v2408
        %v2410 = vpop.f32.mrf.mxu0
        %2411 = vmatprep.mubr.bf16.mxu0 0
        %2412 = vmatmul.mubr.bf16.gmra.mxu0 %v2238
        %v2413 = vpop.f32.mrf.mxu0
        %v2414 = vadd.f32 0.0, %v2413
        %v2415 = vpop.f32.mrf.mxu0
        %v2416 = vpop.f32.mrf.mxu0
        %v2417 = vadd.f32 0.0, %v2416
        %v2418 = vpop.f32.mrf.mxu0
        %2419 = vdwg.mxu0
        %v2420 = vadd.f32 %v2180, %v2278
        %v2421 = vadd.f32 %v2181, %v2281
        %v2422 = vadd.f32 %v2182, %v2286
        %v2423 = vadd.f32 %v2183, %v2289
        %v2424 = vadd.f32 %v2184, %v2294
        %v2425 = vadd.f32 %v2185, %v2297
        %v2426 = vadd.f32 %v2186, %v2302
        %v2427 = vadd.f32 %v2187, %v2305
        %v2428 = vadd.f32 %v2188, %v2310
        %v2429 = vadd.f32 %v2189, %v2313
        %v2430 = vadd.f32 %v2190, %v2318
        %v2431 = vadd.f32 %v2191, %v2321
        %v2432 = vadd.f32 %v2192, %v2326
        %v2433 = vadd.f32 %v2193, %v2329
        %v2434 = vadd.f32 %v2194, %v2334
        %v2435 = vadd.f32 %v2195, %v2337
        %v2436 = vadd.f32 %v2196, %v2342
        %v2437 = vadd.f32 %v2197, %v2345
        %v2438 = vadd.f32 %v2198, %v2350
        %v2439 = vadd.f32 %v2199, %v2353
        %v2440 = vadd.f32 %v2200, %v2358
        %v2441 = vadd.f32 %v2201, %v2361
        %v2442 = vadd.f32 %v2202, %v2366
        %v2443 = vadd.f32 %v2203, %v2369
        %v2444 = vadd.f32 %v2204, %v2374
        %v2445 = vadd.f32 %v2205, %v2377
        %v2446 = vadd.f32 %v2206, %v2382
        %v2447 = vadd.f32 %v2207, %v2385
        %v2448 = vadd.f32 %v2208, %v2390
        %v2449 = vadd.f32 %v2209, %v2393
        %v2450 = vadd.f32 %v2210, %v2398
        %v2451 = vadd.f32 %v2211, %v2401
        %v2452 = vadd.f32 %v2212, %v2406
        %v2453 = vadd.f32 %v2213, %v2409
        %v2454 = vadd.f32 %v2214, %v2414
        %v2455 = vadd.f32 %v2215, %v2417
        %s2456 = scalar_lea.vmem %s1, 56
        %v2457 = vld [vmem:[%s2456] sm:$0xf]
        %v2458 = vld [vmem:[%s2456 + $0x4] sm:$0x1]
        %vm2459 = vsmask.f32 5376
        %v2460 = vrot.slane %v387, 2
        %v2461 = vrot.slane %v383, 3
        %v2462 = vor.u32 %v2460, %v2461
        %v2463 = vrot.slane %v395, 2
        %v2464 = vrot.slane %v391, 3
        %v2465 = vor.u32 %v2463, %v2464
        %v2466 = vsel %vm2459, %v2462, %v2465
        %v2467 = vrot.slane %v403, 2
        %v2468 = vrot.slane %v399, 3
        %v2469 = vor.u32 %v2467, %v2468
        %v2470 = vsel %vm2459, %v2465, %v2469
        %v2471 = vrot.slane %v411, 2
        %v2472 = vrot.slane %v407, 3
        %v2473 = vor.u32 %v2471, %v2472
        %v2474 = vsel %vm2459, %v2469, %v2473
        %v2475 = vrot.slane %v419, 2
        %v2476 = vrot.slane %v415, 3
        %v2477 = vor.u32 %v2475, %v2476
        %v2478 = vsel %vm2459, %v2473, %v2477
        %v2479 = vrot.slane %v427, 2
        %v2480 = vrot.slane %v423, 3
        %v2481 = vor.u32 %v2479, %v2480
        %v2482 = vsel %vm2459, %v2477, %v2481
        %v2483 = vrot.slane %v435, 2
        %v2484 = vrot.slane %v431, 3
        %v2485 = vor.u32 %v2483, %v2484
        %v2486 = vsel %vm2459, %v2481, %v2485
        %v2487 = vrot.slane %v443, 2
        %v2488 = vrot.slane %v439, 3
        %v2489 = vor.u32 %v2487, %v2488
        %v2490 = vsel %vm2459, %v2485, %v2489
        %v2491 = vrot.slane %v451, 2
        %v2492 = vrot.slane %v447, 3
        %v2493 = vor.u32 %v2491, %v2492
        %v2494 = vsel %vm2459, %v2489, %v2493
        %v2495 = vrot.slane %v459, 2
        %v2496 = vrot.slane %v455, 3
        %v2497 = vor.u32 %v2495, %v2496
        %v2498 = vsel %vm2459, %v2493, %v2497
        %v2499 = vrot.slane %v467, 2
        %v2500 = vrot.slane %v463, 3
        %v2501 = vor.u32 %v2499, %v2500
        %v2502 = vsel %vm2459, %v2497, %v2501
        %v2503 = vrot.slane %v475, 2
        %v2504 = vrot.slane %v471, 3
        %v2505 = vor.u32 %v2503, %v2504
        %v2506 = vsel %vm2459, %v2501, %v2505
        %v2507 = vrot.slane %v483, 2
        %v2508 = vrot.slane %v479, 3
        %v2509 = vor.u32 %v2507, %v2508
        %v2510 = vsel %vm2459, %v2505, %v2509
        %v2511 = vrot.slane %v491, 2
        %v2512 = vrot.slane %v487, 3
        %v2513 = vor.u32 %v2511, %v2512
        %v2514 = vsel %vm2459, %v2509, %v2513
        %v2515 = vrot.slane %v499, 2
        %v2516 = vrot.slane %v495, 3
        %v2517 = vor.u32 %v2515, %v2516
        %v2518 = vsel %vm2459, %v2513, %v2517
        %v2519 = vrot.slane %v507, 2
        %v2520 = vrot.slane %v503, 3
        %v2521 = vor.u32 %v2519, %v2520
        %v2522 = vsel %vm2459, %v2517, %v2521
        %v2523 = vrot.slane %v1608, 2
        %v2524 = vrot.slane %v1611, 3
        %v2525 = vor.u32 %v2523, %v2524
        %v2526 = vsel %vm2459, %v2521, %v2525
        %v2528 = vshrl.u32 %v2223, 16
        %v2530 = vrot.slane %v2528, 2
        %v2531 = vshll.u32 %v2223, 16
        %v2533 = vrot.slane %v2531, 3
        %v2534 = vor.u32 %v2530, %v2533
        %v2535 = vsel %vm2459, %v2525, %v2534
        %v2537 = vshrl.u32 %v2224, 16
        %v2539 = vrot.slane %v2537, 2
        %v2540 = vshll.u32 %v2224, 16
        %v2542 = vrot.slane %v2540, 3
        %v2543 = vor.u32 %v2539, %v2542
        %v2544 = vsel %vm2459, %v2534, %v2543
        %v2547 = vunpack.c.l.b16 %v2457
        %v2548 = vunpack.c.l.b16 %v2458
        %v2549 = vpack.c.b16 %v2548, %v2547
        %v2551 = vsel %vm520, %v2466, 0
        %v2554 = vsel %vm520, %v2470, 0
        %v2557 = vsel %vm520, %v2474, 0
        %v2560 = vsel %vm520, %v2478, 0
        %v2563 = vsel %vm520, %v2482, 0
        %v2566 = vsel %vm520, %v2486, 0
        %v2569 = vsel %vm520, %v2490, 0
        %v2572 = vsel %vm520, %v2494, 0
        %v2575 = vsel %vm520, %v2498, 0
        %v2578 = vsel %vm520, %v2502, 0
        %v2581 = vsel %vm520, %v2506, 0
        %v2584 = vsel %vm520, %v2510, 0
        %v2587 = vsel %vm520, %v2514, 0
        %v2590 = vsel %vm520, %v2518, 0
        %v2593 = vsel %vm520, %v2522, 0
        %v2596 = vsel %vm520, %v2526, 0
        %v2599 = vsel %vm520, %v2535, 0
        %v2602 = vsel %vm520, %v2544, 0
        %v2605 = vand.u32 %v2549, %v578
        %2607 = vmatprep.subr.bf16.mxu0 0
        %2608 = vmatpush1.bf16.msra.mxu0 0
        %2609 = vmatprep.subr.bf16.mxu0 0
        %2610 = vmatpush1.bf16.msra.mxu0 0
        %2611 = vmatprep.subr.bf16.mxu0 0
        %2612 = vmatpush1.bf16.msra.mxu0 0
        %2613 = vmatprep.subr.bf16.mxu0 0
        %2614 = vmatpush1.bf16.msra.mxu0 0
        %2615 = vmatprep.subr.bf16.mxu0 0
        %2616 = vmatpush1.bf16.msra.mxu0 0
        %2617 = vmatprep.subr.bf16.mxu0 0
        %2618 = vmatpush1.bf16.msra.mxu0 0
        %2619 = vmatprep.subr.bf16.mxu0 0
        %2620 = vmatpush1.bf16.msra.mxu0 0
        %2621 = vmatprep.subr.bf16.mxu0 0
        %2622 = vmatpush1.bf16.msra.mxu0 %v2605
        %2623 = vmatprep.subr.bf16.mxu0 0
        %2624 = vmatpush2.bf16.msra.mxu0 0
        %2625 = vmatprep.subr.bf16.mxu0 0
        %2626 = vmatpush2.bf16.msra.mxu0 0
        %2627 = vmatprep.subr.bf16.mxu0 0
        %2628 = vmatpush2.bf16.msra.mxu0 0
        %2629 = vmatprep.subr.bf16.mxu0 0
        %2630 = vmatpush2.bf16.msra.mxu0 0
        %2631 = vmatprep.subr.bf16.mxu0 0
        %2632 = vmatpush2.bf16.msra.mxu0 0
        %2633 = vmatprep.subr.bf16.mxu0 0
        %2634 = vmatpush2.bf16.msra.mxu0 0
        %2635 = vmatprep.subr.bf16.mxu0 0
        %2636 = vmatpush2.bf16.msra.mxu0 0
        %2637 = vmatprep.subr.bf16.mxu0 0
        %2638 = vmatpush2.bf16.msra.mxu0 0
        %2639 = vmatprep.mubr.bf16.mxu0 0
        %2640 = vmatmul.mubr.bf16.gmra.mxu0 %v2551
        %v2641 = vpop.f32.mrf.mxu0
        %v2642 = vadd.f32 0.0, %v2641
        %v2643 = vpop.f32.mrf.mxu0
        %v2644 = vpop.f32.mrf.mxu0
        %v2645 = vadd.f32 0.0, %v2644
        %v2646 = vpop.f32.mrf.mxu0
        %2647 = vmatprep.mubr.bf16.mxu0 0
        %2648 = vmatmul.mubr.bf16.gmra.mxu0 %v2554
        %v2649 = vpop.f32.mrf.mxu0
        %v2650 = vadd.f32 0.0, %v2649
        %v2651 = vpop.f32.mrf.mxu0
        %v2652 = vpop.f32.mrf.mxu0
        %v2653 = vadd.f32 0.0, %v2652
        %v2654 = vpop.f32.mrf.mxu0
        %2655 = vmatprep.mubr.bf16.mxu0 0
        %2656 = vmatmul.mubr.bf16.gmra.mxu0 %v2557
        %v2657 = vpop.f32.mrf.mxu0
        %v2658 = vadd.f32 0.0, %v2657
        %v2659 = vpop.f32.mrf.mxu0
        %v2660 = vpop.f32.mrf.mxu0
        %v2661 = vadd.f32 0.0, %v2660
        %v2662 = vpop.f32.mrf.mxu0
        %2663 = vmatprep.mubr.bf16.mxu0 0
        %2664 = vmatmul.mubr.bf16.gmra.mxu0 %v2560
        %v2665 = vpop.f32.mrf.mxu0
        %v2666 = vadd.f32 0.0, %v2665
        %v2667 = vpop.f32.mrf.mxu0
        %v2668 = vpop.f32.mrf.mxu0
        %v2669 = vadd.f32 0.0, %v2668
        %v2670 = vpop.f32.mrf.mxu0
        %2671 = vmatprep.mubr.bf16.mxu0 0
        %2672 = vmatmul.mubr.bf16.gmra.mxu0 %v2563
        %v2673 = vpop.f32.mrf.mxu0
        %v2674 = vadd.f32 0.0, %v2673
        %v2675 = vpop.f32.mrf.mxu0
        %v2676 = vpop.f32.mrf.mxu0
        %v2677 = vadd.f32 0.0, %v2676
        %v2678 = vpop.f32.mrf.mxu0
        %2679 = vmatprep.mubr.bf16.mxu0 0
        %2680 = vmatmul.mubr.bf16.gmra.mxu0 %v2566
        %v2681 = vpop.f32.mrf.mxu0
        %v2682 = vadd.f32 0.0, %v2681
        %v2683 = vpop.f32.mrf.mxu0
        %v2684 = vpop.f32.mrf.mxu0
        %v2685 = vadd.f32 0.0, %v2684
        %v2686 = vpop.f32.mrf.mxu0
        %2687 = vmatprep.mubr.bf16.mxu0 0
        %2688 = vmatmul.mubr.bf16.gmra.mxu0 %v2569
        %v2689 = vpop.f32.mrf.mxu0
        %v2690 = vadd.f32 0.0, %v2689
        %v2691 = vpop.f32.mrf.mxu0
        %v2692 = vpop.f32.mrf.mxu0
        %v2693 = vadd.f32 0.0, %v2692
        %v2694 = vpop.f32.mrf.mxu0
        %2695 = vmatprep.mubr.bf16.mxu0 0
        %2696 = vmatmul.mubr.bf16.gmra.mxu0 %v2572
        %v2697 = vpop.f32.mrf.mxu0
        %v2698 = vadd.f32 0.0, %v2697
        %v2699 = vpop.f32.mrf.mxu0
        %v2700 = vpop.f32.mrf.mxu0
        %v2701 = vadd.f32 0.0, %v2700
        %v2702 = vpop.f32.mrf.mxu0
        %2703 = vmatprep.mubr.bf16.mxu0 0
        %2704 = vmatmul.mubr.bf16.gmra.mxu0 %v2575
        %v2705 = vpop.f32.mrf.mxu0
        %v2706 = vadd.f32 0.0, %v2705
        %v2707 = vpop.f32.mrf.mxu0
        %v2708 = vpop.f32.mrf.mxu0
        %v2709 = vadd.f32 0.0, %v2708
        %v2710 = vpop.f32.mrf.mxu0
        %2711 = vmatprep.mubr.bf16.mxu0 0
        %2712 = vmatmul.mubr.bf16.gmra.mxu0 %v2578
        %v2713 = vpop.f32.mrf.mxu0
        %v2714 = vadd.f32 0.0, %v2713
        %v2715 = vpop.f32.mrf.mxu0
        %v2716 = vpop.f32.mrf.mxu0
        %v2717 = vadd.f32 0.0, %v2716
        %v2718 = vpop.f32.mrf.mxu0
        %2719 = vmatprep.mubr.bf16.mxu0 0
        %2720 = vmatmul.mubr.bf16.gmra.mxu0 %v2581
        %v2721 = vpop.f32.mrf.mxu0
        %v2722 = vadd.f32 0.0, %v2721
        %v2723 = vpop.f32.mrf.mxu0
        %v2724 = vpop.f32.mrf.mxu0
        %v2725 = vadd.f32 0.0, %v2724
        %v2726 = vpop.f32.mrf.mxu0
        %2727 = vmatprep.mubr.bf16.mxu0 0
        %2728 = vmatmul.mubr.bf16.gmra.mxu0 %v2584
        %v2729 = vpop.f32.mrf.mxu0
        %v2730 = vadd.f32 0.0, %v2729
        %v2731 = vpop.f32.mrf.mxu0
        %v2732 = vpop.f32.mrf.mxu0
        %v2733 = vadd.f32 0.0, %v2732
        %v2734 = vpop.f32.mrf.mxu0
        %2735 = vmatprep.mubr.bf16.mxu0 0
        %2736 = vmatmul.mubr.bf16.gmra.mxu0 %v2587
        %v2737 = vpop.f32.mrf.mxu0
        %v2738 = vadd.f32 0.0, %v2737
        %v2739 = vpop.f32.mrf.mxu0
        %v2740 = vpop.f32.mrf.mxu0
        %v2741 = vadd.f32 0.0, %v2740
        %v2742 = vpop.f32.mrf.mxu0
        %2743 = vmatprep.mubr.bf16.mxu0 0
        %2744 = vmatmul.mubr.bf16.gmra.mxu0 %v2590
        %v2745 = vpop.f32.mrf.mxu0
        %v2746 = vadd.f32 0.0, %v2745
        %v2747 = vpop.f32.mrf.mxu0
        %v2748 = vpop.f32.mrf.mxu0
        %v2749 = vadd.f32 0.0, %v2748
        %v2750 = vpop.f32.mrf.mxu0
        %2751 = vmatprep.mubr.bf16.mxu0 0
        %2752 = vmatmul.mubr.bf16.gmra.mxu0 %v2593
        %v2753 = vpop.f32.mrf.mxu0
        %v2754 = vadd.f32 0.0, %v2753
        %v2755 = vpop.f32.mrf.mxu0
        %v2756 = vpop.f32.mrf.mxu0
        %v2757 = vadd.f32 0.0, %v2756
        %v2758 = vpop.f32.mrf.mxu0
        %2759 = vmatprep.mubr.bf16.mxu0 0
        %2760 = vmatmul.mubr.bf16.gmra.mxu0 %v2596
        %v2761 = vpop.f32.mrf.mxu0
        %v2762 = vadd.f32 0.0, %v2761
        %v2763 = vpop.f32.mrf.mxu0
        %v2764 = vpop.f32.mrf.mxu0
        %v2765 = vadd.f32 0.0, %v2764
        %v2766 = vpop.f32.mrf.mxu0
        %2767 = vmatprep.mubr.bf16.mxu0 0
        %2768 = vmatmul.mubr.bf16.gmra.mxu0 %v2599
        %v2769 = vpop.f32.mrf.mxu0
        %v2770 = vadd.f32 0.0, %v2769
        %v2771 = vpop.f32.mrf.mxu0
        %v2772 = vpop.f32.mrf.mxu0
        %v2773 = vadd.f32 0.0, %v2772
        %v2774 = vpop.f32.mrf.mxu0
        %2775 = vmatprep.mubr.bf16.mxu0 0
        %2776 = vmatmul.mubr.bf16.gmra.mxu0 %v2602
        %v2777 = vpop.f32.mrf.mxu0
        %v2778 = vadd.f32 0.0, %v2777
        %v2779 = vpop.f32.mrf.mxu0
        %v2780 = vpop.f32.mrf.mxu0
        %v2781 = vadd.f32 0.0, %v2780
        %v2782 = vpop.f32.mrf.mxu0
        %2783 = vdwg.mxu0
        %v2784 = vadd.f32 %v2420, %v2642
        %v2785 = vadd.f32 %v2421, %v2645
        %v2786 = vadd.f32 %v2422, %v2650
        %v2787 = vadd.f32 %v2423, %v2653
        %v2788 = vadd.f32 %v2424, %v2658
        %v2789 = vadd.f32 %v2425, %v2661
        %v2790 = vadd.f32 %v2426, %v2666
        %v2791 = vadd.f32 %v2427, %v2669
        %v2792 = vadd.f32 %v2428, %v2674
        %v2793 = vadd.f32 %v2429, %v2677
        %v2794 = vadd.f32 %v2430, %v2682
        %v2795 = vadd.f32 %v2431, %v2685
        %v2796 = vadd.f32 %v2432, %v2690
        %v2797 = vadd.f32 %v2433, %v2693
        %v2798 = vadd.f32 %v2434, %v2698
        %v2799 = vadd.f32 %v2435, %v2701
        %v2800 = vadd.f32 %v2436, %v2706
        %v2801 = vadd.f32 %v2437, %v2709
        %v2802 = vadd.f32 %v2438, %v2714
        %v2803 = vadd.f32 %v2439, %v2717
        %v2804 = vadd.f32 %v2440, %v2722
        %v2805 = vadd.f32 %v2441, %v2725
        %v2806 = vadd.f32 %v2442, %v2730
        %v2807 = vadd.f32 %v2443, %v2733
        %v2808 = vadd.f32 %v2444, %v2738
        %v2809 = vadd.f32 %v2445, %v2741
        %v2810 = vadd.f32 %v2446, %v2746
        %v2811 = vadd.f32 %v2447, %v2749
        %v2812 = vadd.f32 %v2448, %v2754
        %v2813 = vadd.f32 %v2449, %v2757
        %v2814 = vadd.f32 %v2450, %v2762
        %v2815 = vadd.f32 %v2451, %v2765
        %v2816 = vadd.f32 %v2452, %v2770
        %v2817 = vadd.f32 %v2453, %v2773
        %v2818 = vadd.f32 %v2454, %v2778
        %v2819 = vadd.f32 %v2455, %v2781
        %s2820 = scalar_lea.vmem %s1, 64
        %v2821 = vld [vmem:[%s2820] sm:$0xf]
        %v2822 = vld [vmem:[%s2820 + $0x4] sm:$0x1]
        %vm2823 = vcmask 1044480
        %v2824 = vrot.slane %v349, 3
        %v2825 = vrot.slane %v350, 3
        %v2826 = vsel %vm2823, %v2824, %v2825
        %v2827 = vrot.slane %v351, 3
        %v2828 = vsel %vm2823, %v2825, %v2827
        %v2829 = vrot.slane %v352, 3
        %v2830 = vsel %vm2823, %v2827, %v2829
        %v2831 = vrot.slane %v353, 3
        %v2832 = vsel %vm2823, %v2829, %v2831
        %v2833 = vrot.slane %v354, 3
        %v2834 = vsel %vm2823, %v2831, %v2833
        %v2835 = vrot.slane %v355, 3
        %v2836 = vsel %vm2823, %v2833, %v2835
        %v2837 = vrot.slane %v356, 3
        %v2838 = vsel %vm2823, %v2835, %v2837
        %v2839 = vrot.slane %v357, 3
        %v2840 = vsel %vm2823, %v2837, %v2839
        %v2841 = vrot.slane %v358, 3
        %v2842 = vsel %vm2823, %v2839, %v2841
        %v2843 = vrot.slane %v359, 3
        %v2844 = vsel %vm2823, %v2841, %v2843
        %v2845 = vrot.slane %v360, 3
        %v2846 = vsel %vm2823, %v2843, %v2845
        %v2847 = vrot.slane %v361, 3
        %v2848 = vsel %vm2823, %v2845, %v2847
        %v2849 = vrot.slane %v362, 3
        %v2850 = vsel %vm2823, %v2847, %v2849
        %v2851 = vrot.slane %v363, 3
        %v2852 = vsel %vm2823, %v2849, %v2851
        %v2853 = vrot.slane %v364, 3
        %v2854 = vsel %vm2823, %v2851, %v2853
        %v2855 = vrot.slane %v1303, 3
        %v2856 = vsel %vm2823, %v2853, %v2855
        %v2857 = vrot.slane %v2223, 3
        %v2858 = vsel %vm2823, %v2855, %v2857
        %v2859 = vrot.slane %v2224, 3
        %v2860 = vsel %vm2823, %v2857, %v2859
        %v2863 = vunpack.c.l.b16 %v2821
        %v2864 = vunpack.c.l.b16 %v2822
        %v2865 = vpack.c.b16 %v2864, %v2863
        %v2867 = vsel %vm520, %v2826, 0
        %v2870 = vsel %vm520, %v2828, 0
        %v2873 = vsel %vm520, %v2830, 0
        %v2876 = vsel %vm520, %v2832, 0
        %v2879 = vsel %vm520, %v2834, 0
        %v2882 = vsel %vm520, %v2836, 0
        %v2885 = vsel %vm520, %v2838, 0
        %v2888 = vsel %vm520, %v2840, 0
        %v2891 = vsel %vm520, %v2842, 0
        %v2894 = vsel %vm520, %v2844, 0
        %v2897 = vsel %vm520, %v2846, 0
        %v2900 = vsel %vm520, %v2848, 0
        %v2903 = vsel %vm520, %v2850, 0
        %v2906 = vsel %vm520, %v2852, 0
        %v2909 = vsel %vm520, %v2854, 0
        %v2912 = vsel %vm520, %v2856, 0
        %v2915 = vsel %vm520, %v2858, 0
        %v2918 = vsel %vm520, %v2860, 0
        %v2921 = vand.u32 %v2865, %v578
        %2923 = vmatprep.subr.bf16.mxu0 0
        %2924 = vmatpush1.bf16.msra.mxu0 0
        %2925 = vmatprep.subr.bf16.mxu0 0
        %2926 = vmatpush1.bf16.msra.mxu0 0
        %2927 = vmatprep.subr.bf16.mxu0 0
        %2928 = vmatpush1.bf16.msra.mxu0 0
        %2929 = vmatprep.subr.bf16.mxu0 0
        %2930 = vmatpush1.bf16.msra.mxu0 0
        %2931 = vmatprep.subr.bf16.mxu0 0
        %2932 = vmatpush1.bf16.msra.mxu0 0
        %2933 = vmatprep.subr.bf16.mxu0 0
        %2934 = vmatpush1.bf16.msra.mxu0 0
        %2935 = vmatprep.subr.bf16.mxu0 0
        %2936 = vmatpush1.bf16.msra.mxu0 0
        %2937 = vmatprep.subr.bf16.mxu0 0
        %2938 = vmatpush1.bf16.msra.mxu0 %v2921
        %2939 = vmatprep.subr.bf16.mxu0 0
        %2940 = vmatpush2.bf16.msra.mxu0 0
        %2941 = vmatprep.subr.bf16.mxu0 0
        %2942 = vmatpush2.bf16.msra.mxu0 0
        %2943 = vmatprep.subr.bf16.mxu0 0
        %2944 = vmatpush2.bf16.msra.mxu0 0
        %2945 = vmatprep.subr.bf16.mxu0 0
        %2946 = vmatpush2.bf16.msra.mxu0 0
        %2947 = vmatprep.subr.bf16.mxu0 0
        %2948 = vmatpush2.bf16.msra.mxu0 0
        %2949 = vmatprep.subr.bf16.mxu0 0
        %2950 = vmatpush2.bf16.msra.mxu0 0
        %2951 = vmatprep.subr.bf16.mxu0 0
        %2952 = vmatpush2.bf16.msra.mxu0 0
        %2953 = vmatprep.subr.bf16.mxu0 0
        %2954 = vmatpush2.bf16.msra.mxu0 0
        %2955 = vmatprep.mubr.bf16.mxu0 0
        %2956 = vmatmul.mubr.bf16.gmra.mxu0 %v2867
        %v2957 = vpop.f32.mrf.mxu0
        %v2958 = vadd.f32 0.0, %v2957
        %v2959 = vpop.f32.mrf.mxu0
        %v2960 = vpop.f32.mrf.mxu0
        %v2961 = vadd.f32 0.0, %v2960
        %v2962 = vpop.f32.mrf.mxu0
        %2963 = vmatprep.mubr.bf16.mxu0 0
        %2964 = vmatmul.mubr.bf16.gmra.mxu0 %v2870
        %v2965 = vpop.f32.mrf.mxu0
        %v2966 = vadd.f32 0.0, %v2965
        %v2967 = vpop.f32.mrf.mxu0
        %v2968 = vpop.f32.mrf.mxu0
        %v2969 = vadd.f32 0.0, %v2968
        %v2970 = vpop.f32.mrf.mxu0
        %2971 = vmatprep.mubr.bf16.mxu0 0
        %2972 = vmatmul.mubr.bf16.gmra.mxu0 %v2873
        %v2973 = vpop.f32.mrf.mxu0
        %v2974 = vadd.f32 0.0, %v2973
        %v2975 = vpop.f32.mrf.mxu0
        %v2976 = vpop.f32.mrf.mxu0
        %v2977 = vadd.f32 0.0, %v2976
        %v2978 = vpop.f32.mrf.mxu0
        %2979 = vmatprep.mubr.bf16.mxu0 0
        %2980 = vmatmul.mubr.bf16.gmra.mxu0 %v2876
        %v2981 = vpop.f32.mrf.mxu0
        %v2982 = vadd.f32 0.0, %v2981
        %v2983 = vpop.f32.mrf.mxu0
        %v2984 = vpop.f32.mrf.mxu0
        %v2985 = vadd.f32 0.0, %v2984
        %v2986 = vpop.f32.mrf.mxu0
        %2987 = vmatprep.mubr.bf16.mxu0 0
        %2988 = vmatmul.mubr.bf16.gmra.mxu0 %v2879
        %v2989 = vpop.f32.mrf.mxu0
        %v2990 = vadd.f32 0.0, %v2989
        %v2991 = vpop.f32.mrf.mxu0
        %v2992 = vpop.f32.mrf.mxu0
        %v2993 = vadd.f32 0.0, %v2992
        %v2994 = vpop.f32.mrf.mxu0
        %2995 = vmatprep.mubr.bf16.mxu0 0
        %2996 = vmatmul.mubr.bf16.gmra.mxu0 %v2882
        %v2997 = vpop.f32.mrf.mxu0
        %v2998 = vadd.f32 0.0, %v2997
        %v2999 = vpop.f32.mrf.mxu0
        %v3000 = vpop.f32.mrf.mxu0
        %v3001 = vadd.f32 0.0, %v3000
        %v3002 = vpop.f32.mrf.mxu0
        %3003 = vmatprep.mubr.bf16.mxu0 0
        %3004 = vmatmul.mubr.bf16.gmra.mxu0 %v2885
        %v3005 = vpop.f32.mrf.mxu0
        %v3006 = vadd.f32 0.0, %v3005
        %v3007 = vpop.f32.mrf.mxu0
        %v3008 = vpop.f32.mrf.mxu0
        %v3009 = vadd.f32 0.0, %v3008
        %v3010 = vpop.f32.mrf.mxu0
        %3011 = vmatprep.mubr.bf16.mxu0 0
        %3012 = vmatmul.mubr.bf16.gmra.mxu0 %v2888
        %v3013 = vpop.f32.mrf.mxu0
        %v3014 = vadd.f32 0.0, %v3013
        %v3015 = vpop.f32.mrf.mxu0
        %v3016 = vpop.f32.mrf.mxu0
        %v3017 = vadd.f32 0.0, %v3016
        %v3018 = vpop.f32.mrf.mxu0
        %3019 = vmatprep.mubr.bf16.mxu0 0
        %3020 = vmatmul.mubr.bf16.gmra.mxu0 %v2891
        %v3021 = vpop.f32.mrf.mxu0
        %v3022 = vadd.f32 0.0, %v3021
        %v3023 = vpop.f32.mrf.mxu0
        %v3024 = vpop.f32.mrf.mxu0
        %v3025 = vadd.f32 0.0, %v3024
        %v3026 = vpop.f32.mrf.mxu0
        %3027 = vmatprep.mubr.bf16.mxu0 0
        %3028 = vmatmul.mubr.bf16.gmra.mxu0 %v2894
        %v3029 = vpop.f32.mrf.mxu0
        %v3030 = vadd.f32 0.0, %v3029
        %v3031 = vpop.f32.mrf.mxu0
        %v3032 = vpop.f32.mrf.mxu0
        %v3033 = vadd.f32 0.0, %v3032
        %v3034 = vpop.f32.mrf.mxu0
        %3035 = vmatprep.mubr.bf16.mxu0 0
        %3036 = vmatmul.mubr.bf16.gmra.mxu0 %v2897
        %v3037 = vpop.f32.mrf.mxu0
        %v3038 = vadd.f32 0.0, %v3037
        %v3039 = vpop.f32.mrf.mxu0
        %v3040 = vpop.f32.mrf.mxu0
        %v3041 = vadd.f32 0.0, %v3040
        %v3042 = vpop.f32.mrf.mxu0
        %3043 = vmatprep.mubr.bf16.mxu0 0
        %3044 = vmatmul.mubr.bf16.gmra.mxu0 %v2900
        %v3045 = vpop.f32.mrf.mxu0
        %v3046 = vadd.f32 0.0, %v3045
        %v3047 = vpop.f32.mrf.mxu0
        %v3048 = vpop.f32.mrf.mxu0
        %v3049 = vadd.f32 0.0, %v3048
        %v3050 = vpop.f32.mrf.mxu0
        %3051 = vmatprep.mubr.bf16.mxu0 0
        %3052 = vmatmul.mubr.bf16.gmra.mxu0 %v2903
        %v3053 = vpop.f32.mrf.mxu0
        %v3054 = vadd.f32 0.0, %v3053
        %v3055 = vpop.f32.mrf.mxu0
        %v3056 = vpop.f32.mrf.mxu0
        %v3057 = vadd.f32 0.0, %v3056
        %v3058 = vpop.f32.mrf.mxu0
        %3059 = vmatprep.mubr.bf16.mxu0 0
        %3060 = vmatmul.mubr.bf16.gmra.mxu0 %v2906
        %v3061 = vpop.f32.mrf.mxu0
        %v3062 = vadd.f32 0.0, %v3061
        %v3063 = vpop.f32.mrf.mxu0
        %v3064 = vpop.f32.mrf.mxu0
        %v3065 = vadd.f32 0.0, %v3064
        %v3066 = vpop.f32.mrf.mxu0
        %3067 = vmatprep.mubr.bf16.mxu0 0
        %3068 = vmatmul.mubr.bf16.gmra.mxu0 %v2909
        %v3069 = vpop.f32.mrf.mxu0
        %v3070 = vadd.f32 0.0, %v3069
        %v3071 = vpop.f32.mrf.mxu0
        %v3072 = vpop.f32.mrf.mxu0
        %v3073 = vadd.f32 0.0, %v3072
        %v3074 = vpop.f32.mrf.mxu0
        %3075 = vmatprep.mubr.bf16.mxu0 0
        %3076 = vmatmul.mubr.bf16.gmra.mxu0 %v2912
        %v3077 = vpop.f32.mrf.mxu0
        %v3078 = vadd.f32 0.0, %v3077
        %v3079 = vpop.f32.mrf.mxu0
        %v3080 = vpop.f32.mrf.mxu0
        %v3081 = vadd.f32 0.0, %v3080
        %v3082 = vpop.f32.mrf.mxu0
        %3083 = vmatprep.mubr.bf16.mxu0 0
        %3084 = vmatmul.mubr.bf16.gmra.mxu0 %v2915
        %v3085 = vpop.f32.mrf.mxu0
        %v3086 = vadd.f32 0.0, %v3085
        %v3087 = vpop.f32.mrf.mxu0
        %v3088 = vpop.f32.mrf.mxu0
        %v3089 = vadd.f32 0.0, %v3088
        %v3090 = vpop.f32.mrf.mxu0
        %3091 = vmatprep.mubr.bf16.mxu0 0
        %3092 = vmatmul.mubr.bf16.gmra.mxu0 %v2918
        %v3093 = vpop.f32.mrf.mxu0
        %v3094 = vadd.f32 0.0, %v3093
        %v3095 = vpop.f32.mrf.mxu0
        %v3096 = vpop.f32.mrf.mxu0
        %v3097 = vadd.f32 0.0, %v3096
        %v3098 = vpop.f32.mrf.mxu0
        %3099 = vdwg.mxu0
        %v3100 = vadd.f32 %v2784, %v2958
        %v3101 = vadd.f32 %v2785, %v2961
        %v3102 = vadd.f32 %v2786, %v2966
        %v3103 = vadd.f32 %v2787, %v2969
        %v3104 = vadd.f32 %v2788, %v2974
        %v3105 = vadd.f32 %v2789, %v2977
        %v3106 = vadd.f32 %v2790, %v2982
        %v3107 = vadd.f32 %v2791, %v2985
        %v3108 = vadd.f32 %v2792, %v2990
        %v3109 = vadd.f32 %v2793, %v2993
        %v3110 = vadd.f32 %v2794, %v2998
        %v3111 = vadd.f32 %v2795, %v3001
        %v3112 = vadd.f32 %v2796, %v3006
        %v3113 = vadd.f32 %v2797, %v3009
        %v3114 = vadd.f32 %v2798, %v3014
        %v3115 = vadd.f32 %v2799, %v3017
        %v3116 = vadd.f32 %v2800, %v3022
        %v3117 = vadd.f32 %v2801, %v3025
        %v3118 = vadd.f32 %v2802, %v3030
        %v3119 = vadd.f32 %v2803, %v3033
        %v3120 = vadd.f32 %v2804, %v3038
        %v3121 = vadd.f32 %v2805, %v3041
        %v3122 = vadd.f32 %v2806, %v3046
        %v3123 = vadd.f32 %v2807, %v3049
        %v3124 = vadd.f32 %v2808, %v3054
        %v3125 = vadd.f32 %v2809, %v3057
        %v3126 = vadd.f32 %v2810, %v3062
        %v3127 = vadd.f32 %v2811, %v3065
        %v3128 = vadd.f32 %v2812, %v3070
        %v3129 = vadd.f32 %v2813, %v3073
        %v3130 = vadd.f32 %v2814, %v3078
        %v3131 = vadd.f32 %v2815, %v3081
        %v3132 = vadd.f32 %v2816, %v3086
        %v3133 = vadd.f32 %v2817, %v3089
        %v3134 = vadd.f32 %v2818, %v3094
        %v3135 = vadd.f32 %v2819, %v3097
        %v3136 = vld [vmem:[%s2] sm:$0x1]
        %v3138 = vlaneseq
        %v3139 = vshrl.u32 %v3138, 7
        %v3140 = vsub.s32 0, %v3139
        %v3141 = vrot.slane %v3136, %v3140
        %v3143 = vadd.f32 %v3100, %v3141
        %v3144 = vadd.f32 %v3101, %v3141
        %v3145 = vadd.f32 %v3102, %v3141
        %v3146 = vadd.f32 %v3103, %v3141
        %v3147 = vadd.f32 %v3104, %v3141
        %v3148 = vadd.f32 %v3105, %v3141
        %v3149 = vadd.f32 %v3106, %v3141
        %v3150 = vadd.f32 %v3107, %v3141
        %v3151 = vadd.f32 %v3108, %v3141
        %v3152 = vadd.f32 %v3109, %v3141
        %v3153 = vadd.f32 %v3110, %v3141
        %v3154 = vadd.f32 %v3111, %v3141
        %v3155 = vadd.f32 %v3112, %v3141
        %v3156 = vadd.f32 %v3113, %v3141
        %v3157 = vadd.f32 %v3114, %v3141
        %v3158 = vadd.f32 %v3115, %v3141
        %v3159 = vadd.f32 %v3116, %v3141
        %v3160 = vadd.f32 %v3117, %v3141
        %v3161 = vadd.f32 %v3118, %v3141
        %v3162 = vadd.f32 %v3119, %v3141
        %v3163 = vadd.f32 %v3120, %v3141
        %v3164 = vadd.f32 %v3121, %v3141
        %v3165 = vadd.f32 %v3122, %v3141
        %v3166 = vadd.f32 %v3123, %v3141
        %v3167 = vadd.f32 %v3124, %v3141
        %v3168 = vadd.f32 %v3125, %v3141
        %v3169 = vadd.f32 %v3126, %v3141
        %v3170 = vadd.f32 %v3127, %v3141
        %v3171 = vadd.f32 %v3128, %v3141
        %v3172 = vadd.f32 %v3129, %v3141
        %v3173 = vadd.f32 %v3130, %v3141
        %v3174 = vadd.f32 %v3131, %v3141
        %v3175 = vadd.f32 %v3132, %v3141
        %v3176 = vadd.f32 %v3133, %v3141
        %v3177 = vadd.f32 %v3134, %v3141
        %v3178 = vadd.f32 %v3135, %v3141
        %v3179 = vmax.f32 %v3143, 0.0
        %v3180 = vmax.f32 %v3144, 0.0
        %v3181 = vmax.f32 %v3145, 0.0
        %v3182 = vmax.f32 %v3146, 0.0
        %v3183 = vmax.f32 %v3147, 0.0
        %v3184 = vmax.f32 %v3148, 0.0
        %v3185 = vmax.f32 %v3149, 0.0
        %v3186 = vmax.f32 %v3150, 0.0
        %v3187 = vmax.f32 %v3151, 0.0
        %v3188 = vmax.f32 %v3152, 0.0
        %v3189 = vmax.f32 %v3153, 0.0
        %v3190 = vmax.f32 %v3154, 0.0
        %v3191 = vmax.f32 %v3155, 0.0
        %v3192 = vmax.f32 %v3156, 0.0
        %v3193 = vmax.f32 %v3157, 0.0
        %v3194 = vmax.f32 %v3158, 0.0
        %v3195 = vmax.f32 %v3159, 0.0
        %v3196 = vmax.f32 %v3160, 0.0
        %v3197 = vmax.f32 %v3161, 0.0
        %v3198 = vmax.f32 %v3162, 0.0
        %v3199 = vmax.f32 %v3163, 0.0
        %v3200 = vmax.f32 %v3164, 0.0
        %v3201 = vmax.f32 %v3165, 0.0
        %v3202 = vmax.f32 %v3166, 0.0
        %v3203 = vmax.f32 %v3167, 0.0
        %v3204 = vmax.f32 %v3168, 0.0
        %v3205 = vmax.f32 %v3169, 0.0
        %v3206 = vmax.f32 %v3170, 0.0
        %v3207 = vmax.f32 %v3171, 0.0
        %v3208 = vmax.f32 %v3172, 0.0
        %v3209 = vmax.f32 %v3173, 0.0
        %v3210 = vmax.f32 %v3174, 0.0
        %v3211 = vmax.f32 %v3175, 0.0
        %v3212 = vmax.f32 %v3176, 0.0
        %v3213 = vmax.f32 %v3177, 0.0
        %v3214 = vmax.f32 %v3178, 0.0
        %v3215 = vld [vmem:[#allocation2] sm:$0x1]
        %v3216 = vld [vmem:[%s3] sm:$0x7]
        %v3218 = vlaneseq
        %v3219 = vshrl.u32 %v3218, 7
        %v3220 = vsub.s32 0, %v3219
        %v3221 = vrot.slane %v3216, %v3220
        %v3222 = vlaneseq
        %v3223 = vshrl.u32 %v3222, 7
        %v3224 = vsub.s32 1, %v3223
        %v3225 = vrot.slane %v3216, %v3224
        %v3226 = vlaneseq
        %v3227 = vshrl.u32 %v3226, 7
        %v3228 = vsub.s32 2, %v3227
        %v3229 = vrot.slane %v3216, %v3228
        %vm3232 = vcmask 261120
        %v3233 = vsel %vm3232, %v3229, 0
        %3235 = vmatprep.subr.mxu0 0.0
        %3236 = vmatpush1.msra.mxu0 %v3194
        %3237 = vmatprep.subr.mxu0 0.0
        %3238 = vmatpush1.msra.mxu0 %v3193
        %3239 = vmatprep.subr.mxu0 0.0
        %3240 = vmatpush1.msra.mxu0 %v3192
        %3241 = vmatprep.subr.mxu0 0.0
        %3242 = vmatpush1.msra.mxu0 %v3191
        %3243 = vmatprep.subr.mxu0 0.0
        %3244 = vmatpush1.msra.mxu0 %v3190
        %3245 = vmatprep.subr.mxu0 0.0
        %3246 = vmatpush1.msra.mxu0 %v3189
        %3247 = vmatprep.subr.mxu0 0.0
        %3248 = vmatpush1.msra.mxu0 %v3188
        %3249 = vmatprep.subr.mxu0 0.0
        %3250 = vmatpush1.msra.mxu0 %v3187
        %3251 = vmatprep.subr.mxu0 0.0
        %3252 = vmatpush1.msra.mxu0 %v3186
        %3253 = vmatprep.subr.mxu0 0.0
        %3254 = vmatpush1.msra.mxu0 %v3185
        %3255 = vmatprep.subr.mxu0 0.0
        %3256 = vmatpush1.msra.mxu0 %v3184
        %3257 = vmatprep.subr.mxu0 0.0
        %3258 = vmatpush1.msra.mxu0 %v3183
        %3259 = vmatprep.subr.mxu0 0.0
        %3260 = vmatpush1.msra.mxu0 %v3182
        %3261 = vmatprep.subr.mxu0 0.0
        %3262 = vmatpush1.msra.mxu0 %v3181
        %3263 = vmatprep.subr.mxu0 0.0
        %3264 = vmatpush1.msra.mxu0 %v3180
        %3265 = vmatprep.subr.mxu0 0.0
        %3266 = vmatpush1.msra.mxu0 %v3179
        %3267 = vmatprep.subr.mxu0 0.0
        %3268 = vmatpush2.msra.mxu0 %v3210
        %3269 = vmatprep.subr.mxu0 0.0
        %3270 = vmatpush2.msra.mxu0 %v3209
        %3271 = vmatprep.subr.mxu0 0.0
        %3272 = vmatpush2.msra.mxu0 %v3208
        %3273 = vmatprep.subr.mxu0 0.0
        %3274 = vmatpush2.msra.mxu0 %v3207
        %3275 = vmatprep.subr.mxu0 0.0
        %3276 = vmatpush2.msra.mxu0 %v3206
        %3277 = vmatprep.subr.mxu0 0.0
        %3278 = vmatpush2.msra.mxu0 %v3205
        %3279 = vmatprep.subr.mxu0 0.0
        %3280 = vmatpush2.msra.mxu0 %v3204
        %3281 = vmatprep.subr.mxu0 0.0
        %3282 = vmatpush2.msra.mxu0 %v3203
        %3283 = vmatprep.subr.mxu0 0.0
        %3284 = vmatpush2.msra.mxu0 %v3202
        %3285 = vmatprep.subr.mxu0 0.0
        %3286 = vmatpush2.msra.mxu0 %v3201
        %3287 = vmatprep.subr.mxu0 0.0
        %3288 = vmatpush2.msra.mxu0 %v3200
        %3289 = vmatprep.subr.mxu0 0.0
        %3290 = vmatpush2.msra.mxu0 %v3199
        %3291 = vmatprep.subr.mxu0 0.0
        %3292 = vmatpush2.msra.mxu0 %v3198
        %3293 = vmatprep.subr.mxu0 0.0
        %3294 = vmatpush2.msra.mxu0 %v3197
        %3295 = vmatprep.subr.mxu0 0.0
        %3296 = vmatpush2.msra.mxu0 %v3196
        %3297 = vmatprep.subr.mxu0 0.0
        %3298 = vmatpush2.msra.mxu0 %v3195
        %3299 = vmatprep.mubr.f32.mxu0 %v3225
        %3300 = vmatmul.mubr.f32.gmra.mxu0 %v3221
        %v3301 = vpop.f32.mrf.mxu0
        %v3302 = vadd.f32 0.0, %v3301
        %v3303 = vpop.f32.mrf.mxu0
        %3304 = vdwg.mxu0
        %3305 = vmatprep.subr.mxu0 0.0
        %3306 = vmatpush1.msra.mxu0 0.0
        %3307 = vmatprep.subr.mxu0 0.0
        %3308 = vmatpush1.msra.mxu0 0.0
        %3309 = vmatprep.subr.mxu0 0.0
        %3310 = vmatpush1.msra.mxu0 0.0
        %3311 = vmatprep.subr.mxu0 0.0
        %3312 = vmatpush1.msra.mxu0 0.0
        %3313 = vmatprep.subr.mxu0 0.0
        %3314 = vmatpush1.msra.mxu0 0.0
        %3315 = vmatprep.subr.mxu0 0.0
        %3316 = vmatpush1.msra.mxu0 0.0
        %3317 = vmatprep.subr.mxu0 0.0
        %3318 = vmatpush1.msra.mxu0 0.0
        %3319 = vmatprep.subr.mxu0 0.0
        %3320 = vmatpush1.msra.mxu0 0.0
        %3321 = vmatprep.subr.mxu0 0.0
        %3322 = vmatpush1.msra.mxu0 0.0
        %3323 = vmatprep.subr.mxu0 0.0
        %3324 = vmatpush1.msra.mxu0 0.0
        %3325 = vmatprep.subr.mxu0 0.0
        %3326 = vmatpush1.msra.mxu0 0.0
        %3327 = vmatprep.subr.mxu0 0.0
        %3328 = vmatpush1.msra.mxu0 0.0
        %3329 = vmatprep.subr.mxu0 0.0
        %3330 = vmatpush1.msra.mxu0 %v3214
        %3331 = vmatprep.subr.mxu0 0.0
        %3332 = vmatpush1.msra.mxu0 %v3213
        %3333 = vmatprep.subr.mxu0 0.0
        %3334 = vmatpush1.msra.mxu0 %v3212
        %3335 = vmatprep.subr.mxu0 0.0
        %3336 = vmatpush1.msra.mxu0 %v3211
        %3337 = vmatprep.subr.mxu0 0.0
        %3338 = vmatpush2.msra.mxu0 0.0
        %3339 = vmatprep.subr.mxu0 0.0
        %3340 = vmatpush2.msra.mxu0 0.0
        %3341 = vmatprep.subr.mxu0 0.0
        %3342 = vmatpush2.msra.mxu0 0.0
        %3343 = vmatprep.subr.mxu0 0.0
        %3344 = vmatpush2.msra.mxu0 0.0
        %3345 = vmatprep.subr.mxu0 0.0
        %3346 = vmatpush2.msra.mxu0 0.0
        %3347 = vmatprep.subr.mxu0 0.0
        %3348 = vmatpush2.msra.mxu0 0.0
        %3349 = vmatprep.subr.mxu0 0.0
        %3350 = vmatpush2.msra.mxu0 0.0
        %3351 = vmatprep.subr.mxu0 0.0
        %3352 = vmatpush2.msra.mxu0 0.0
        %3353 = vmatprep.subr.mxu0 0.0
        %3354 = vmatpush2.msra.mxu0 0.0
        %3355 = vmatprep.subr.mxu0 0.0
        %3356 = vmatpush2.msra.mxu0 0.0
        %3357 = vmatprep.subr.mxu0 0.0
        %3358 = vmatpush2.msra.mxu0 0.0
        %3359 = vmatprep.subr.mxu0 0.0
        %3360 = vmatpush2.msra.mxu0 0.0
        %3361 = vmatprep.subr.mxu0 0.0
        %3362 = vmatpush2.msra.mxu0 0.0
        %3363 = vmatprep.subr.mxu0 0.0
        %3364 = vmatpush2.msra.mxu0 0.0
        %3365 = vmatprep.subr.mxu0 0.0
        %3366 = vmatpush2.msra.mxu0 0.0
        %3367 = vmatprep.subr.mxu0 0.0
        %3368 = vmatpush2.msra.mxu0 0.0
        %3369 = vmatprep.mubr.f32.mxu0 0.0
        %3370 = vmatmul.mubr.f32.gmra.mxu0 %v3233
        %v3371 = vpop.f32.mrf.mxu0
        %v3372 = vadd.f32 %v3302, %v3371
        %v3373 = vpop.f32.mrf.mxu0
        %3374 = vdwg.mxu0
        %v3375 = vadd.f32 %v3215, %v3372
        %3376 = vst [vmem:[#allocation2] sm:$0x1] %v3375
        // Predicated region
        $region41: #{tpu_custom_call.1} parent=35 // pred_check
          %p3377 = pneg %p222
        $region42: #{tpu_custom_call.1} parent=35 // pred_check_branch
          %3379 = sbr.rel (%p3377) target = $region44
        $region43: #{tpu_custom_call.1} parent=35 // pred_region
          %v3380 = vld [vmem:[#allocation2] sm:$0x1]
          %3381 = vst [vmem:[%s211] sm:$0x1] %v3380
        $region44: #{tpu_custom_call.1} parent=35 // pred_fallthru
          _
        %s3382 = sand.u32 %s129, 1
        %s3383 = scalar_lea.sflag [#allocation4], %s3382
        %s3384 = sand.u32 %s129, 1
        %s3385 = scalar_lea.vmem [#allocation3], %s3384
        // Predicated region
        $region45: #{tpu_custom_call.1} parent=35 // pred_check
          %p3386 = pneg %p139
        $region46: #{tpu_custom_call.1} parent=35 // pred_check_branch
          %3388 = sbr.rel (%p3386) target = $region48
        $region47: #{tpu_custom_call.1} parent=35 // pred_region
          %s3390 = ssub.s32 16, 16
          %3391 = vsyncadd %s3383, %s3390
          %s3392 = smul.addr %s22, 16
          %s3393 = scalar_lea.hbm %s4, %s3392
          %s3395 = sshll.u32 %s3385, 4
          %s3396 = int_to_ptr.vmem [resolvable:$true] %s3395
          %3398 = dma.vmem_to_hbm [thread:$0]  %s3396, 16, %s3393, %s3383
        $region48: #{tpu_custom_call.1} parent=35 // pred_fallthru
          _
      $region36: #{tpu_custom_call.1} parent=5 // pred_fallthru
        _
      %p3399 = scmp.le.s32.totalorder 2, %s13
      // Predicated region
      $region49: #{tpu_custom_call.1} parent=5 // pred_check
        %p3400 = pneg %p3399
      $region50: #{tpu_custom_call.1} parent=5 // pred_check_branch
        %3402 = sbr.rel (%p3400) target = $region52
      $region51: #{tpu_custom_call.1} parent=5 // pred_region
        %s3403 = ssub.s32 %s13, 2
        // Predicated region
        $region53: #{tpu_custom_call.1} parent=51 // pred_check
          %p3404 = pneg %p145
        $region54: #{tpu_custom_call.1} parent=51 // pred_check_branch
          %3406 = sbr.rel (%p3404) target = $region56
        $region55: #{tpu_custom_call.1} parent=51 // pred_region
          %s3407 = sand.u32 %s130, 1
          %s3408 = scalar_lea.sflag [#allocation4], %s3407
          %s3409 = sand.u32 %s130, 1
          %s3410 = scalar_lea.vmem [#allocation3], %s3409
          %3411 = dma.done %s3408, 16
        $region56: #{tpu_custom_call.1} parent=51 // pred_fallthru
          _
      $region52: #{tpu_custom_call.1} parent=5 // pred_fallthru
        _
    $region6: #{tpu_custom_call.1} parent=1 // loop_footer
      %s17 = sadd.s32 1, %s13
    $region7: #{tpu_custom_call.1} parent=1 // loop_footer_branch
      %12 = sbr.rel target = $region3
    $region8: #{tpu_custom_call.1} parent=1 // loop_exit
      _
    %3412 = vsyncpa [#allocation4], 1
    %s3413 = scalar_lea.sflag [#allocation4], 1
    %3414 = vsyncpa %s3413, 1

</llo_original>
